<compile_context>
chip_gen: v5e
topology: v5e:2x2
jax: 0.10.0
libtpu: 0.0.40
codegen_flags: <defaults>
</compile_context>

<pallas_src>
import functools

import jax
import jax.numpy as jnp
from jax.experimental import pallas as pl
from jax.experimental.pallas import tpu as pltpu

LINEAR_OUT = 128       # "Linear_out" in the PyTorch module
DIM_FF = 400           # dim_feedforward of nn.TransformerEncoderLayer
DFF_PAD = 512          # zero-padded FFN width (lane-dense); numerics unchanged
LN_EPS = 1e-5          # nn.LayerNorm default eps


# --------------------------------------------------------------------------- #
# In-kernel helpers (pure jnp on VMEM values)
# --------------------------------------------------------------------------- #
def _layernorm(x, g, b):
    mu = jnp.mean(x, axis=-1, keepdims=True)
    var = jnp.mean((x - mu) ** 2, axis=-1, keepdims=True)
    return (x - mu) * jax.lax.rsqrt(var + LN_EPS) * g + b


def _attention_core(q, k, v, bias, nhead, scale):
    """q:[Lq,E] k,v:[Lk,E]; bias:[1,Lk] additive key-padding bias or None.

    Heads are unrolled in a static python loop (single kernel invocation, no
    per-head grid); per-head contexts are concatenated along lanes so the
    result is a lane-dense [Lq, E] tile.
    """
    E = q.shape[-1]
    dh = E // nhead
    ctx_parts = []
    for h in range(nhead):
        lo, hi = h * dh, (h + 1) * dh
        s = jnp.dot(q[:, lo:hi], k[:, lo:hi].T,
                    preferred_element_type=jnp.float32) * scale          # [Lq, Lk]
        if bias is not None:
            s = s + bias
        m = jnp.max(s, axis=-1, keepdims=True)
        p = jnp.exp(s - m)
        inv = pl.reciprocal(jnp.sum(p, axis=-1, keepdims=True), approx=True)
        ctx_parts.append(jnp.dot(p * inv, v[:, lo:hi],
                                 preferred_element_type=jnp.float32))    # [Lq, dh]
    return jnp.concatenate(ctx_parts, axis=-1)                           # [Lq, E]


# --------------------------------------------------------------------------- #
# Fused Pallas kernels
# --------------------------------------------------------------------------- #
def _encoder_layer_kernel(x_ref, bias_ref, wqkv_ref, bqkv_ref, wo_ref, bo_ref,
                          ln1g_ref, ln1b_ref, w1_ref, b1_ref, w2_ref, b2_ref,
                          ln2g_ref, ln2b_ref, o_ref, *, nhead):
    """One full post-norm TransformerEncoderLayer for one batch element."""
    x = x_ref[...].astype(jnp.float32)                                   # [L, E]
    E = x.shape[-1]
    bias = bias_ref[...]                                                 # [1, L]

    # Fused QKV projection: [L, 3E] on one MXU pass.
    qkv = jnp.dot(x, wqkv_ref[...], preferred_element_type=jnp.float32) + bqkv_ref[...]
    q, k, v = qkv[:, :E], qkv[:, E:2 * E], qkv[:, 2 * E:]

    scale = 1.0 / float(E // nhead) ** 0.5
    ctx = _attention_core(q, k, v, bias, nhead, scale)                   # [L, E]
    attn_out = jnp.dot(ctx, wo_ref[...], preferred_element_type=jnp.float32) + bo_ref[...]

    x1 = _layernorm(x + attn_out, ln1g_ref[...], ln1b_ref[...])

    # FFN (DIM_FF zero-padded to DFF_PAD=512: extra columns are exactly zero).
    h = jnp.maximum(
        jnp.dot(x1, w1_ref[...], preferred_element_type=jnp.float32) + b1_ref[...], 0.0)
    ffn = jnp.dot(h, w2_ref[...], preferred_element_type=jnp.float32) + b2_ref[...]

    o_ref[...] = _layernorm(x1 + ffn, ln2g_ref[...], ln2b_ref[...]).astype(o_ref.dtype)


def encoder_layer(x, mask_bias, p, nhead):
    """x:[B,L,E], mask_bias:[B,1,L] additive key-padding bias."""
    B, L, E = x.shape

    def full(shape):
        return pl.BlockSpec(shape, lambda b, _s=len(shape): (0,) * _s)

    kern = functools.partial(_encoder_layer_kernel, nhead=nhead)
    return pl.pallas_call(
        kern,
        out_shape=jax.ShapeDtypeStruct((B, L, E), jnp.float32),
        grid=(B,),
        in_specs=[
            pl.BlockSpec((None, L, E), lambda b: (b, 0, 0)),
            pl.BlockSpec((None, 1, L), lambda b: (b, 0, 0)),
            full((E, 3 * E)), full((1, 3 * E)),
            full((E, E)), full((1, E)),
            full((1, E)), full((1, E)),
            full((E, DFF_PAD)), full((1, DFF_PAD)),
            full((DFF_PAD, E)), full((1, E)),
            full((1, E)), full((1, E)),
        ],
        out_specs=pl.BlockSpec((None, L, E), lambda b: (b, 0, 0)),
        compiler_params=pltpu.CompilerParams(dimension_semantics=("arbitrary",)),
    )(x, mask_bias,
      p["wqkv"], p["bqkv"], p["wo"], p["bo"],
      p["ln1_g"], p["ln1_b"], p["w1"], p["b1"], p["w2"], p["b2"],
      p["ln2_g"], p["ln2_b"])


def _cross_attn_kernel(q_ref, kv_ref, wq_ref, bq_ref, wkv_ref, bkv_ref,
                       wo_ref, bo_ref, o_ref, *, nhead):
    """nn.MultiheadAttention(batch_first=True) forward for one batch element."""
    xq = q_ref[...].astype(jnp.float32)                                  # [Lq, E]
    xkv = kv_ref[...].astype(jnp.float32)                                # [Lk, E]
    E = xq.shape[-1]

    q = jnp.dot(xq, wq_ref[...], preferred_element_type=jnp.float32) + bq_ref[...]
    kv = jnp.dot(xkv, wkv_ref[...], preferred_element_type=jnp.float32) + bkv_ref[...]
    k, v = kv[:, :E], kv[:, E:]

    scale = 1.0 / float(E // nhead) ** 0.5
    ctx = _attention_core(q, k, v, None, nhead, scale)                   # [Lq, E]
    o_ref[...] = (jnp.dot(ctx, wo_ref[...], preferred_element_type=jnp.float32)
                  + bo_ref[...]).astype(o_ref.dtype)


def cross_attention(q_in, kv_in, p, nhead):
    B, Lq, E = q_in.shape
    Lk = kv_in.shape[1]

    def full(shape):
        return pl.BlockSpec(shape, lambda b, _s=len(shape): (0,) * _s)

    kern = functools.partial(_cross_attn_kernel, nhead=nhead)
    return pl.pallas_call(
        kern,
        out_shape=jax.ShapeDtypeStruct((B, Lq, E), jnp.float32),
        grid=(B,),
        in_specs=[
            pl.BlockSpec((None, Lq, E), lambda b: (b, 0, 0)),
            pl.BlockSpec((None, Lk, E), lambda b: (b, 0, 0)),
            full((E, E)), full((1, E)),
            full((E, 2 * E)), full((1, 2 * E)),
            full((E, E)), full((1, E)),
        ],
        out_specs=pl.BlockSpec((None, Lq, E), lambda b: (b, 0, 0)),
        compiler_params=pltpu.CompilerParams(dimension_semantics=("arbitrary",)),
    )(q_in, kv_in, p["wq"], p["bq"], p["wkv"], p["bkv"], p["wo"], p["bo"])


def _linear_kernel(x_ref, w_ref, b_ref, o_ref):
    o_ref[...] = (jnp.dot(x_ref[...], w_ref[...], preferred_element_type=jnp.float32)
                  + b_ref[...]).astype(o_ref.dtype)


def pallas_linear(x2d, w, b):
    """Single-call y = x @ w + b over all rows (used for the input projections)."""
    M, K = x2d.shape
    N = w.shape[1]
    return pl.pallas_call(
        _linear_kernel,
        out_shape=jax.ShapeDtypeStruct((M, N), jnp.float32),
        grid=(1,),
        in_specs=[
            pl.BlockSpec((M, K), lambda i: (0, 0)),
            pl.BlockSpec((K, N), lambda i: (0, 0)),
            pl.BlockSpec((1, N), lambda i: (0, 0)),
        ],
        out_specs=pl.BlockSpec((M, N), lambda i: (0, 0)),
    )(x2d, w, b.reshape(1, N))


# --------------------------------------------------------------------------- #
# Deterministic synthetic parameters (shapes from the PyTorch __init__)
# --------------------------------------------------------------------------- #
def init_linear(key, d_in, d_out, scale=0.02):
    kw, kb = jax.random.split(key)
    w = jax.random.normal(kw, (d_in, d_out), jnp.float32) * scale
    b = jax.random.normal(kb, (d_out,), jnp.float32) * scale
    return w, b


def init_encoder_layer(key, E):
    ks = jax.random.split(key, 6)
    wq, bq = init_linear(ks[0], E, E)
    wk, bk = init_linear(ks[1], E, E)
    wv, bv = init_linear(ks[2], E, E)
    wo, bo = init_linear(ks[3], E, E)
    w1, b1 = init_linear(ks[4], E, DIM_FF)
    w2, b2 = init_linear(ks[5], DIM_FF, E)
    p = {}
    # Fused in-projection ([E, 3E]) == split of PyTorch's in_proj_weight.
    p["wqkv"] = jnp.concatenate([wq, wk, wv], axis=1)
    p["bqkv"] = jnp.concatenate([bq, bk, bv]).reshape(1, 3 * E)
    p["wo"], p["bo"] = wo, bo.reshape(1, E)
    # Zero-pad DIM_FF 400 -> 512 for lane-dense FFN (numerically identical:
    # relu(0 + 0) = 0, and the padded rows of w2 are zero).
    p["w1"] = jnp.pad(w1, ((0, 0), (0, DFF_PAD - DIM_FF)))
    p["b1"] = jnp.pad(b1, (0, DFF_PAD - DIM_FF)).reshape(1, DFF_PAD)
    p["w2"] = jnp.pad(w2, ((0, DFF_PAD - DIM_FF), (0, 0)))
    p["b2"] = b2.reshape(1, E)
    p["ln1_g"] = jnp.ones((1, E), jnp.float32)
    p["ln1_b"] = jnp.zeros((1, E), jnp.float32)
    p["ln2_g"] = jnp.ones((1, E), jnp.float32)
    p["ln2_b"] = jnp.zeros((1, E), jnp.float32)
    return p


def init_cross_attn(key, E):
    ks = jax.random.split(key, 4)
    wq, bq = init_linear(ks[0], E, E)
    wk, bk = init_linear(ks[1], E, E)
    wv, bv = init_linear(ks[2], E, E)
    wo, bo = init_linear(ks[3], E, E)
    return dict(wq=wq, bq=bq.reshape(1, E),
                wkv=jnp.concatenate([wk, wv], axis=1),
                bkv=jnp.concatenate([bk, bv]).reshape(1, 2 * E),
                wo=wo, bo=bo.reshape(1, E))


def init_desa_params(key, doc_d_model, sub_d_model, doc_nlayers, sub_nlayers):
    keys = jax.random.split(key, 7)
    p = {}
    p["lin1_w"], p["lin1_b"] = init_linear(keys[0], doc_d_model, LINEAR_OUT)
    p["lin2_w"], p["lin2_b"] = init_linear(keys[1], sub_d_model, LINEAR_OUT)
    p["lin3_w"], p["lin3_b"] = init_linear(keys[2], 18, 1)
    p["lin4_w"], p["lin4_b"] = init_linear(keys[3], 18 + LINEAR_OUT + LINEAR_OUT + 10, 1)
    p["doc_layers"] = [init_encoder_layer(k, LINEAR_OUT)
                       for k in jax.random.split(keys[4], doc_nlayers)]
    p["sub_layers"] = [init_encoder_layer(k, LINEAR_OUT)
                       for k in jax.random.split(keys[5], sub_nlayers)]
    p["dec_attn"] = init_cross_attn(keys[6], LINEAR_OUT)
    return p


# --------------------------------------------------------------------------- #
# DESA forward (Train mode)
# --------------------------------------------------------------------------- #
def desa_forward(params, doc_emb, sub_emb, doc_mask, sub_mask,
                 pos_qrel_feat, pos_subrel_feat, index_i, index_j,
                 neg_qrel_feat, neg_subrel_feat, *, doc_nhead, sub_nhead, nhead):
    doc_mask = doc_mask.astype(bool)
    sub_mask = sub_mask.astype(bool)
    B, Ld, Dd = doc_emb.shape
    _, Ls, Ds = sub_emb.shape
    E = LINEAR_OUT

    # Additive key-padding biases (True == padded key -> masked out).
    doc_bias = jnp.where(doc_mask, -1e30, 0.0).astype(jnp.float32).reshape(B, 1, Ld)
    sub_bias = jnp.where(sub_mask, -1e30, 0.0).astype(jnp.float32).reshape(B, 1, Ls)

    doc_rep = pallas_linear(doc_emb.reshape(-1, Dd),
                            params["lin1_w"], params["lin1_b"]).reshape(B, Ld, E)
    for lp in params["doc_layers"]:
        doc_rep = encoder_layer(doc_rep, doc_bias, lp, doc_nhead)

    sub_rep = pallas_linear(sub_emb.reshape(-1, Ds),
                            params["lin2_w"], params["lin2_b"]).reshape(B, Ls, E)
    for lp in params["sub_layers"]:
        sub_rep = encoder_layer(sub_rep, sub_bias, lp, sub_nhead)

    doc_dec = cross_attention(doc_rep, sub_rep, params["dec_attn"], nhead)

    # Train-mode gather, reproduced exactly from the PyTorch code:
    # idx + linspace(0, B-1, B) * (B + 1)   (note: stride is B+1, as written there)
    def gather_rows(rep, idx):
        flat = rep.reshape(-1, E)
        lin_idx = (idx + jnp.arange(B) * (B + 1)).astype(jnp.int32)
        return jnp.take(flat, lin_idx, axis=0)

    # Tiny heads (N=1 outputs) stay in plain XLA per the perf review.
    def score(idx, qrel_feat, subrel_feat):
        sel1 = gather_rows(doc_rep, idx)
        sel2 = gather_rows(doc_dec, idx)
        l3 = (subrel_feat @ params["lin3_w"] + params["lin3_b"]).squeeze(-1)  # [B, 10]
        concat = jnp.concatenate([qrel_feat, sel1, sel2, l3], axis=1)         # [B, 284]
        return concat @ params["lin4_w"] + params["lin4_b"]                   # [B, 1]

    pos_out = score(index_i, pos_qrel_feat, pos_subrel_feat)
    neg_out = score(index_j, neg_qrel_feat, neg_subrel_feat)
    return pos_out, neg_out


# --------------------------------------------------------------------------- #
if __name__ == "__main__":
    B, Ld, Ls = 2, 8, 8
    doc_d_model, sub_d_model = 32, 48
    doc_nhead, doc_nlayers = 4, 2
    sub_nhead, sub_nlayers = 4, 1
    nhead = 4

    root = jax.random.PRNGKey(0)
    k_params, k_inputs = jax.random.split(root)
    params = init_desa_params(k_params, doc_d_model, sub_d_model, doc_nlayers, sub_nlayers)

    ks = jax.random.split(k_inputs, 6)
    doc_emb = jax.random.normal(ks[0], (B, Ld, doc_d_model), jnp.float32)
    sub_emb = jax.random.normal(ks[1], (B, Ls, sub_d_model), jnp.float32)
    doc_mask = jnp.array([[0, 0, 0, 0, 0, 0, 1, 1],
                          [0, 0, 0, 0, 0, 0, 0, 0]], dtype=bool)   # True = padded
    sub_mask = jnp.array([[0, 0, 0, 0, 0, 1, 1, 1],
                          [0, 0, 0, 0, 0, 0, 0, 1]], dtype=bool)
    pos_qrel_feat = jax.random.normal(ks[2], (B, 18), jnp.float32)
    neg_qrel_feat = jax.random.normal(ks[3], (B, 18), jnp.float32)
    pos_subrel_feat = jax.random.normal(ks[4], (B, 10, 18), jnp.float32)
    neg_subrel_feat = jax.random.normal(ks[5], (B, 10, 18), jnp.float32)
    index_i = jnp.array([2, 5], dtype=jnp.int32)   # valid: idx + b*(B+1) < B*Ld
    index_j = jnp.array([0, 7], dtype=jnp.int32)

    fwd = jax.jit(functools.partial(desa_forward,
                                    doc_nhead=doc_nhead, sub_nhead=sub_nhead, nhead=nhead))
    pos_out, neg_out = fwd(params, doc_emb, sub_emb, doc_mask, sub_mask,
                           pos_qrel_feat, pos_subrel_feat, index_i, index_j,
                           neg_qrel_feat, neg_subrel_feat)

    jax.block_until_ready((pos_out, neg_out))
    assert pos_out.shape == (B, 1) and neg_out.shape == (B, 1)
    assert bool(jnp.all(jnp.isfinite(pos_out))) and bool(jnp.all(jnp.isfinite(neg_out)))
    print("KERNEL_OK")
</pallas_src>

<mosaic_0001>
module attributes {stable_mosaic.version = 11 : i64} {
  func.func @_linear_kernel(%arg0: i32, %arg1: memref<16x48xf32, #tpu.memory_space<vmem>>, %arg2: memref<48x128xf32, #tpu.memory_space<vmem>>, %arg3: memref<1x128xf32, #tpu.memory_space<vmem>>, %arg4: memref<16x128xf32, #tpu.memory_space<vmem>>) attributes {dimension_semantics = [#tpu.dimension_semantics<arbitrary>], iteration_bounds = array<i64: 1>, scalar_prefetch = 0 : i64, scratch_operands = 0 : i64, tpu.core_type = #tpu.core_type<tc>, window_params = [{pipeline_mode = #tpu.pipeline_mode<synchronous>, transform_indices = @transform_0, window_bounds = array<i64: 16, 48>}, {pipeline_mode = #tpu.pipeline_mode<synchronous>, transform_indices = @transform_1, window_bounds = array<i64: 48, 128>}, {pipeline_mode = #tpu.pipeline_mode<synchronous>, transform_indices = @transform_2, window_bounds = array<i64: 1, 128>}, {pipeline_mode = #tpu.pipeline_mode<synchronous>, transform_indices = @transform_3, window_bounds = array<i64: 16, 128>}]} {
    %c0 = arith.constant 0 : index
    %c0_0 = arith.constant 0 : index
    %0 = vector.load %arg1[%c0, %c0_0] : memref<16x48xf32, #tpu.memory_space<vmem>>, vector<16x48xf32>
    %c0_1 = arith.constant 0 : index
    %c0_2 = arith.constant 0 : index
    %1 = vector.load %arg2[%c0_1, %c0_2] : memref<48x128xf32, #tpu.memory_space<vmem>>, vector<48x128xf32>
    %cst = arith.constant dense<0.000000e+00> : vector<16x128xf32>
    %2 = tpu.matmul %0, %1, %cst {dimension_numbers = #tpu.dot_dimension_numbers<[1], [0], [0], [1], [0, 0, 1, 1], [], []>} : vector<16x48xf32>, vector<48x128xf32>, vector<16x128xf32> -> vector<16x128xf32>
    %c0_3 = arith.constant 0 : index
    %c0_4 = arith.constant 0 : index
    %3 = vector.load %arg3[%c0_3, %c0_4] : memref<1x128xf32, #tpu.memory_space<vmem>>, vector<1x128xf32>
    %4 = vector.broadcast %3 : vector<1x128xf32> to vector<16x128xf32>
    %5 = arith.addf %2, %4 : vector<16x128xf32>
    %c0_5 = arith.constant 0 : index
    %c0_6 = arith.constant 0 : index
    %6 = vector.load %arg4[%c0_5, %c0_6] : memref<16x128xf32, #tpu.memory_space<vmem>>, vector<16x128xf32>
    tpu.vector_store %arg4[%c0_5, %c0_6], %5 {strides = array<i32>} : memref<16x128xf32, #tpu.memory_space<vmem>>, vector<16x128xf32>,
    return
  }
  func.func @transform_0(%arg0: i32) -> (i32, i32) {
    %c0_i32 = arith.constant 0 : i32
    %c0_i32_0 = arith.constant 0 : i32
    %c0_i32_1 = arith.constant 0 : i32
    return %c0_i32, %c0_i32_0 : i32, i32
  }
  func.func @transform_1(%arg0: i32) -> (i32, i32) {
    %c0_i32 = arith.constant 0 : i32
    %c0_i32_0 = arith.constant 0 : i32
    %c0_i32_1 = arith.constant 0 : i32
    return %c0_i32, %c0_i32_0 : i32, i32
  }
  func.func @transform_2(%arg0: i32) -> (i32, i32) {
    %c0_i32 = arith.constant 0 : i32
    %c0_i32_0 = arith.constant 0 : i32
    %c0_i32_1 = arith.constant 0 : i32
    return %c0_i32, %c0_i32_0 : i32, i32
  }
  func.func @transform_3(%arg0: i32) -> (i32, i32) {
    %c0_i32 = arith.constant 0 : i32
    %c0_i32_0 = arith.constant 0 : i32
    %c0_i32_1 = arith.constant 0 : i32
    return %c0_i32, %c0_i32_0 : i32, i32
  }
}

module attributes {stable_mosaic.version = 11 : i64} {
  func.func @_linear_kernel(%arg0: i32, %arg1: memref<16x32xf32, #tpu.memory_space<vmem>>, %arg2: memref<32x128xf32, #tpu.memory_space<vmem>>, %arg3: memref<1x128xf32, #tpu.memory_space<vmem>>, %arg4: memref<16x128xf32, #tpu.memory_space<vmem>>) attributes {dimension_semantics = [#tpu.dimension_semantics<arbitrary>], iteration_bounds = array<i64: 1>, scalar_prefetch = 0 : i64, scratch_operands = 0 : i64, tpu.core_type = #tpu.core_type<tc>, window_params = [{pipeline_mode = #tpu.pipeline_mode<synchronous>, transform_indices = @transform_0, window_bounds = array<i64: 16, 32>}, {pipeline_mode = #tpu.pipeline_mode<synchronous>, transform_indices = @transform_1, window_bounds = array<i64: 32, 128>}, {pipeline_mode = #tpu.pipeline_mode<synchronous>, transform_indices = @transform_2, window_bounds = array<i64: 1, 128>}, {pipeline_mode = #tpu.pipeline_mode<synchronous>, transform_indices = @transform_3, window_bounds = array<i64: 16, 128>}]} {
    %c0 = arith.constant 0 : index
    %c0_0 = arith.constant 0 : index
    %0 = vector.load %arg1[%c0, %c0_0] : memref<16x32xf32, #tpu.memory_space<vmem>>, vector<16x32xf32>
    %c0_1 = arith.constant 0 : index
    %c0_2 = arith.constant 0 : index
    %1 = vector.load %arg2[%c0_1, %c0_2] : memref<32x128xf32, #tpu.memory_space<vmem>>, vector<32x128xf32>
    %cst = arith.constant dense<0.000000e+00> : vector<16x128xf32>
    %2 = tpu.matmul %0, %1, %cst {dimension_numbers = #tpu.dot_dimension_numbers<[1], [0], [0], [1], [0, 0, 1, 1], [], []>} : vector<16x32xf32>, vector<32x128xf32>, vector<16x128xf32> -> vector<16x128xf32>
    %c0_3 = arith.constant 0 : index
    %c0_4 = arith.constant 0 : index
    %3 = vector.load %arg3[%c0_3, %c0_4] : memref<1x128xf32, #tpu.memory_space<vmem>>, vector<1x128xf32>
    %4 = vector.broadcast %3 : vector<1x128xf32> to vector<16x128xf32>
    %5 = arith.addf %2, %4 : vector<16x128xf32>
    %c0_5 = arith.constant 0 : index
    %c0_6 = arith.constant 0 : index
    %6 = vector.load %arg4[%c0_5, %c0_6] : memref<16x128xf32, #tpu.memory_space<vmem>>, vector<16x128xf32>
    tpu.vector_store %arg4[%c0_5, %c0_6], %5 {strides = array<i32>} : memref<16x128xf32, #tpu.memory_space<vmem>>, vector<16x128xf32>,
    return
  }
  func.func @transform_0(%arg0: i32) -> (i32, i32) {
    %c0_i32 = arith.constant 0 : i32
    %c0_i32_0 = arith.constant 0 : i32
    %c0_i32_1 = arith.constant 0 : i32
    return %c0_i32, %c0_i32_0 : i32, i32
  }
  func.func @transform_1(%arg0: i32) -> (i32, i32) {
    %c0_i32 = arith.constant 0 : i32
    %c0_i32_0 = arith.constant 0 : i32
    %c0_i32_1 = arith.constant 0 : i32
    return %c0_i32, %c0_i32_0 : i32, i32
  }
  func.func @transform_2(%arg0: i32) -> (i32, i32) {
    %c0_i32 = arith.constant 0 : i32
    %c0_i32_0 = arith.constant 0 : i32
    %c0_i32_1 = arith.constant 0 : i32
    return %c0_i32, %c0_i32_0 : i32, i32
  }
  func.func @transform_3(%arg0: i32) -> (i32, i32) {
    %c0_i32 = arith.constant 0 : i32
    %c0_i32_0 = arith.constant 0 : i32
    %c0_i32_1 = arith.constant 0 : i32
    return %c0_i32, %c0_i32_0 : i32, i32
  }
}

module attributes {stable_mosaic.version = 11 : i64} {
  func.func @_encoder_layer_kernel(%arg0: i32, %arg1: memref<1x8x128xf32, #tpu.memory_space<vmem>>, %arg2: memref<1x1x8xf32, #tpu.memory_space<vmem>>, %arg3: memref<128x384xf32, #tpu.memory_space<vmem>>, %arg4: memref<1x384xf32, #tpu.memory_space<vmem>>, %arg5: memref<128x128xf32, #tpu.memory_space<vmem>>, %arg6: memref<1x128xf32, #tpu.memory_space<vmem>>, %arg7: memref<1x128xf32, #tpu.memory_space<vmem>>, %arg8: memref<1x128xf32, #tpu.memory_space<vmem>>, %arg9: memref<128x512xf32, #tpu.memory_space<vmem>>, %arg10: memref<1x512xf32, #tpu.memory_space<vmem>>, %arg11: memref<512x128xf32, #tpu.memory_space<vmem>>, %arg12: memref<1x128xf32, #tpu.memory_space<vmem>>, %arg13: memref<1x128xf32, #tpu.memory_space<vmem>>, %arg14: memref<1x128xf32, #tpu.memory_space<vmem>>, %arg15: memref<1x8x128xf32, #tpu.memory_space<vmem>>) attributes {dimension_semantics = [#tpu.dimension_semantics<arbitrary>], iteration_bounds = array<i64: 2>, scalar_prefetch = 0 : i64, scratch_operands = 0 : i64, tpu.core_type = #tpu.core_type<tc>, window_params = [{transform_indices = @transform_0, window_bounds = array<i64: 1, 8, 128>}, {transform_indices = @transform_1, window_bounds = array<i64: 1, 1, 8>}, {pipeline_mode = #tpu.pipeline_mode<synchronous>, transform_indices = @transform_2, window_bounds = array<i64: 128, 384>}, {pipeline_mode = #tpu.pipeline_mode<synchronous>, transform_indices = @transform_3, window_bounds = array<i64: 1, 384>}, {pipeline_mode = #tpu.pipeline_mode<synchronous>, transform_indices = @transform_4, window_bounds = array<i64: 128, 128>}, {pipeline_mode = #tpu.pipeline_mode<synchronous>, transform_indices = @transform_5, window_bounds = array<i64: 1, 128>}, {pipeline_mode = #tpu.pipeline_mode<synchronous>, transform_indices = @transform_6, window_bounds = array<i64: 1, 128>}, {pipeline_mode = #tpu.pipeline_mode<synchronous>, transform_indices = @transform_7, window_bounds = array<i64: 1, 128>}, {pipeline_mode = #tpu.pipeline_mode<synchronous>, transform_indices = @transform_8, window_bounds = array<i64: 128, 512>}, {pipeline_mode = #tpu.pipeline_mode<synchronous>, transform_indices = @transform_9, window_bounds = array<i64: 1, 512>}, {pipeline_mode = #tpu.pipeline_mode<synchronous>, transform_indices = @transform_10, window_bounds = array<i64: 512, 128>}, {pipeline_mode = #tpu.pipeline_mode<synchronous>, transform_indices = @transform_11, window_bounds = array<i64: 1, 128>}, {pipeline_mode = #tpu.pipeline_mode<synchronous>, transform_indices = @transform_12, window_bounds = array<i64: 1, 128>}, {pipeline_mode = #tpu.pipeline_mode<synchronous>, transform_indices = @transform_13, window_bounds = array<i64: 1, 128>}, {transform_indices = @transform_14, window_bounds = array<i64: 1, 8, 128>}]} {
    %c0 = arith.constant 0 : index
    %c0_0 = arith.constant 0 : index
    %c0_1 = arith.constant 0 : index
    %0 = vector.load %arg1[%c0, %c0_0, %c0_1] : memref<1x8x128xf32, #tpu.memory_space<vmem>>, vector<1x8x128xf32>
    %1 = vector.shape_cast %0 : vector<1x8x128xf32> to vector<8x128xf32>
    %c0_2 = arith.constant 0 : index
    %c0_3 = arith.constant 0 : index
    %c0_4 = arith.constant 0 : index
    %2 = vector.load %arg2[%c0_2, %c0_3, %c0_4] : memref<1x1x8xf32, #tpu.memory_space<vmem>>, vector<1x1x8xf32>
    %3 = vector.shape_cast %2 : vector<1x1x8xf32> to vector<1x8xf32>
    %c0_5 = arith.constant 0 : index
    %c0_6 = arith.constant 0 : index
    %4 = vector.load %arg3[%c0_5, %c0_6] : memref<128x384xf32, #tpu.memory_space<vmem>>, vector<128x384xf32>
    %cst = arith.constant dense<0.000000e+00> : vector<8x384xf32>
    %5 = tpu.matmul %1, %4, %cst {dimension_numbers = #tpu.dot_dimension_numbers<[1], [0], [0], [1], [0, 0, 1, 1], [], []>} : vector<8x128xf32>, vector<128x384xf32>, vector<8x384xf32> -> vector<8x384xf32>
    %c0_7 = arith.constant 0 : index
    %c0_8 = arith.constant 0 : index
    %6 = vector.load %arg4[%c0_7, %c0_8] : memref<1x384xf32, #tpu.memory_space<vmem>>, vector<1x384xf32>
    %7 = vector.broadcast %6 : vector<1x384xf32> to vector<8x384xf32>
    %8 = arith.addf %5, %7 : vector<8x384xf32>
    %9 = vector.extract_strided_slice %8 {offsets = [0, 0], sizes = [8, 128], strides = [1, 1]} : vector<8x384xf32> to vector<8x128xf32>
    %10 = vector.extract_strided_slice %8 {offsets = [0, 128], sizes = [8, 128], strides = [1, 1]} : vector<8x384xf32> to vector<8x128xf32>
    %11 = vector.extract_strided_slice %8 {offsets = [0, 256], sizes = [8, 128], strides = [1, 1]} : vector<8x384xf32> to vector<8x128xf32>
    %12 = vector.extract_strided_slice %9 {offsets = [0, 0], sizes = [8, 32], strides = [1, 1]} : vector<8x128xf32> to vector<8x32xf32>
    %13 = vector.extract_strided_slice %10 {offsets = [0, 0], sizes = [8, 32], strides = [1, 1]} : vector<8x128xf32> to vector<8x32xf32>
    %14 = tpu.transpose %13, [1, 0] : vector<8x32xf32> -> vector<32x8xf32>
    %cst_9 = arith.constant dense<0.000000e+00> : vector<8x8xf32>
    %15 = tpu.matmul %12, %14, %cst_9 {dimension_numbers = #tpu.dot_dimension_numbers<[1], [0], [0], [1], [0, 0, 1, 1], [], []>} : vector<8x32xf32>, vector<32x8xf32>, vector<8x8xf32> -> vector<8x8xf32>
    %cst_10 = arith.constant 0.176776692 : f32
    %16 = vector.broadcast %cst_10 : f32 to vector<8x8xf32>
    %17 = arith.mulf %15, %16 : vector<8x8xf32>
    %18 = vector.broadcast %3 : vector<1x8xf32> to vector<8x8xf32>
    %19 = arith.addf %17, %18 : vector<8x8xf32>
    %cst_11 = arith.constant dense<0xFF800000> : vector<8xf32>
    %20 = vector.multi_reduction <maximumf>, %19, %cst_11 [1] : vector<8x8xf32> to vector<8xf32>
    %21 = vector.shape_cast %20 : vector<8xf32> to vector<8x1xf32>
    %22 = vector.broadcast %21 : vector<8x1xf32> to vector<8x8xf32>
    %23 = arith.subf %19, %22 : vector<8x8xf32>
    %24 = math.exp %23 : vector<8x8xf32>
    %cst_12 = arith.constant dense<0.000000e+00> : vector<8xf32>
    %25 = vector.multi_reduction <add>, %24, %cst_12 [1] : vector<8x8xf32> to vector<8xf32>
    %26 = vector.shape_cast %25 : vector<8xf32> to vector<8x1xf32>
    %27 = tpu.reciprocal %26 {approx = true} : vector<8x1xf32> -> vector<8x1xf32>
    %28 = vector.broadcast %27 : vector<8x1xf32> to vector<8x8xf32>
    %29 = arith.mulf %24, %28 : vector<8x8xf32>
    %30 = vector.extract_strided_slice %11 {offsets = [0, 0], sizes = [8, 32], strides = [1, 1]} : vector<8x128xf32> to vector<8x32xf32>
    %cst_13 = arith.constant dense<0.000000e+00> : vector<8x32xf32>
    %31 = tpu.matmul %29, %30, %cst_13 {dimension_numbers = #tpu.dot_dimension_numbers<[1], [0], [0], [1], [0, 0, 1, 1], [], []>} : vector<8x8xf32>, vector<8x32xf32>, vector<8x32xf32> -> vector<8x32xf32>
    %32 = vector.extract_strided_slice %9 {offsets = [0, 32], sizes = [8, 32], strides = [1, 1]} : vector<8x128xf32> to vector<8x32xf32>
    %33 = vector.extract_strided_slice %10 {offsets = [0, 32], sizes = [8, 32], strides = [1, 1]} : vector<8x128xf32> to vector<8x32xf32>
    %34 = tpu.transpose %33, [1, 0] : vector<8x32xf32> -> vector<32x8xf32>
    %cst_14 = arith.constant dense<0.000000e+00> : vector<8x8xf32>
    %35 = tpu.matmul %32, %34, %cst_14 {dimension_numbers = #tpu.dot_dimension_numbers<[1], [0], [0], [1], [0, 0, 1, 1], [], []>} : vector<8x32xf32>, vector<32x8xf32>, vector<8x8xf32> -> vector<8x8xf32>
    %cst_15 = arith.constant 0.176776692 : f32
    %36 = vector.broadcast %cst_15 : f32 to vector<8x8xf32>
    %37 = arith.mulf %35, %36 : vector<8x8xf32>
    %38 = vector.broadcast %3 : vector<1x8xf32> to vector<8x8xf32>
    %39 = arith.addf %37, %38 : vector<8x8xf32>
    %cst_16 = arith.constant dense<0xFF800000> : vector<8xf32>
    %40 = vector.multi_reduction <maximumf>, %39, %cst_16 [1] : vector<8x8xf32> to vector<8xf32>
    %41 = vector.shape_cast %40 : vector<8xf32> to vector<8x1xf32>
    %42 = vector.broadcast %41 : vector<8x1xf32> to vector<8x8xf32>
    %43 = arith.subf %39, %42 : vector<8x8xf32>
    %44 = math.exp %43 : vector<8x8xf32>
    %cst_17 = arith.constant dense<0.000000e+00> : vector<8xf32>
    %45 = vector.multi_reduction <add>, %44, %cst_17 [1] : vector<8x8xf32> to vector<8xf32>
    %46 = vector.shape_cast %45 : vector<8xf32> to vector<8x1xf32>
    %47 = tpu.reciprocal %46 {approx = true} : vector<8x1xf32> -> vector<8x1xf32>
    %48 = vector.broadcast %47 : vector<8x1xf32> to vector<8x8xf32>
    %49 = arith.mulf %44, %48 : vector<8x8xf32>
    %50 = vector.extract_strided_slice %11 {offsets = [0, 32], sizes = [8, 32], strides = [1, 1]} : vector<8x128xf32> to vector<8x32xf32>
    %cst_18 = arith.constant dense<0.000000e+00> : vector<8x32xf32>
    %51 = tpu.matmul %49, %50, %cst_18 {dimension_numbers = #tpu.dot_dimension_numbers<[1], [0], [0], [1], [0, 0, 1, 1], [], []>} : vector<8x8xf32>, vector<8x32xf32>, vector<8x32xf32> -> vector<8x32xf32>
    %52 = vector.extract_strided_slice %9 {offsets = [0, 64], sizes = [8, 32], strides = [1, 1]} : vector<8x128xf32> to vector<8x32xf32>
    %53 = vector.extract_strided_slice %10 {offsets = [0, 64], sizes = [8, 32], strides = [1, 1]} : vector<8x128xf32> to vector<8x32xf32>
    %54 = tpu.transpose %53, [1, 0] : vector<8x32xf32> -> vector<32x8xf32>
    %cst_19 = arith.constant dense<0.000000e+00> : vector<8x8xf32>
    %55 = tpu.matmul %52, %54, %cst_19 {dimension_numbers = #tpu.dot_dimension_numbers<[1], [0], [0], [1], [0, 0, 1, 1], [], []>} : vector<8x32xf32>, vector<32x8xf32>, vector<8x8xf32> -> vector<8x8xf32>
    %cst_20 = arith.constant 0.176776692 : f32
    %56 = vector.broadcast %cst_20 : f32 to vector<8x8xf32>
    %57 = arith.mulf %55, %56 : vector<8x8xf32>
    %58 = vector.broadcast %3 : vector<1x8xf32> to vector<8x8xf32>
    %59 = arith.addf %57, %58 : vector<8x8xf32>
    %cst_21 = arith.constant dense<0xFF800000> : vector<8xf32>
    %60 = vector.multi_reduction <maximumf>, %59, %cst_21 [1] : vector<8x8xf32> to vector<8xf32>
    %61 = vector.shape_cast %60 : vector<8xf32> to vector<8x1xf32>
    %62 = vector.broadcast %61 : vector<8x1xf32> to vector<8x8xf32>
    %63 = arith.subf %59, %62 : vector<8x8xf32>
    %64 = math.exp %63 : vector<8x8xf32>
    %cst_22 = arith.constant dense<0.000000e+00> : vector<8xf32>
    %65 = vector.multi_reduction <add>, %64, %cst_22 [1] : vector<8x8xf32> to vector<8xf32>
    %66 = vector.shape_cast %65 : vector<8xf32> to vector<8x1xf32>
    %67 = tpu.reciprocal %66 {approx = true} : vector<8x1xf32> -> vector<8x1xf32>
    %68 = vector.broadcast %67 : vector<8x1xf32> to vector<8x8xf32>
    %69 = arith.mulf %64, %68 : vector<8x8xf32>
    %70 = vector.extract_strided_slice %11 {offsets = [0, 64], sizes = [8, 32], strides = [1, 1]} : vector<8x128xf32> to vector<8x32xf32>
    %cst_23 = arith.constant dense<0.000000e+00> : vector<8x32xf32>
    %71 = tpu.matmul %69, %70, %cst_23 {dimension_numbers = #tpu.dot_dimension_numbers<[1], [0], [0], [1], [0, 0, 1, 1], [], []>} : vector<8x8xf32>, vector<8x32xf32>, vector<8x32xf32> -> vector<8x32xf32>
    %72 = vector.extract_strided_slice %9 {offsets = [0, 96], sizes = [8, 32], strides = [1, 1]} : vector<8x128xf32> to vector<8x32xf32>
    %73 = vector.extract_strided_slice %10 {offsets = [0, 96], sizes = [8, 32], strides = [1, 1]} : vector<8x128xf32> to vector<8x32xf32>
    %74 = tpu.transpose %73, [1, 0] : vector<8x32xf32> -> vector<32x8xf32>
    %cst_24 = arith.constant dense<0.000000e+00> : vector<8x8xf32>
    %75 = tpu.matmul %72, %74, %cst_24 {dimension_numbers = #tpu.dot_dimension_numbers<[1], [0], [0], [1], [0, 0, 1, 1], [], []>} : vector<8x32xf32>, vector<32x8xf32>, vector<8x8xf32> -> vector<8x8xf32>
    %cst_25 = arith.constant 0.176776692 : f32
    %76 = vector.broadcast %cst_25 : f32 to vector<8x8xf32>
    %77 = arith.mulf %75, %76 : vector<8x8xf32>
    %78 = vector.broadcast %3 : vector<1x8xf32> to vector<8x8xf32>
    %79 = arith.addf %77, %78 : vector<8x8xf32>
    %cst_26 = arith.constant dense<0xFF800000> : vector<8xf32>
    %80 = vector.multi_reduction <maximumf>, %79, %cst_26 [1] : vector<8x8xf32> to vector<8xf32>
    %81 = vector.shape_cast %80 : vector<8xf32> to vector<8x1xf32>
    %82 = vector.broadcast %81 : vector<8x1xf32> to vector<8x8xf32>
    %83 = arith.subf %79, %82 : vector<8x8xf32>
    %84 = math.exp %83 : vector<8x8xf32>
    %cst_27 = arith.constant dense<0.000000e+00> : vector<8xf32>
    %85 = vector.multi_reduction <add>, %84, %cst_27 [1] : vector<8x8xf32> to vector<8xf32>
    %86 = vector.shape_cast %85 : vector<8xf32> to vector<8x1xf32>
    %87 = tpu.reciprocal %86 {approx = true} : vector<8x1xf32> -> vector<8x1xf32>
    %88 = vector.broadcast %87 : vector<8x1xf32> to vector<8x8xf32>
    %89 = arith.mulf %84, %88 : vector<8x8xf32>
    %90 = vector.extract_strided_slice %11 {offsets = [0, 96], sizes = [8, 32], strides = [1, 1]} : vector<8x128xf32> to vector<8x32xf32>
    %cst_28 = arith.constant dense<0.000000e+00> : vector<8x32xf32>
    %91 = tpu.matmul %89, %90, %cst_28 {dimension_numbers = #tpu.dot_dimension_numbers<[1], [0], [0], [1], [0, 0, 1, 1], [], []>} : vector<8x8xf32>, vector<8x32xf32>, vector<8x32xf32> -> vector<8x32xf32>
    %92 = tpu.concatenate %31, %51, %71, %91 in 1 : vector<8x32xf32>, vector<8x32xf32>, vector<8x32xf32>, vector<8x32xf32> -> vector<8x128xf32>
    %c0_29 = arith.constant 0 : index
    %c0_30 = arith.constant 0 : index
    %93 = vector.load %arg5[%c0_29, %c0_30] : memref<128x128xf32, #tpu.memory_space<vmem>>, vector<128x128xf32>
    %cst_31 = arith.constant dense<0.000000e+00> : vector<8x128xf32>
    %94 = tpu.matmul %92, %93, %cst_31 {dimension_numbers = #tpu.dot_dimension_numbers<[1], [0], [0], [1], [0, 0, 1, 1], [], []>} : vector<8x128xf32>, vector<128x128xf32>, vector<8x128xf32> -> vector<8x128xf32>
    %c0_32 = arith.constant 0 : index
    %c0_33 = arith.constant 0 : index
    %95 = vector.load %arg6[%c0_32, %c0_33] : memref<1x128xf32, #tpu.memory_space<vmem>>, vector<1x128xf32>
    %96 = vector.broadcast %95 : vector<1x128xf32> to vector<8x128xf32>
    %97 = arith.addf %94, %96 : vector<8x128xf32>
    %98 = arith.addf %1, %97 : vector<8x128xf32>
    %c0_34 = arith.constant 0 : index
    %c0_35 = arith.constant 0 : index
    %99 = vector.load %arg7[%c0_34, %c0_35] : memref<1x128xf32, #tpu.memory_space<vmem>>, vector<1x128xf32>
    %c0_36 = arith.constant 0 : index
    %c0_37 = arith.constant 0 : index
    %100 = vector.load %arg8[%c0_36, %c0_37] : memref<1x128xf32, #tpu.memory_space<vmem>>, vector<1x128xf32>
    %cst_38 = arith.constant dense<0.000000e+00> : vector<8xf32>
    %101 = vector.multi_reduction <add>, %98, %cst_38 [1] : vector<8x128xf32> to vector<8xf32>
    %102 = vector.shape_cast %101 : vector<8xf32> to vector<8x1xf32>
    %cst_39 = arith.constant 1.280000e+02 : f32
    %103 = vector.broadcast %cst_39 : f32 to vector<8x1xf32>
    %104 = arith.divf %102, %103 : vector<8x1xf32>
    %105 = vector.broadcast %104 : vector<8x1xf32> to vector<8x128xf32>
    %106 = arith.subf %98, %105 : vector<8x128xf32>
    %107 = arith.mulf %106, %106 : vector<8x128xf32>
    %cst_40 = arith.constant dense<0.000000e+00> : vector<8xf32>
    %108 = vector.multi_reduction <add>, %107, %cst_40 [1] : vector<8x128xf32> to vector<8xf32>
    %109 = vector.shape_cast %108 : vector<8xf32> to vector<8x1xf32>
    %cst_41 = arith.constant 1.280000e+02 : f32
    %110 = vector.broadcast %cst_41 : f32 to vector<8x1xf32>
    %111 = arith.divf %109, %110 : vector<8x1xf32>
    %112 = vector.broadcast %104 : vector<8x1xf32> to vector<8x128xf32>
    %113 = arith.subf %98, %112 : vector<8x128xf32>
    %cst_42 = arith.constant 9.99999974E-6 : f32
    %114 = vector.broadcast %cst_42 : f32 to vector<8x1xf32>
    %115 = arith.addf %111, %114 : vector<8x1xf32>
    %116 = math.rsqrt %115 : vector<8x1xf32>
    %117 = vector.broadcast %116 : vector<8x1xf32> to vector<8x128xf32>
    %118 = arith.mulf %113, %117 : vector<8x128xf32>
    %119 = vector.broadcast %99 : vector<1x128xf32> to vector<8x128xf32>
    %120 = arith.mulf %118, %119 : vector<8x128xf32>
    %121 = vector.broadcast %100 : vector<1x128xf32> to vector<8x128xf32>
    %122 = arith.addf %120, %121 : vector<8x128xf32>
    %c0_43 = arith.constant 0 : index
    %c0_44 = arith.constant 0 : index
    %123 = vector.load %arg9[%c0_43, %c0_44] : memref<128x512xf32, #tpu.memory_space<vmem>>, vector<128x512xf32>
    %cst_45 = arith.constant dense<0.000000e+00> : vector<8x512xf32>
    %124 = tpu.matmul %122, %123, %cst_45 {dimension_numbers = #tpu.dot_dimension_numbers<[1], [0], [0], [1], [0, 0, 1, 1], [], []>} : vector<8x128xf32>, vector<128x512xf32>, vector<8x512xf32> -> vector<8x512xf32>
    %c0_46 = arith.constant 0 : index
    %c0_47 = arith.constant 0 : index
    %125 = vector.load %arg10[%c0_46, %c0_47] : memref<1x512xf32, #tpu.memory_space<vmem>>, vector<1x512xf32>
    %126 = vector.broadcast %125 : vector<1x512xf32> to vector<8x512xf32>
    %127 = arith.addf %124, %126 : vector<8x512xf32>
    %cst_48 = arith.constant 0.000000e+00 : f32
    %128 = vector.broadcast %cst_48 : f32 to vector<8x512xf32>
    %129 = arith.maximumf %127, %128 : vector<8x512xf32>
    %c0_49 = arith.constant 0 : index
    %c0_50 = arith.constant 0 : index
    %130 = vector.load %arg11[%c0_49, %c0_50] : memref<512x128xf32, #tpu.memory_space<vmem>>, vector<512x128xf32>
    %cst_51 = arith.constant dense<0.000000e+00> : vector<8x128xf32>
    %131 = tpu.matmul %129, %130, %cst_51 {dimension_numbers = #tpu.dot_dimension_numbers<[1], [0], [0], [1], [0, 0, 1, 1], [], []>} : vector<8x512xf32>, vector<512x128xf32>, vector<8x128xf32> -> vector<8x128xf32>
    %c0_52 = arith.constant 0 : index
    %c0_53 = arith.constant 0 : index
    %132 = vector.load %arg12[%c0_52, %c0_53] : memref<1x128xf32, #tpu.memory_space<vmem>>, vector<1x128xf32>
    %133 = vector.broadcast %132 : vector<1x128xf32> to vector<8x128xf32>
    %134 = arith.addf %131, %133 : vector<8x128xf32>
    %135 = arith.addf %122, %134 : vector<8x128xf32>
    %c0_54 = arith.constant 0 : index
    %c0_55 = arith.constant 0 : index
    %136 = vector.load %arg13[%c0_54, %c0_55] : memref<1x128xf32, #tpu.memory_space<vmem>>, vector<1x128xf32>
    %c0_56 = arith.constant 0 : index
    %c0_57 = arith.constant 0 : index
    %137 = vector.load %arg14[%c0_56, %c0_57] : memref<1x128xf32, #tpu.memory_space<vmem>>, vector<1x128xf32>
    %cst_58 = arith.constant dense<0.000000e+00> : vector<8xf32>
    %138 = vector.multi_reduction <add>, %135, %cst_58 [1] : vector<8x128xf32> to vector<8xf32>
    %139 = vector.shape_cast %138 : vector<8xf32> to vector<8x1xf32>
    %cst_59 = arith.constant 1.280000e+02 : f32
    %140 = vector.broadcast %cst_59 : f32 to vector<8x1xf32>
    %141 = arith.divf %139, %140 : vector<8x1xf32>
    %142 = vector.broadcast %141 : vector<8x1xf32> to vector<8x128xf32>
    %143 = arith.subf %135, %142 : vector<8x128xf32>
    %144 = arith.mulf %143, %143 : vector<8x128xf32>
    %cst_60 = arith.constant dense<0.000000e+00> : vector<8xf32>
    %145 = vector.multi_reduction <add>, %144, %cst_60 [1] : vector<8x128xf32> to vector<8xf32>
    %146 = vector.shape_cast %145 : vector<8xf32> to vector<8x1xf32>
    %cst_61 = arith.constant 1.280000e+02 : f32
    %147 = vector.broadcast %cst_61 : f32 to vector<8x1xf32>
    %148 = arith.divf %146, %147 : vector<8x1xf32>
    %149 = vector.broadcast %141 : vector<8x1xf32> to vector<8x128xf32>
    %150 = arith.subf %135, %149 : vector<8x128xf32>
    %cst_62 = arith.constant 9.99999974E-6 : f32
    %151 = vector.broadcast %cst_62 : f32 to vector<8x1xf32>
    %152 = arith.addf %148, %151 : vector<8x1xf32>
    %153 = math.rsqrt %152 : vector<8x1xf32>
    %154 = vector.broadcast %153 : vector<8x1xf32> to vector<8x128xf32>
    %155 = arith.mulf %150, %154 : vector<8x128xf32>
    %156 = vector.broadcast %136 : vector<1x128xf32> to vector<8x128xf32>
    %157 = arith.mulf %155, %156 : vector<8x128xf32>
    %158 = vector.broadcast %137 : vector<1x128xf32> to vector<8x128xf32>
    %159 = arith.addf %157, %158 : vector<8x128xf32>
    %c0_63 = arith.constant 0 : index
    %c0_64 = arith.constant 0 : index
    %c0_65 = arith.constant 0 : index
    %160 = vector.load %arg15[%c0_63, %c0_64, %c0_65] : memref<1x8x128xf32, #tpu.memory_space<vmem>>, vector<1x8x128xf32>
    %161 = vector.shape_cast %160 : vector<1x8x128xf32> to vector<8x128xf32>
    %162 = vector.shape_cast %159 : vector<8x128xf32> to vector<1x8x128xf32>
    tpu.vector_store %arg15[%c0_63, %c0_64, %c0_65], %162 {strides = array<i32>} : memref<1x8x128xf32, #tpu.memory_space<vmem>>, vector<1x8x128xf32>,
    return
  }
  func.func @transform_0(%arg0: i32) -> (i32, i32, i32) {
    %c0_i32 = arith.constant 0 : i32
    %c0_i32_0 = arith.constant 0 : i32
    %c0_i32_1 = arith.constant 0 : i32
    return %arg0, %c0_i32, %c0_i32_0 : i32, i32, i32
  }
  func.func @transform_1(%arg0: i32) -> (i32, i32, i32) {
    %c0_i32 = arith.constant 0 : i32
    %c0_i32_0 = arith.constant 0 : i32
    %c0_i32_1 = arith.constant 0 : i32
    return %arg0, %c0_i32, %c0_i32_0 : i32, i32, i32
  }
  func.func @transform_2(%arg0: i32) -> (i32, i32) {
    %c0_i32 = arith.constant 0 : i32
    %c0_i32_0 = arith.constant 0 : i32
    %c0_i32_1 = arith.constant 0 : i32
    return %c0_i32, %c0_i32_0 : i32, i32
  }
  func.func @transform_3(%arg0: i32) -> (i32, i32) {
    %c0_i32 = arith.constant 0 : i32
    %c0_i32_0 = arith.constant 0 : i32
    %c0_i32_1 = arith.constant 0 : i32
    return %c0_i32, %c0_i32_0 : i32, i32
  }
  func.func @transform_4(%arg0: i32) -> (i32, i32) {
    %c0_i32 = arith.constant 0 : i32
    %c0_i32_0 = arith.constant 0 : i32
    %c0_i32_1 = arith.constant 0 : i32
    return %c0_i32, %c0_i32_0 : i32, i32
  }
  func.func @transform_5(%arg0: i32) -> (i32, i32) {
    %c0_i32 = arith.constant 0 : i32
    %c0_i32_0 = arith.constant 0 : i32
    %c0_i32_1 = arith.constant 0 : i32
    return %c0_i32, %c0_i32_0 : i32, i32
  }
  func.func @transform_6(%arg0: i32) -> (i32, i32) {
    %c0_i32 = arith.constant 0 : i32
    %c0_i32_0 = arith.constant 0 : i32
    %c0_i32_1 = arith.constant 0 : i32
    return %c0_i32, %c0_i32_0 : i32, i32
  }
  func.func @transform_7(%arg0: i32) -> (i32, i32) {
    %c0_i32 = arith.constant 0 : i32
    %c0_i32_0 = arith.constant 0 : i32
    %c0_i32_1 = arith.constant 0 : i32
    return %c0_i32, %c0_i32_0 : i32, i32
  }
  func.func @transform_8(%arg0: i32) -> (i32, i32) {
    %c0_i32 = arith.constant 0 : i32
    %c0_i32_0 = arith.constant 0 : i32
    %c0_i32_1 = arith.constant 0 : i32
    return %c0_i32, %c0_i32_0 : i32, i32
  }
  func.func @transform_9(%arg0: i32) -> (i32, i32) {
    %c0_i32 = arith.constant 0 : i32
    %c0_i32_0 = arith.constant 0 : i32
    %c0_i32_1 = arith.constant 0 : i32
    return %c0_i32, %c0_i32_0 : i32, i32
  }
  func.func @transform_10(%arg0: i32) -> (i32, i32) {
    %c0_i32 = arith.constant 0 : i32
    %c0_i32_0 = arith.constant 0 : i32
    %c0_i32_1 = arith.constant 0 : i32
    return %c0_i32, %c0_i32_0 : i32, i32
  }
  func.func @transform_11(%arg0: i32) -> (i32, i32) {
    %c0_i32 = arith.constant 0 : i32
    %c0_i32_0 = arith.constant 0 : i32
    %c0_i32_1 = arith.constant 0 : i32
    return %c0_i32, %c0_i32_0 : i32, i32
  }
  func.func @transform_12(%arg0: i32) -> (i32, i32) {
    %c0_i32 = arith.constant 0 : i32
    %c0_i32_0 = arith.constant 0 : i32
    %c0_i32_1 = arith.constant 0 : i32
    return %c0_i32, %c0_i32_0 : i32, i32
  }
  func.func @transform_13(%arg0: i32) -> (i32, i32) {
    %c0_i32 = arith.constant 0 : i32
    %c0_i32_0 = arith.constant 0 : i32
    %c0_i32_1 = arith.constant 0 : i32
    return %c0_i32, %c0_i32_0 : i32, i32
  }
  func.func @transform_14(%arg0: i32) -> (i32, i32, i32) {
    %c0_i32 = arith.constant 0 : i32
    %c0_i32_0 = arith.constant 0 : i32
    %c0_i32_1 = arith.constant 0 : i32
    return %arg0, %c0_i32, %c0_i32_0 : i32, i32, i32
  }
}

module attributes {stable_mosaic.version = 11 : i64} {
  func.func @_encoder_layer_kernel(%arg0: i32, %arg1: memref<1x8x128xf32, #tpu.memory_space<vmem>>, %arg2: memref<1x1x8xf32, #tpu.memory_space<vmem>>, %arg3: memref<128x384xf32, #tpu.memory_space<vmem>>, %arg4: memref<1x384xf32, #tpu.memory_space<vmem>>, %arg5: memref<128x128xf32, #tpu.memory_space<vmem>>, %arg6: memref<1x128xf32, #tpu.memory_space<vmem>>, %arg7: memref<1x128xf32, #tpu.memory_space<vmem>>, %arg8: memref<1x128xf32, #tpu.memory_space<vmem>>, %arg9: memref<128x512xf32, #tpu.memory_space<vmem>>, %arg10: memref<1x512xf32, #tpu.memory_space<vmem>>, %arg11: memref<512x128xf32, #tpu.memory_space<vmem>>, %arg12: memref<1x128xf32, #tpu.memory_space<vmem>>, %arg13: memref<1x128xf32, #tpu.memory_space<vmem>>, %arg14: memref<1x128xf32, #tpu.memory_space<vmem>>, %arg15: memref<1x8x128xf32, #tpu.memory_space<vmem>>) attributes {dimension_semantics = [#tpu.dimension_semantics<arbitrary>], iteration_bounds = array<i64: 2>, scalar_prefetch = 0 : i64, scratch_operands = 0 : i64, tpu.core_type = #tpu.core_type<tc>, window_params = [{transform_indices = @transform_0, window_bounds = array<i64: 1, 8, 128>}, {transform_indices = @transform_1, window_bounds = array<i64: 1, 1, 8>}, {pipeline_mode = #tpu.pipeline_mode<synchronous>, transform_indices = @transform_2, window_bounds = array<i64: 128, 384>}, {pipeline_mode = #tpu.pipeline_mode<synchronous>, transform_indices = @transform_3, window_bounds = array<i64: 1, 384>}, {pipeline_mode = #tpu.pipeline_mode<synchronous>, transform_indices = @transform_4, window_bounds = array<i64: 128, 128>}, {pipeline_mode = #tpu.pipeline_mode<synchronous>, transform_indices = @transform_5, window_bounds = array<i64: 1, 128>}, {pipeline_mode = #tpu.pipeline_mode<synchronous>, transform_indices = @transform_6, window_bounds = array<i64: 1, 128>}, {pipeline_mode = #tpu.pipeline_mode<synchronous>, transform_indices = @transform_7, window_bounds = array<i64: 1, 128>}, {pipeline_mode = #tpu.pipeline_mode<synchronous>, transform_indices = @transform_8, window_bounds = array<i64: 128, 512>}, {pipeline_mode = #tpu.pipeline_mode<synchronous>, transform_indices = @transform_9, window_bounds = array<i64: 1, 512>}, {pipeline_mode = #tpu.pipeline_mode<synchronous>, transform_indices = @transform_10, window_bounds = array<i64: 512, 128>}, {pipeline_mode = #tpu.pipeline_mode<synchronous>, transform_indices = @transform_11, window_bounds = array<i64: 1, 128>}, {pipeline_mode = #tpu.pipeline_mode<synchronous>, transform_indices = @transform_12, window_bounds = array<i64: 1, 128>}, {pipeline_mode = #tpu.pipeline_mode<synchronous>, transform_indices = @transform_13, window_bounds = array<i64: 1, 128>}, {transform_indices = @transform_14, window_bounds = array<i64: 1, 8, 128>}]} {
    %c0 = arith.constant 0 : index
    %c0_0 = arith.constant 0 : index
    %c0_1 = arith.constant 0 : index
    %0 = vector.load %arg1[%c0, %c0_0, %c0_1] : memref<1x8x128xf32, #tpu.memory_space<vmem>>, vector<1x8x128xf32>
    %1 = vector.shape_cast %0 : vector<1x8x128xf32> to vector<8x128xf32>
    %c0_2 = arith.constant 0 : index
    %c0_3 = arith.constant 0 : index
    %c0_4 = arith.constant 0 : index
    %2 = vector.load %arg2[%c0_2, %c0_3, %c0_4] : memref<1x1x8xf32, #tpu.memory_space<vmem>>, vector<1x1x8xf32>
    %3 = vector.shape_cast %2 : vector<1x1x8xf32> to vector<1x8xf32>
    %c0_5 = arith.constant 0 : index
    %c0_6 = arith.constant 0 : index
    %4 = vector.load %arg3[%c0_5, %c0_6] : memref<128x384xf32, #tpu.memory_space<vmem>>, vector<128x384xf32>
    %cst = arith.constant dense<0.000000e+00> : vector<8x384xf32>
    %5 = tpu.matmul %1, %4, %cst {dimension_numbers = #tpu.dot_dimension_numbers<[1], [0], [0], [1], [0, 0, 1, 1], [], []>} : vector<8x128xf32>, vector<128x384xf32>, vector<8x384xf32> -> vector<8x384xf32>
    %c0_7 = arith.constant 0 : index
    %c0_8 = arith.constant 0 : index
    %6 = vector.load %arg4[%c0_7, %c0_8] : memref<1x384xf32, #tpu.memory_space<vmem>>, vector<1x384xf32>
    %7 = vector.broadcast %6 : vector<1x384xf32> to vector<8x384xf32>
    %8 = arith.addf %5, %7 : vector<8x384xf32>
    %9 = vector.extract_strided_slice %8 {offsets = [0, 0], sizes = [8, 128], strides = [1, 1]} : vector<8x384xf32> to vector<8x128xf32>
    %10 = vector.extract_strided_slice %8 {offsets = [0, 128], sizes = [8, 128], strides = [1, 1]} : vector<8x384xf32> to vector<8x128xf32>
    %11 = vector.extract_strided_slice %8 {offsets = [0, 256], sizes = [8, 128], strides = [1, 1]} : vector<8x384xf32> to vector<8x128xf32>
    %12 = vector.extract_strided_slice %9 {offsets = [0, 0], sizes = [8, 32], strides = [1, 1]} : vector<8x128xf32> to vector<8x32xf32>
    %13 = vector.extract_strided_slice %10 {offsets = [0, 0], sizes = [8, 32], strides = [1, 1]} : vector<8x128xf32> to vector<8x32xf32>
    %14 = tpu.transpose %13, [1, 0] : vector<8x32xf32> -> vector<32x8xf32>
    %cst_9 = arith.constant dense<0.000000e+00> : vector<8x8xf32>
    %15 = tpu.matmul %12, %14, %cst_9 {dimension_numbers = #tpu.dot_dimension_numbers<[1], [0], [0], [1], [0, 0, 1, 1], [], []>} : vector<8x32xf32>, vector<32x8xf32>, vector<8x8xf32> -> vector<8x8xf32>
    %cst_10 = arith.constant 0.176776692 : f32
    %16 = vector.broadcast %cst_10 : f32 to vector<8x8xf32>
    %17 = arith.mulf %15, %16 : vector<8x8xf32>
    %18 = vector.broadcast %3 : vector<1x8xf32> to vector<8x8xf32>
    %19 = arith.addf %17, %18 : vector<8x8xf32>
    %cst_11 = arith.constant dense<0xFF800000> : vector<8xf32>
    %20 = vector.multi_reduction <maximumf>, %19, %cst_11 [1] : vector<8x8xf32> to vector<8xf32>
    %21 = vector.shape_cast %20 : vector<8xf32> to vector<8x1xf32>
    %22 = vector.broadcast %21 : vector<8x1xf32> to vector<8x8xf32>
    %23 = arith.subf %19, %22 : vector<8x8xf32>
    %24 = math.exp %23 : vector<8x8xf32>
    %cst_12 = arith.constant dense<0.000000e+00> : vector<8xf32>
    %25 = vector.multi_reduction <add>, %24, %cst_12 [1] : vector<8x8xf32> to vector<8xf32>
    %26 = vector.shape_cast %25 : vector<8xf32> to vector<8x1xf32>
    %27 = tpu.reciprocal %26 {approx = true} : vector<8x1xf32> -> vector<8x1xf32>
    %28 = vector.broadcast %27 : vector<8x1xf32> to vector<8x8xf32>
    %29 = arith.mulf %24, %28 : vector<8x8xf32>
    %30 = vector.extract_strided_slice %11 {offsets = [0, 0], sizes = [8, 32], strides = [1, 1]} : vector<8x128xf32> to vector<8x32xf32>
    %cst_13 = arith.constant dense<0.000000e+00> : vector<8x32xf32>
    %31 = tpu.matmul %29, %30, %cst_13 {dimension_numbers = #tpu.dot_dimension_numbers<[1], [0], [0], [1], [0, 0, 1, 1], [], []>} : vector<8x8xf32>, vector<8x32xf32>, vector<8x32xf32> -> vector<8x32xf32>
    %32 = vector.extract_strided_slice %9 {offsets = [0, 32], sizes = [8, 32], strides = [1, 1]} : vector<8x128xf32> to vector<8x32xf32>
    %33 = vector.extract_strided_slice %10 {offsets = [0, 32], sizes = [8, 32], strides = [1, 1]} : vector<8x128xf32> to vector<8x32xf32>
    %34 = tpu.transpose %33, [1, 0] : vector<8x32xf32> -> vector<32x8xf32>
    %cst_14 = arith.constant dense<0.000000e+00> : vector<8x8xf32>
    %35 = tpu.matmul %32, %34, %cst_14 {dimension_numbers = #tpu.dot_dimension_numbers<[1], [0], [0], [1], [0, 0, 1, 1], [], []>} : vector<8x32xf32>, vector<32x8xf32>, vector<8x8xf32> -> vector<8x8xf32>
    %cst_15 = arith.constant 0.176776692 : f32
    %36 = vector.broadcast %cst_15 : f32 to vector<8x8xf32>
    %37 = arith.mulf %35, %36 : vector<8x8xf32>
    %38 = vector.broadcast %3 : vector<1x8xf32> to vector<8x8xf32>
    %39 = arith.addf %37, %38 : vector<8x8xf32>
    %cst_16 = arith.constant dense<0xFF800000> : vector<8xf32>
    %40 = vector.multi_reduction <maximumf>, %39, %cst_16 [1] : vector<8x8xf32> to vector<8xf32>
    %41 = vector.shape_cast %40 : vector<8xf32> to vector<8x1xf32>
    %42 = vector.broadcast %41 : vector<8x1xf32> to vector<8x8xf32>
    %43 = arith.subf %39, %42 : vector<8x8xf32>
    %44 = math.exp %43 : vector<8x8xf32>
    %cst_17 = arith.constant dense<0.000000e+00> : vector<8xf32>
    %45 = vector.multi_reduction <add>, %44, %cst_17 [1] : vector<8x8xf32> to vector<8xf32>
    %46 = vector.shape_cast %45 : vector<8xf32> to vector<8x1xf32>
    %47 = tpu.reciprocal %46 {approx = true} : vector<8x1xf32> -> vector<8x1xf32>
    %48 = vector.broadcast %47 : vector<8x1xf32> to vector<8x8xf32>
    %49 = arith.mulf %44, %48 : vector<8x8xf32>
    %50 = vector.extract_strided_slice %11 {offsets = [0, 32], sizes = [8, 32], strides = [1, 1]} : vector<8x128xf32> to vector<8x32xf32>
    %cst_18 = arith.constant dense<0.000000e+00> : vector<8x32xf32>
    %51 = tpu.matmul %49, %50, %cst_18 {dimension_numbers = #tpu.dot_dimension_numbers<[1], [0], [0], [1], [0, 0, 1, 1], [], []>} : vector<8x8xf32>, vector<8x32xf32>, vector<8x32xf32> -> vector<8x32xf32>
    %52 = vector.extract_strided_slice %9 {offsets = [0, 64], sizes = [8, 32], strides = [1, 1]} : vector<8x128xf32> to vector<8x32xf32>
    %53 = vector.extract_strided_slice %10 {offsets = [0, 64], sizes = [8, 32], strides = [1, 1]} : vector<8x128xf32> to vector<8x32xf32>
    %54 = tpu.transpose %53, [1, 0] : vector<8x32xf32> -> vector<32x8xf32>
    %cst_19 = arith.constant dense<0.000000e+00> : vector<8x8xf32>
    %55 = tpu.matmul %52, %54, %cst_19 {dimension_numbers = #tpu.dot_dimension_numbers<[1], [0], [0], [1], [0, 0, 1, 1], [], []>} : vector<8x32xf32>, vector<32x8xf32>, vector<8x8xf32> -> vector<8x8xf32>
    %cst_20 = arith.constant 0.176776692 : f32
    %56 = vector.broadcast %cst_20 : f32 to vector<8x8xf32>
    %57 = arith.mulf %55, %56 : vector<8x8xf32>
    %58 = vector.broadcast %3 : vector<1x8xf32> to vector<8x8xf32>
    %59 = arith.addf %57, %58 : vector<8x8xf32>
    %cst_21 = arith.constant dense<0xFF800000> : vector<8xf32>
    %60 = vector.multi_reduction <maximumf>, %59, %cst_21 [1] : vector<8x8xf32> to vector<8xf32>
    %61 = vector.shape_cast %60 : vector<8xf32> to vector<8x1xf32>
    %62 = vector.broadcast %61 : vector<8x1xf32> to vector<8x8xf32>
    %63 = arith.subf %59, %62 : vector<8x8xf32>
    %64 = math.exp %63 : vector<8x8xf32>
    %cst_22 = arith.constant dense<0.000000e+00> : vector<8xf32>
    %65 = vector.multi_reduction <add>, %64, %cst_22 [1] : vector<8x8xf32> to vector<8xf32>
    %66 = vector.shape_cast %65 : vector<8xf32> to vector<8x1xf32>
    %67 = tpu.reciprocal %66 {approx = true} : vector<8x1xf32> -> vector<8x1xf32>
    %68 = vector.broadcast %67 : vector<8x1xf32> to vector<8x8xf32>
    %69 = arith.mulf %64, %68 : vector<8x8xf32>
    %70 = vector.extract_strided_slice %11 {offsets = [0, 64], sizes = [8, 32], strides = [1, 1]} : vector<8x128xf32> to vector<8x32xf32>
    %cst_23 = arith.constant dense<0.000000e+00> : vector<8x32xf32>
    %71 = tpu.matmul %69, %70, %cst_23 {dimension_numbers = #tpu.dot_dimension_numbers<[1], [0], [0], [1], [0, 0, 1, 1], [], []>} : vector<8x8xf32>, vector<8x32xf32>, vector<8x32xf32> -> vector<8x32xf32>
    %72 = vector.extract_strided_slice %9 {offsets = [0, 96], sizes = [8, 32], strides = [1, 1]} : vector<8x128xf32> to vector<8x32xf32>
    %73 = vector.extract_strided_slice %10 {offsets = [0, 96], sizes = [8, 32], strides = [1, 1]} : vector<8x128xf32> to vector<8x32xf32>
    %74 = tpu.transpose %73, [1, 0] : vector<8x32xf32> -> vector<32x8xf32>
    %cst_24 = arith.constant dense<0.000000e+00> : vector<8x8xf32>
    %75 = tpu.matmul %72, %74, %cst_24 {dimension_numbers = #tpu.dot_dimension_numbers<[1], [0], [0], [1], [0, 0, 1, 1], [], []>} : vector<8x32xf32>, vector<32x8xf32>, vector<8x8xf32> -> vector<8x8xf32>
    %cst_25 = arith.constant 0.176776692 : f32
    %76 = vector.broadcast %cst_25 : f32 to vector<8x8xf32>
    %77 = arith.mulf %75, %76 : vector<8x8xf32>
    %78 = vector.broadcast %3 : vector<1x8xf32> to vector<8x8xf32>
    %79 = arith.addf %77, %78 : vector<8x8xf32>
    %cst_26 = arith.constant dense<0xFF800000> : vector<8xf32>
    %80 = vector.multi_reduction <maximumf>, %79, %cst_26 [1] : vector<8x8xf32> to vector<8xf32>
    %81 = vector.shape_cast %80 : vector<8xf32> to vector<8x1xf32>
    %82 = vector.broadcast %81 : vector<8x1xf32> to vector<8x8xf32>
    %83 = arith.subf %79, %82 : vector<8x8xf32>
    %84 = math.exp %83 : vector<8x8xf32>
    %cst_27 = arith.constant dense<0.000000e+00> : vector<8xf32>
    %85 = vector.multi_reduction <add>, %84, %cst_27 [1] : vector<8x8xf32> to vector<8xf32>
    %86 = vector.shape_cast %85 : vector<8xf32> to vector<8x1xf32>
    %87 = tpu.reciprocal %86 {approx = true} : vector<8x1xf32> -> vector<8x1xf32>
    %88 = vector.broadcast %87 : vector<8x1xf32> to vector<8x8xf32>
    %89 = arith.mulf %84, %88 : vector<8x8xf32>
    %90 = vector.extract_strided_slice %11 {offsets = [0, 96], sizes = [8, 32], strides = [1, 1]} : vector<8x128xf32> to vector<8x32xf32>
    %cst_28 = arith.constant dense<0.000000e+00> : vector<8x32xf32>
    %91 = tpu.matmul %89, %90, %cst_28 {dimension_numbers = #tpu.dot_dimension_numbers<[1], [0], [0], [1], [0, 0, 1, 1], [], []>} : vector<8x8xf32>, vector<8x32xf32>, vector<8x32xf32> -> vector<8x32xf32>
    %92 = tpu.concatenate %31, %51, %71, %91 in 1 : vector<8x32xf32>, vector<8x32xf32>, vector<8x32xf32>, vector<8x32xf32> -> vector<8x128xf32>
    %c0_29 = arith.constant 0 : index
    %c0_30 = arith.constant 0 : index
    %93 = vector.load %arg5[%c0_29, %c0_30] : memref<128x128xf32, #tpu.memory_space<vmem>>, vector<128x128xf32>
    %cst_31 = arith.constant dense<0.000000e+00> : vector<8x128xf32>
    %94 = tpu.matmul %92, %93, %cst_31 {dimension_numbers = #tpu.dot_dimension_numbers<[1], [0], [0], [1], [0, 0, 1, 1], [], []>} : vector<8x128xf32>, vector<128x128xf32>, vector<8x128xf32> -> vector<8x128xf32>
    %c0_32 = arith.constant 0 : index
    %c0_33 = arith.constant 0 : index
    %95 = vector.load %arg6[%c0_32, %c0_33] : memref<1x128xf32, #tpu.memory_space<vmem>>, vector<1x128xf32>
    %96 = vector.broadcast %95 : vector<1x128xf32> to vector<8x128xf32>
    %97 = arith.addf %94, %96 : vector<8x128xf32>
    %98 = arith.addf %1, %97 : vector<8x128xf32>
    %c0_34 = arith.constant 0 : index
    %c0_35 = arith.constant 0 : index
    %99 = vector.load %arg7[%c0_34, %c0_35] : memref<1x128xf32, #tpu.memory_space<vmem>>, vector<1x128xf32>
    %c0_36 = arith.constant 0 : index
    %c0_37 = arith.constant 0 : index
    %100 = vector.load %arg8[%c0_36, %c0_37] : memref<1x128xf32, #tpu.memory_space<vmem>>, vector<1x128xf32>
    %cst_38 = arith.constant dense<0.000000e+00> : vector<8xf32>
    %101 = vector.multi_reduction <add>, %98, %cst_38 [1] : vector<8x128xf32> to vector<8xf32>
    %102 = vector.shape_cast %101 : vector<8xf32> to vector<8x1xf32>
    %cst_39 = arith.constant 1.280000e+02 : f32
    %103 = vector.broadcast %cst_39 : f32 to vector<8x1xf32>
    %104 = arith.divf %102, %103 : vector<8x1xf32>
    %105 = vector.broadcast %104 : vector<8x1xf32> to vector<8x128xf32>
    %106 = arith.subf %98, %105 : vector<8x128xf32>
    %107 = arith.mulf %106, %106 : vector<8x128xf32>
    %cst_40 = arith.constant dense<0.000000e+00> : vector<8xf32>
    %108 = vector.multi_reduction <add>, %107, %cst_40 [1] : vector<8x128xf32> to vector<8xf32>
    %109 = vector.shape_cast %108 : vector<8xf32> to vector<8x1xf32>
    %cst_41 = arith.constant 1.280000e+02 : f32
    %110 = vector.broadcast %cst_41 : f32 to vector<8x1xf32>
    %111 = arith.divf %109, %110 : vector<8x1xf32>
    %112 = vector.broadcast %104 : vector<8x1xf32> to vector<8x128xf32>
    %113 = arith.subf %98, %112 : vector<8x128xf32>
    %cst_42 = arith.constant 9.99999974E-6 : f32
    %114 = vector.broadcast %cst_42 : f32 to vector<8x1xf32>
    %115 = arith.addf %111, %114 : vector<8x1xf32>
    %116 = math.rsqrt %115 : vector<8x1xf32>
    %117 = vector.broadcast %116 : vector<8x1xf32> to vector<8x128xf32>
    %118 = arith.mulf %113, %117 : vector<8x128xf32>
    %119 = vector.broadcast %99 : vector<1x128xf32> to vector<8x128xf32>
    %120 = arith.mulf %118, %119 : vector<8x128xf32>
    %121 = vector.broadcast %100 : vector<1x128xf32> to vector<8x128xf32>
    %122 = arith.addf %120, %121 : vector<8x128xf32>
    %c0_43 = arith.constant 0 : index
    %c0_44 = arith.constant 0 : index
    %123 = vector.load %arg9[%c0_43, %c0_44] : memref<128x512xf32, #tpu.memory_space<vmem>>, vector<128x512xf32>
    %cst_45 = arith.constant dense<0.000000e+00> : vector<8x512xf32>
    %124 = tpu.matmul %122, %123, %cst_45 {dimension_numbers = #tpu.dot_dimension_numbers<[1], [0], [0], [1], [0, 0, 1, 1], [], []>} : vector<8x128xf32>, vector<128x512xf32>, vector<8x512xf32> -> vector<8x512xf32>
    %c0_46 = arith.constant 0 : index
    %c0_47 = arith.constant 0 : index
    %125 = vector.load %arg10[%c0_46, %c0_47] : memref<1x512xf32, #tpu.memory_space<vmem>>, vector<1x512xf32>
    %126 = vector.broadcast %125 : vector<1x512xf32> to vector<8x512xf32>
    %127 = arith.addf %124, %126 : vector<8x512xf32>
    %cst_48 = arith.constant 0.000000e+00 : f32
    %128 = vector.broadcast %cst_48 : f32 to vector<8x512xf32>
    %129 = arith.maximumf %127, %128 : vector<8x512xf32>
    %c0_49 = arith.constant 0 : index
    %c0_50 = arith.constant 0 : index
    %130 = vector.load %arg11[%c0_49, %c0_50] : memref<512x128xf32, #tpu.memory_space<vmem>>, vector<512x128xf32>
    %cst_51 = arith.constant dense<0.000000e+00> : vector<8x128xf32>
    %131 = tpu.matmul %129, %130, %cst_51 {dimension_numbers = #tpu.dot_dimension_numbers<[1], [0], [0], [1], [0, 0, 1, 1], [], []>} : vector<8x512xf32>, vector<512x128xf32>, vector<8x128xf32> -> vector<8x128xf32>
    %c0_52 = arith.constant 0 : index
    %c0_53 = arith.constant 0 : index
    %132 = vector.load %arg12[%c0_52, %c0_53] : memref<1x128xf32, #tpu.memory_space<vmem>>, vector<1x128xf32>
    %133 = vector.broadcast %132 : vector<1x128xf32> to vector<8x128xf32>
    %134 = arith.addf %131, %133 : vector<8x128xf32>
    %135 = arith.addf %122, %134 : vector<8x128xf32>
    %c0_54 = arith.constant 0 : index
    %c0_55 = arith.constant 0 : index
    %136 = vector.load %arg13[%c0_54, %c0_55] : memref<1x128xf32, #tpu.memory_space<vmem>>, vector<1x128xf32>
    %c0_56 = arith.constant 0 : index
    %c0_57 = arith.constant 0 : index
    %137 = vector.load %arg14[%c0_56, %c0_57] : memref<1x128xf32, #tpu.memory_space<vmem>>, vector<1x128xf32>
    %cst_58 = arith.constant dense<0.000000e+00> : vector<8xf32>
    %138 = vector.multi_reduction <add>, %135, %cst_58 [1] : vector<8x128xf32> to vector<8xf32>
    %139 = vector.shape_cast %138 : vector<8xf32> to vector<8x1xf32>
    %cst_59 = arith.constant 1.280000e+02 : f32
    %140 = vector.broadcast %cst_59 : f32 to vector<8x1xf32>
    %141 = arith.divf %139, %140 : vector<8x1xf32>
    %142 = vector.broadcast %141 : vector<8x1xf32> to vector<8x128xf32>
    %143 = arith.subf %135, %142 : vector<8x128xf32>
    %144 = arith.mulf %143, %143 : vector<8x128xf32>
    %cst_60 = arith.constant dense<0.000000e+00> : vector<8xf32>
    %145 = vector.multi_reduction <add>, %144, %cst_60 [1] : vector<8x128xf32> to vector<8xf32>
    %146 = vector.shape_cast %145 : vector<8xf32> to vector<8x1xf32>
    %cst_61 = arith.constant 1.280000e+02 : f32
    %147 = vector.broadcast %cst_61 : f32 to vector<8x1xf32>
    %148 = arith.divf %146, %147 : vector<8x1xf32>
    %149 = vector.broadcast %141 : vector<8x1xf32> to vector<8x128xf32>
    %150 = arith.subf %135, %149 : vector<8x128xf32>
    %cst_62 = arith.constant 9.99999974E-6 : f32
    %151 = vector.broadcast %cst_62 : f32 to vector<8x1xf32>
    %152 = arith.addf %148, %151 : vector<8x1xf32>
    %153 = math.rsqrt %152 : vector<8x1xf32>
    %154 = vector.broadcast %153 : vector<8x1xf32> to vector<8x128xf32>
    %155 = arith.mulf %150, %154 : vector<8x128xf32>
    %156 = vector.broadcast %136 : vector<1x128xf32> to vector<8x128xf32>
    %157 = arith.mulf %155, %156 : vector<8x128xf32>
    %158 = vector.broadcast %137 : vector<1x128xf32> to vector<8x128xf32>
    %159 = arith.addf %157, %158 : vector<8x128xf32>
    %c0_63 = arith.constant 0 : index
    %c0_64 = arith.constant 0 : index
    %c0_65 = arith.constant 0 : index
    %160 = vector.load %arg15[%c0_63, %c0_64, %c0_65] : memref<1x8x128xf32, #tpu.memory_space<vmem>>, vector<1x8x128xf32>
    %161 = vector.shape_cast %160 : vector<1x8x128xf32> to vector<8x128xf32>
    %162 = vector.shape_cast %159 : vector<8x128xf32> to vector<1x8x128xf32>
    tpu.vector_store %arg15[%c0_63, %c0_64, %c0_65], %162 {strides = array<i32>} : memref<1x8x128xf32, #tpu.memory_space<vmem>>, vector<1x8x128xf32>,
    return
  }
  func.func @transform_0(%arg0: i32) -> (i32, i32, i32) {
    %c0_i32 = arith.constant 0 : i32
    %c0_i32_0 = arith.constant 0 : i32
    %c0_i32_1 = arith.constant 0 : i32
    return %arg0, %c0_i32, %c0_i32_0 : i32, i32, i32
  }
  func.func @transform_1(%arg0: i32) -> (i32, i32, i32) {
    %c0_i32 = arith.constant 0 : i32
    %c0_i32_0 = arith.constant 0 : i32
    %c0_i32_1 = arith.constant 0 : i32
    return %arg0, %c0_i32, %c0_i32_0 : i32, i32, i32
  }
  func.func @transform_2(%arg0: i32) -> (i32, i32) {
    %c0_i32 = arith.constant 0 : i32
    %c0_i32_0 = arith.constant 0 : i32
    %c0_i32_1 = arith.constant 0 : i32
    return %c0_i32, %c0_i32_0 : i32, i32
  }
  func.func @transform_3(%arg0: i32) -> (i32, i32) {
    %c0_i32 = arith.constant 0 : i32
    %c0_i32_0 = arith.constant 0 : i32
    %c0_i32_1 = arith.constant 0 : i32
    return %c0_i32, %c0_i32_0 : i32, i32
  }
  func.func @transform_4(%arg0: i32) -> (i32, i32) {
    %c0_i32 = arith.constant 0 : i32
    %c0_i32_0 = arith.constant 0 : i32
    %c0_i32_1 = arith.constant 0 : i32
    return %c0_i32, %c0_i32_0 : i32, i32
  }
  func.func @transform_5(%arg0: i32) -> (i32, i32) {
    %c0_i32 = arith.constant 0 : i32
    %c0_i32_0 = arith.constant 0 : i32
    %c0_i32_1 = arith.constant 0 : i32
    return %c0_i32, %c0_i32_0 : i32, i32
  }
  func.func @transform_6(%arg0: i32) -> (i32, i32) {
    %c0_i32 = arith.constant 0 : i32
    %c0_i32_0 = arith.constant 0 : i32
    %c0_i32_1 = arith.constant 0 : i32
    return %c0_i32, %c0_i32_0 : i32, i32
  }
  func.func @transform_7(%arg0: i32) -> (i32, i32) {
    %c0_i32 = arith.constant 0 : i32
    %c0_i32_0 = arith.constant 0 : i32
    %c0_i32_1 = arith.constant 0 : i32
    return %c0_i32, %c0_i32_0 : i32, i32
  }
  func.func @transform_8(%arg0: i32) -> (i32, i32) {
    %c0_i32 = arith.constant 0 : i32
    %c0_i32_0 = arith.constant 0 : i32
    %c0_i32_1 = arith.constant 0 : i32
    return %c0_i32, %c0_i32_0 : i32, i32
  }
  func.func @transform_9(%arg0: i32) -> (i32, i32) {
    %c0_i32 = arith.constant 0 : i32
    %c0_i32_0 = arith.constant 0 : i32
    %c0_i32_1 = arith.constant 0 : i32
    return %c0_i32, %c0_i32_0 : i32, i32
  }
  func.func @transform_10(%arg0: i32) -> (i32, i32) {
    %c0_i32 = arith.constant 0 : i32
    %c0_i32_0 = arith.constant 0 : i32
    %c0_i32_1 = arith.constant 0 : i32
    return %c0_i32, %c0_i32_0 : i32, i32
  }
  func.func @transform_11(%arg0: i32) -> (i32, i32) {
    %c0_i32 = arith.constant 0 : i32
    %c0_i32_0 = arith.constant 0 : i32
    %c0_i32_1 = arith.constant 0 : i32
    return %c0_i32, %c0_i32_0 : i32, i32
  }
  func.func @transform_12(%arg0: i32) -> (i32, i32) {
    %c0_i32 = arith.constant 0 : i32
    %c0_i32_0 = arith.constant 0 : i32
    %c0_i32_1 = arith.constant 0 : i32
    return %c0_i32, %c0_i32_0 : i32, i32
  }
  func.func @transform_13(%arg0: i32) -> (i32, i32) {
    %c0_i32 = arith.constant 0 : i32
    %c0_i32_0 = arith.constant 0 : i32
    %c0_i32_1 = arith.constant 0 : i32
    return %c0_i32, %c0_i32_0 : i32, i32
  }
  func.func @transform_14(%arg0: i32) -> (i32, i32, i32) {
    %c0_i32 = arith.constant 0 : i32
    %c0_i32_0 = arith.constant 0 : i32
    %c0_i32_1 = arith.constant 0 : i32
    return %arg0, %c0_i32, %c0_i32_0 : i32, i32, i32
  }
}

module attributes {stable_mosaic.version = 11 : i64} {
  func.func @_cross_attn_kernel(%arg0: i32, %arg1: memref<1x8x128xf32, #tpu.memory_space<vmem>>, %arg2: memref<1x8x128xf32, #tpu.memory_space<vmem>>, %arg3: memref<128x128xf32, #tpu.memory_space<vmem>>, %arg4: memref<1x128xf32, #tpu.memory_space<vmem>>, %arg5: memref<128x256xf32, #tpu.memory_space<vmem>>, %arg6: memref<1x256xf32, #tpu.memory_space<vmem>>, %arg7: memref<128x128xf32, #tpu.memory_space<vmem>>, %arg8: memref<1x128xf32, #tpu.memory_space<vmem>>, %arg9: memref<1x8x128xf32, #tpu.memory_space<vmem>>) attributes {dimension_semantics = [#tpu.dimension_semantics<arbitrary>], iteration_bounds = array<i64: 2>, scalar_prefetch = 0 : i64, scratch_operands = 0 : i64, tpu.core_type = #tpu.core_type<tc>, window_params = [{transform_indices = @transform_0, window_bounds = array<i64: 1, 8, 128>}, {transform_indices = @transform_1, window_bounds = array<i64: 1, 8, 128>}, {pipeline_mode = #tpu.pipeline_mode<synchronous>, transform_indices = @transform_2, window_bounds = array<i64: 128, 128>}, {pipeline_mode = #tpu.pipeline_mode<synchronous>, transform_indices = @transform_3, window_bounds = array<i64: 1, 128>}, {pipeline_mode = #tpu.pipeline_mode<synchronous>, transform_indices = @transform_4, window_bounds = array<i64: 128, 256>}, {pipeline_mode = #tpu.pipeline_mode<synchronous>, transform_indices = @transform_5, window_bounds = array<i64: 1, 256>}, {pipeline_mode = #tpu.pipeline_mode<synchronous>, transform_indices = @transform_6, window_bounds = array<i64: 128, 128>}, {pipeline_mode = #tpu.pipeline_mode<synchronous>, transform_indices = @transform_7, window_bounds = array<i64: 1, 128>}, {transform_indices = @transform_8, window_bounds = array<i64: 1, 8, 128>}]} {
    %c0 = arith.constant 0 : index
    %c0_0 = arith.constant 0 : index
    %c0_1 = arith.constant 0 : index
    %0 = vector.load %arg1[%c0, %c0_0, %c0_1] : memref<1x8x128xf32, #tpu.memory_space<vmem>>, vector<1x8x128xf32>
    %1 = vector.shape_cast %0 : vector<1x8x128xf32> to vector<8x128xf32>
    %c0_2 = arith.constant 0 : index
    %c0_3 = arith.constant 0 : index
    %c0_4 = arith.constant 0 : index
    %2 = vector.load %arg2[%c0_2, %c0_3, %c0_4] : memref<1x8x128xf32, #tpu.memory_space<vmem>>, vector<1x8x128xf32>
    %3 = vector.shape_cast %2 : vector<1x8x128xf32> to vector<8x128xf32>
    %c0_5 = arith.constant 0 : index
    %c0_6 = arith.constant 0 : index
    %4 = vector.load %arg3[%c0_5, %c0_6] : memref<128x128xf32, #tpu.memory_space<vmem>>, vector<128x128xf32>
    %cst = arith.constant dense<0.000000e+00> : vector<8x128xf32>
    %5 = tpu.matmul %1, %4, %cst {dimension_numbers = #tpu.dot_dimension_numbers<[1], [0], [0], [1], [0, 0, 1, 1], [], []>} : vector<8x128xf32>, vector<128x128xf32>, vector<8x128xf32> -> vector<8x128xf32>
    %c0_7 = arith.constant 0 : index
    %c0_8 = arith.constant 0 : index
    %6 = vector.load %arg4[%c0_7, %c0_8] : memref<1x128xf32, #tpu.memory_space<vmem>>, vector<1x128xf32>
    %7 = vector.broadcast %6 : vector<1x128xf32> to vector<8x128xf32>
    %8 = arith.addf %5, %7 : vector<8x128xf32>
    %c0_9 = arith.constant 0 : index
    %c0_10 = arith.constant 0 : index
    %9 = vector.load %arg5[%c0_9, %c0_10] : memref<128x256xf32, #tpu.memory_space<vmem>>, vector<128x256xf32>
    %cst_11 = arith.constant dense<0.000000e+00> : vector<8x256xf32>
    %10 = tpu.matmul %3, %9, %cst_11 {dimension_numbers = #tpu.dot_dimension_numbers<[1], [0], [0], [1], [0, 0, 1, 1], [], []>} : vector<8x128xf32>, vector<128x256xf32>, vector<8x256xf32> -> vector<8x256xf32>
    %c0_12 = arith.constant 0 : index
    %c0_13 = arith.constant 0 : index
    %11 = vector.load %arg6[%c0_12, %c0_13] : memref<1x256xf32, #tpu.memory_space<vmem>>, vector<1x256xf32>
    %12 = vector.broadcast %11 : vector<1x256xf32> to vector<8x256xf32>
    %13 = arith.addf %10, %12 : vector<8x256xf32>
    %14 = vector.extract_strided_slice %13 {offsets = [0, 0], sizes = [8, 128], strides = [1, 1]} : vector<8x256xf32> to vector<8x128xf32>
    %15 = vector.extract_strided_slice %13 {offsets = [0, 128], sizes = [8, 128], strides = [1, 1]} : vector<8x256xf32> to vector<8x128xf32>
    %16 = vector.extract_strided_slice %8 {offsets = [0, 0], sizes = [8, 32], strides = [1, 1]} : vector<8x128xf32> to vector<8x32xf32>
    %17 = vector.extract_strided_slice %14 {offsets = [0, 0], sizes = [8, 32], strides = [1, 1]} : vector<8x128xf32> to vector<8x32xf32>
    %18 = tpu.transpose %17, [1, 0] : vector<8x32xf32> -> vector<32x8xf32>
    %cst_14 = arith.constant dense<0.000000e+00> : vector<8x8xf32>
    %19 = tpu.matmul %16, %18, %cst_14 {dimension_numbers = #tpu.dot_dimension_numbers<[1], [0], [0], [1], [0, 0, 1, 1], [], []>} : vector<8x32xf32>, vector<32x8xf32>, vector<8x8xf32> -> vector<8x8xf32>
    %cst_15 = arith.constant 0.176776692 : f32
    %20 = vector.broadcast %cst_15 : f32 to vector<8x8xf32>
    %21 = arith.mulf %19, %20 : vector<8x8xf32>
    %cst_16 = arith.constant dense<0xFF800000> : vector<8xf32>
    %22 = vector.multi_reduction <maximumf>, %21, %cst_16 [1] : vector<8x8xf32> to vector<8xf32>
    %23 = vector.shape_cast %22 : vector<8xf32> to vector<8x1xf32>
    %24 = vector.broadcast %23 : vector<8x1xf32> to vector<8x8xf32>
    %25 = arith.subf %21, %24 : vector<8x8xf32>
    %26 = math.exp %25 : vector<8x8xf32>
    %cst_17 = arith.constant dense<0.000000e+00> : vector<8xf32>
    %27 = vector.multi_reduction <add>, %26, %cst_17 [1] : vector<8x8xf32> to vector<8xf32>
    %28 = vector.shape_cast %27 : vector<8xf32> to vector<8x1xf32>
    %29 = tpu.reciprocal %28 {approx = true} : vector<8x1xf32> -> vector<8x1xf32>
    %30 = vector.broadcast %29 : vector<8x1xf32> to vector<8x8xf32>
    %31 = arith.mulf %26, %30 : vector<8x8xf32>
    %32 = vector.extract_strided_slice %15 {offsets = [0, 0], sizes = [8, 32], strides = [1, 1]} : vector<8x128xf32> to vector<8x32xf32>
    %cst_18 = arith.constant dense<0.000000e+00> : vector<8x32xf32>
    %33 = tpu.matmul %31, %32, %cst_18 {dimension_numbers = #tpu.dot_dimension_numbers<[1], [0], [0], [1], [0, 0, 1, 1], [], []>} : vector<8x8xf32>, vector<8x32xf32>, vector<8x32xf32> -> vector<8x32xf32>
    %34 = vector.extract_strided_slice %8 {offsets = [0, 32], sizes = [8, 32], strides = [1, 1]} : vector<8x128xf32> to vector<8x32xf32>
    %35 = vector.extract_strided_slice %14 {offsets = [0, 32], sizes = [8, 32], strides = [1, 1]} : vector<8x128xf32> to vector<8x32xf32>
    %36 = tpu.transpose %35, [1, 0] : vector<8x32xf32> -> vector<32x8xf32>
    %cst_19 = arith.constant dense<0.000000e+00> : vector<8x8xf32>
    %37 = tpu.matmul %34, %36, %cst_19 {dimension_numbers = #tpu.dot_dimension_numbers<[1], [0], [0], [1], [0, 0, 1, 1], [], []>} : vector<8x32xf32>, vector<32x8xf32>, vector<8x8xf32> -> vector<8x8xf32>
    %cst_20 = arith.constant 0.176776692 : f32
    %38 = vector.broadcast %cst_20 : f32 to vector<8x8xf32>
    %39 = arith.mulf %37, %38 : vector<8x8xf32>
    %cst_21 = arith.constant dense<0xFF800000> : vector<8xf32>
    %40 = vector.multi_reduction <maximumf>, %39, %cst_21 [1] : vector<8x8xf32> to vector<8xf32>
    %41 = vector.shape_cast %40 : vector<8xf32> to vector<8x1xf32>
    %42 = vector.broadcast %41 : vector<8x1xf32> to vector<8x8xf32>
    %43 = arith.subf %39, %42 : vector<8x8xf32>
    %44 = math.exp %43 : vector<8x8xf32>
    %cst_22 = arith.constant dense<0.000000e+00> : vector<8xf32>
    %45 = vector.multi_reduction <add>, %44, %cst_22 [1] : vector<8x8xf32> to vector<8xf32>
    %46 = vector.shape_cast %45 : vector<8xf32> to vector<8x1xf32>
    %47 = tpu.reciprocal %46 {approx = true} : vector<8x1xf32> -> vector<8x1xf32>
    %48 = vector.broadcast %47 : vector<8x1xf32> to vector<8x8xf32>
    %49 = arith.mulf %44, %48 : vector<8x8xf32>
    %50 = vector.extract_strided_slice %15 {offsets = [0, 32], sizes = [8, 32], strides = [1, 1]} : vector<8x128xf32> to vector<8x32xf32>
    %cst_23 = arith.constant dense<0.000000e+00> : vector<8x32xf32>
    %51 = tpu.matmul %49, %50, %cst_23 {dimension_numbers = #tpu.dot_dimension_numbers<[1], [0], [0], [1], [0, 0, 1, 1], [], []>} : vector<8x8xf32>, vector<8x32xf32>, vector<8x32xf32> -> vector<8x32xf32>
    %52 = vector.extract_strided_slice %8 {offsets = [0, 64], sizes = [8, 32], strides = [1, 1]} : vector<8x128xf32> to vector<8x32xf32>
    %53 = vector.extract_strided_slice %14 {offsets = [0, 64], sizes = [8, 32], strides = [1, 1]} : vector<8x128xf32> to vector<8x32xf32>
    %54 = tpu.transpose %53, [1, 0] : vector<8x32xf32> -> vector<32x8xf32>
    %cst_24 = arith.constant dense<0.000000e+00> : vector<8x8xf32>
    %55 = tpu.matmul %52, %54, %cst_24 {dimension_numbers = #tpu.dot_dimension_numbers<[1], [0], [0], [1], [0, 0, 1, 1], [], []>} : vector<8x32xf32>, vector<32x8xf32>, vector<8x8xf32> -> vector<8x8xf32>
    %cst_25 = arith.constant 0.176776692 : f32
    %56 = vector.broadcast %cst_25 : f32 to vector<8x8xf32>
    %57 = arith.mulf %55, %56 : vector<8x8xf32>
    %cst_26 = arith.constant dense<0xFF800000> : vector<8xf32>
    %58 = vector.multi_reduction <maximumf>, %57, %cst_26 [1] : vector<8x8xf32> to vector<8xf32>
    %59 = vector.shape_cast %58 : vector<8xf32> to vector<8x1xf32>
    %60 = vector.broadcast %59 : vector<8x1xf32> to vector<8x8xf32>
    %61 = arith.subf %57, %60 : vector<8x8xf32>
    %62 = math.exp %61 : vector<8x8xf32>
    %cst_27 = arith.constant dense<0.000000e+00> : vector<8xf32>
    %63 = vector.multi_reduction <add>, %62, %cst_27 [1] : vector<8x8xf32> to vector<8xf32>
    %64 = vector.shape_cast %63 : vector<8xf32> to vector<8x1xf32>
    %65 = tpu.reciprocal %64 {approx = true} : vector<8x1xf32> -> vector<8x1xf32>
    %66 = vector.broadcast %65 : vector<8x1xf32> to vector<8x8xf32>
    %67 = arith.mulf %62, %66 : vector<8x8xf32>
    %68 = vector.extract_strided_slice %15 {offsets = [0, 64], sizes = [8, 32], strides = [1, 1]} : vector<8x128xf32> to vector<8x32xf32>
    %cst_28 = arith.constant dense<0.000000e+00> : vector<8x32xf32>
    %69 = tpu.matmul %67, %68, %cst_28 {dimension_numbers = #tpu.dot_dimension_numbers<[1], [0], [0], [1], [0, 0, 1, 1], [], []>} : vector<8x8xf32>, vector<8x32xf32>, vector<8x32xf32> -> vector<8x32xf32>
    %70 = vector.extract_strided_slice %8 {offsets = [0, 96], sizes = [8, 32], strides = [1, 1]} : vector<8x128xf32> to vector<8x32xf32>
    %71 = vector.extract_strided_slice %14 {offsets = [0, 96], sizes = [8, 32], strides = [1, 1]} : vector<8x128xf32> to vector<8x32xf32>
    %72 = tpu.transpose %71, [1, 0] : vector<8x32xf32> -> vector<32x8xf32>
    %cst_29 = arith.constant dense<0.000000e+00> : vector<8x8xf32>
    %73 = tpu.matmul %70, %72, %cst_29 {dimension_numbers = #tpu.dot_dimension_numbers<[1], [0], [0], [1], [0, 0, 1, 1], [], []>} : vector<8x32xf32>, vector<32x8xf32>, vector<8x8xf32> -> vector<8x8xf32>
    %cst_30 = arith.constant 0.176776692 : f32
    %74 = vector.broadcast %cst_30 : f32 to vector<8x8xf32>
    %75 = arith.mulf %73, %74 : vector<8x8xf32>
    %cst_31 = arith.constant dense<0xFF800000> : vector<8xf32>
    %76 = vector.multi_reduction <maximumf>, %75, %cst_31 [1] : vector<8x8xf32> to vector<8xf32>
    %77 = vector.shape_cast %76 : vector<8xf32> to vector<8x1xf32>
    %78 = vector.broadcast %77 : vector<8x1xf32> to vector<8x8xf32>
    %79 = arith.subf %75, %78 : vector<8x8xf32>
    %80 = math.exp %79 : vector<8x8xf32>
    %cst_32 = arith.constant dense<0.000000e+00> : vector<8xf32>
    %81 = vector.multi_reduction <add>, %80, %cst_32 [1] : vector<8x8xf32> to vector<8xf32>
    %82 = vector.shape_cast %81 : vector<8xf32> to vector<8x1xf32>
    %83 = tpu.reciprocal %82 {approx = true} : vector<8x1xf32> -> vector<8x1xf32>
    %84 = vector.broadcast %83 : vector<8x1xf32> to vector<8x8xf32>
    %85 = arith.mulf %80, %84 : vector<8x8xf32>
    %86 = vector.extract_strided_slice %15 {offsets = [0, 96], sizes = [8, 32], strides = [1, 1]} : vector<8x128xf32> to vector<8x32xf32>
    %cst_33 = arith.constant dense<0.000000e+00> : vector<8x32xf32>
    %87 = tpu.matmul %85, %86, %cst_33 {dimension_numbers = #tpu.dot_dimension_numbers<[1], [0], [0], [1], [0, 0, 1, 1], [], []>} : vector<8x8xf32>, vector<8x32xf32>, vector<8x32xf32> -> vector<8x32xf32>
    %88 = tpu.concatenate %33, %51, %69, %87 in 1 : vector<8x32xf32>, vector<8x32xf32>, vector<8x32xf32>, vector<8x32xf32> -> vector<8x128xf32>
    %c0_34 = arith.constant 0 : index
    %c0_35 = arith.constant 0 : index
    %89 = vector.load %arg7[%c0_34, %c0_35] : memref<128x128xf32, #tpu.memory_space<vmem>>, vector<128x128xf32>
    %cst_36 = arith.constant dense<0.000000e+00> : vector<8x128xf32>
    %90 = tpu.matmul %88, %89, %cst_36 {dimension_numbers = #tpu.dot_dimension_numbers<[1], [0], [0], [1], [0, 0, 1, 1], [], []>} : vector<8x128xf32>, vector<128x128xf32>, vector<8x128xf32> -> vector<8x128xf32>
    %c0_37 = arith.constant 0 : index
    %c0_38 = arith.constant 0 : index
    %91 = vector.load %arg8[%c0_37, %c0_38] : memref<1x128xf32, #tpu.memory_space<vmem>>, vector<1x128xf32>
    %92 = vector.broadcast %91 : vector<1x128xf32> to vector<8x128xf32>
    %93 = arith.addf %90, %92 : vector<8x128xf32>
    %c0_39 = arith.constant 0 : index
    %c0_40 = arith.constant 0 : index
    %c0_41 = arith.constant 0 : index
    %94 = vector.load %arg9[%c0_39, %c0_40, %c0_41] : memref<1x8x128xf32, #tpu.memory_space<vmem>>, vector<1x8x128xf32>
    %95 = vector.shape_cast %94 : vector<1x8x128xf32> to vector<8x128xf32>
    %96 = vector.shape_cast %93 : vector<8x128xf32> to vector<1x8x128xf32>
    tpu.vector_store %arg9[%c0_39, %c0_40, %c0_41], %96 {strides = array<i32>} : memref<1x8x128xf32, #tpu.memory_space<vmem>>, vector<1x8x128xf32>,
    return
  }
  func.func @transform_0(%arg0: i32) -> (i32, i32, i32) {
    %c0_i32 = arith.constant 0 : i32
    %c0_i32_0 = arith.constant 0 : i32
    %c0_i32_1 = arith.constant 0 : i32
    return %arg0, %c0_i32, %c0_i32_0 : i32, i32, i32
  }
  func.func @transform_1(%arg0: i32) -> (i32, i32, i32) {
    %c0_i32 = arith.constant 0 : i32
    %c0_i32_0 = arith.constant 0 : i32
    %c0_i32_1 = arith.constant 0 : i32
    return %arg0, %c0_i32, %c0_i32_0 : i32, i32, i32
  }
  func.func @transform_2(%arg0: i32) -> (i32, i32) {
    %c0_i32 = arith.constant 0 : i32
    %c0_i32_0 = arith.constant 0 : i32
    %c0_i32_1 = arith.constant 0 : i32
    return %c0_i32, %c0_i32_0 : i32, i32
  }
  func.func @transform_3(%arg0: i32) -> (i32, i32) {
    %c0_i32 = arith.constant 0 : i32
    %c0_i32_0 = arith.constant 0 : i32
    %c0_i32_1 = arith.constant 0 : i32
    return %c0_i32, %c0_i32_0 : i32, i32
  }
  func.func @transform_4(%arg0: i32) -> (i32, i32) {
    %c0_i32 = arith.constant 0 : i32
    %c0_i32_0 = arith.constant 0 : i32
    %c0_i32_1 = arith.constant 0 : i32
    return %c0_i32, %c0_i32_0 : i32, i32
  }
  func.func @transform_5(%arg0: i32) -> (i32, i32) {
    %c0_i32 = arith.constant 0 : i32
    %c0_i32_0 = arith.constant 0 : i32
    %c0_i32_1 = arith.constant 0 : i32
    return %c0_i32, %c0_i32_0 : i32, i32
  }
  func.func @transform_6(%arg0: i32) -> (i32, i32) {
    %c0_i32 = arith.constant 0 : i32
    %c0_i32_0 = arith.constant 0 : i32
    %c0_i32_1 = arith.constant 0 : i32
    return %c0_i32, %c0_i32_0 : i32, i32
  }
  func.func @transform_7(%arg0: i32) -> (i32, i32) {
    %c0_i32 = arith.constant 0 : i32
    %c0_i32_0 = arith.constant 0 : i32
    %c0_i32_1 = arith.constant 0 : i32
    return %c0_i32, %c0_i32_0 : i32, i32
  }
  func.func @transform_8(%arg0: i32) -> (i32, i32, i32) {
    %c0_i32 = arith.constant 0 : i32
    %c0_i32_0 = arith.constant 0 : i32
    %c0_i32_1 = arith.constant 0 : i32
    return %arg0, %c0_i32, %c0_i32_0 : i32, i32, i32
  }
}

</mosaic_0001>

<llo_original>
// kernel: desa_forward.9
$region0: #{desa_forward.9}
  #allocation0 [shape = 'u32[]', space=smem, size = 0x4, offset = 0x4, fixed_abs, tag = 'smem constant byte address 0x4 - core index']
  #allocation1 [shape = 'u32[72,128]{1,0:T(1,128)}', space=vmem, size = 0x9000, scoped, tag = 'internal scratch']
  %s0 = inlined_call_operand.hbm [shape: f32[16,48], index: 0, kind: input, shape index: {}]
  %s1 = inlined_call_operand.hbm [shape: f32[48,128], index: 1, kind: input, shape index: {}]
  %s2 = inlined_call_operand.vmem [shape: f32[1,128], index: 2, kind: input, shape index: {}]
  %s3 = inlined_call_operand.vmem [shape: f32[16,128], index: 3, kind: output, shape index: {}]
  %s4 = sld [smem:[#allocation0]]
  $region30: #{desa_forward.9} parent=0
    _
  %s6 = ssub.s32 1, %s4
  %s7 = scalar_select 0, %s6, %s4
  $region1: #{desa_forward.9} parent=0
    #allocation2 [shape = 'u8[8192]{0}', space=vmem, size = 0x2000, scoped, tag = 'input window, operand 0, single buffered']
    #allocation3 [shape = 's32[1]{0}', space=sflag, size = 0x4, scoped, tag = 'scoped memory for desa_forward.9']
    #allocation4 [shape = 'u8[24576]{0}', space=vmem, size = 0x6000, scoped, tag = 'input window, operand 1, single buffered']
    #allocation5 [shape = 's32[1]{0}', space=sflag, size = 0x4, scoped, tag = 'scoped memory for desa_forward.9']
    %8 = vsyncpa [#allocation3], 0
    %9 = vsyncpa [#allocation5], 0
    // Predicated region
    $region2: #{desa_forward.9} parent=1 // pred_check
      _
    $region3: #{desa_forward.9} parent=1 // pred_check_branch
      %11 = sbr.rel (0) target = $region5
    $region4: #{desa_forward.9} parent=1 // pred_region
      %13 = vsyncadd [#allocation3], 0
      %s14 = sshll.u32 %s0, 4
      %s15 = int_to_ptr.hbm [resolvable:$true] %s14
      %s16 = sshll.u32 [#allocation2], 4
      %s17 = int_to_ptr.vmem [resolvable:$true] %s16
      %22 = dma.hbm_to_vmem [thread:$0]  %s15, 256, %s17, [#allocation3], 128, 128, 8
    $region5: #{desa_forward.9} parent=1 // pred_fallthru
      _
    // Predicated region
    $region6: #{desa_forward.9} parent=1 // pred_check
      _
    $region7: #{desa_forward.9} parent=1 // pred_check_branch
      %24 = sbr.rel (0) target = $region9
    $region8: #{desa_forward.9} parent=1 // pred_region
      %26 = vsyncadd [#allocation5], 0
      %s27 = sshll.u32 %s1, 4
      %s28 = int_to_ptr.hbm [resolvable:$true] %s27
      %s29 = sshll.u32 [#allocation4], 4
      %s30 = int_to_ptr.vmem [resolvable:$true] %s29
      %35 = dma.hbm_to_vmem [thread:$0]  %s28, 768, %s30, [#allocation5], 128, 128, 8
    $region9: #{desa_forward.9} parent=1 // pred_fallthru
      _
    // Predicated region
    $region10: #{desa_forward.9} parent=1 // pred_check
      _
    $region11: #{desa_forward.9} parent=1 // pred_check_branch
      %37 = sbr.rel (0) target = $region13
    $region12: #{desa_forward.9} parent=1 // pred_region
      _
    $region13: #{desa_forward.9} parent=1 // pred_fallthru
      _
    // Predicated region
    $region14: #{desa_forward.9} parent=1 // pred_check
      _
    $region15: #{desa_forward.9} parent=1 // pred_check_branch
      %39 = sbr.rel (0) target = $region17
    $region16: #{desa_forward.9} parent=1 // pred_region
      %41 = dma.done [#allocation3], 256
    $region17: #{desa_forward.9} parent=1 // pred_fallthru
      _
    // Predicated region
    $region18: #{desa_forward.9} parent=1 // pred_check
      _
    $region19: #{desa_forward.9} parent=1 // pred_check_branch
      %43 = sbr.rel (0) target = $region21
    $region20: #{desa_forward.9} parent=1 // pred_region
      %45 = dma.done [#allocation5], 768
    $region21: #{desa_forward.9} parent=1 // pred_fallthru
      _
    %v46 = vld [vmem:[#allocation2] sm:$0xff]
    %v47 = vld [vmem:[#allocation2 + $0x8] sm:$0xff]
    %v48 = vld [vmem:[#allocation4] sm:$0xff]
    %v49 = vld [vmem:[#allocation4 + $0x8] sm:$0xff]
    %v50 = vld [vmem:[#allocation4 + $0x10] sm:$0xff]
    %v51 = vld [vmem:[#allocation4 + $0x18] sm:$0xff]
    %v52 = vld [vmem:[#allocation4 + $0x20] sm:$0xff]
    %v53 = vld [vmem:[#allocation4 + $0x28] sm:$0xff]
    %v54 = vld [vmem:[%s2] sm:$0x1]
    %v56 = vperm.slane %v54, 0
    %vm58 = vcmask 392192
    %v60 = vsel %vm58, %v46, 0
    %v63 = vsel %vm58, %v47, 0
    %65 = vmatpush.msra.mxu0 0.0
    %66 = vmatpush.msra.mxu0 0.0
    %67 = vmatpush.msra.mxu0 0.0
    %68 = vmatpush.msra.mxu0 0.0
    %69 = vmatpush.msra.mxu0 0.0
    %70 = vmatpush.msra.mxu0 0.0
    %71 = vmatpush.msra.mxu0 0.0
    %72 = vmatpush.msra.mxu0 0.0
    %73 = vmatpush.msra.mxu0 0.0
    %74 = vmatpush.msra.mxu0 0.0
    %75 = vmatpush.msra.mxu0 %v53
    %76 = vmatpush.msra.mxu0 %v52
    %77 = vmatpush.msra.mxu0 %v51
    %78 = vmatpush.msra.mxu0 %v50
    %79 = vmatpush.msra.mxu0 %v49
    %80 = vmatpush.msra.mxu0 %v48
    %81 = vmatmul.f32.gmra.mxu0 %v60
    %v82 = vpop.f32.mrf.mxu0
    %v83 = vadd.f32 %v56, %v82
    %84 = vmatmul.f32.gmra.mxu0 %v63
    %v85 = vpop.f32.mrf.mxu0
    %v86 = vadd.f32 %v56, %v85
    %87 = vdwg.mxu0
    %88 = vst [vmem:[%s3] sm:$0xff] %v83
    %89 = vst [vmem:[%s3 + $0x8] sm:$0xff] %v86
    // Predicated region
    $region22: #{desa_forward.9} parent=1 // pred_check
      _
    $region23: #{desa_forward.9} parent=1 // pred_check_branch
      %91 = sbr.rel (0) target = $region25
    $region24: #{desa_forward.9} parent=1 // pred_region
      _
    $region25: #{desa_forward.9} parent=1 // pred_fallthru
      _
    // Predicated region
    $region26: #{desa_forward.9} parent=1 // pred_check
      _
    $region27: #{desa_forward.9} parent=1 // pred_check_branch
      %93 = sbr.rel (0) target = $region29
    $region28: #{desa_forward.9} parent=1 // pred_region
      _
    $region29: #{desa_forward.9} parent=1 // pred_fallthru
      _
    %94 = vsyncpa [#allocation3], 1
    %95 = vsyncpa [#allocation5], 1

// kernel: desa_forward.6
$region0: #{desa_forward.6}
  #allocation0 [shape = 'u32[]', space=smem, size = 0x4, offset = 0x4, fixed_abs, tag = 'smem constant byte address 0x4 - core index']
  #allocation1 [shape = 'u32[72,128]{1,0:T(1,128)}', space=vmem, size = 0x9000, scoped, tag = 'internal scratch']
  %s0 = inlined_call_operand.vmem [shape: f32[16,32], index: 0, kind: input, shape index: {}]
  %s1 = inlined_call_operand.vmem [shape: f32[32,128], index: 1, kind: input, shape index: {}]
  %s2 = inlined_call_operand.vmem [shape: f32[1,128], index: 2, kind: input, shape index: {}]
  %s3 = inlined_call_operand.vmem [shape: f32[16,128], index: 3, kind: output, shape index: {}]
  %s4 = sld [smem:[#allocation0]]
  $region22: #{desa_forward.6} parent=0
    _
  %s6 = ssub.s32 1, %s4
  %s7 = scalar_select 0, %s6, %s4
  // Predicated region
  $region2: #{desa_forward.6} parent=0 // pred_check
    _
  $region3: #{desa_forward.6} parent=0 // pred_check_branch
    %9 = sbr.rel (0) target = $region5
  $region4: #{desa_forward.6} parent=0 // pred_region
    _
  $region5: #{desa_forward.6} parent=0 // pred_fallthru
    _
  // Predicated region
  $region6: #{desa_forward.6} parent=0 // pred_check
    _
  $region7: #{desa_forward.6} parent=0 // pred_check_branch
    %11 = sbr.rel (0) target = $region9
  $region8: #{desa_forward.6} parent=0 // pred_region
    _
  $region9: #{desa_forward.6} parent=0 // pred_fallthru
    _
  // Predicated region
  $region10: #{desa_forward.6} parent=0 // pred_check
    _
  $region11: #{desa_forward.6} parent=0 // pred_check_branch
    %13 = sbr.rel (0) target = $region13
  $region12: #{desa_forward.6} parent=0 // pred_region
    _
  $region13: #{desa_forward.6} parent=0 // pred_fallthru
    _
  %v14 = vld [vmem:[%s0] sm:$0xff]
  %v15 = vld [vmem:[%s0 + $0x8] sm:$0xff]
  %v16 = vld [vmem:[%s1] sm:$0xff]
  %v17 = vld [vmem:[%s1 + $0x8] sm:$0xff]
  %v18 = vld [vmem:[%s1 + $0x10] sm:$0xff]
  %v19 = vld [vmem:[%s1 + $0x18] sm:$0xff]
  %v20 = vld [vmem:[%s2] sm:$0x1]
  %v22 = vperm.slane %v20, 0
  %vm24 = vcmask 261120
  %v26 = vsel %vm24, %v14, 0
  %v29 = vsel %vm24, %v15, 0
  %31 = vmatpush.msra.mxu0 0.0
  %32 = vmatpush.msra.mxu0 0.0
  %33 = vmatpush.msra.mxu0 0.0
  %34 = vmatpush.msra.mxu0 0.0
  %35 = vmatpush.msra.mxu0 0.0
  %36 = vmatpush.msra.mxu0 0.0
  %37 = vmatpush.msra.mxu0 0.0
  %38 = vmatpush.msra.mxu0 0.0
  %39 = vmatpush.msra.mxu0 0.0
  %40 = vmatpush.msra.mxu0 0.0
  %41 = vmatpush.msra.mxu0 0.0
  %42 = vmatpush.msra.mxu0 0.0
  %43 = vmatpush.msra.mxu0 %v19
  %44 = vmatpush.msra.mxu0 %v18
  %45 = vmatpush.msra.mxu0 %v17
  %46 = vmatpush.msra.mxu0 %v16
  %47 = vmatmul.f32.gmra.mxu0 %v26
  %v48 = vpop.f32.mrf.mxu0
  %v49 = vadd.f32 %v22, %v48
  %50 = vmatmul.f32.gmra.mxu0 %v29
  %v51 = vpop.f32.mrf.mxu0
  %v52 = vadd.f32 %v22, %v51
  %53 = vdwg.mxu0
  %54 = vst [vmem:[%s3] sm:$0xff] %v49
  %55 = vst [vmem:[%s3 + $0x8] sm:$0xff] %v52
  // Predicated region
  $region14: #{desa_forward.6} parent=0 // pred_check
    _
  $region15: #{desa_forward.6} parent=0 // pred_check_branch
    %57 = sbr.rel (0) target = $region17
  $region16: #{desa_forward.6} parent=0 // pred_region
    _
  $region17: #{desa_forward.6} parent=0 // pred_fallthru
    _
  // Predicated region
  $region18: #{desa_forward.6} parent=0 // pred_check
    _
  $region19: #{desa_forward.6} parent=0 // pred_check_branch
    %59 = sbr.rel (0) target = $region21
  $region20: #{desa_forward.6} parent=0 // pred_region
    _
  $region21: #{desa_forward.6} parent=0 // pred_fallthru
    _

// kernel: desa_forward.11
$region0: #{desa_forward.11}
  #allocation0 [shape = 'u32[]', space=smem, size = 0x4, offset = 0x4, fixed_abs, tag = 'smem constant byte address 0x4 - core index']
  #allocation1 [shape = 'u32[72,128]{1,0:T(1,128)}', space=vmem, size = 0x9000, scoped, tag = 'internal scratch']
  %s0 = inlined_call_operand.vmem [shape: f32[2,8,128], index: 0, kind: input, shape index: {}]
  %s1 = inlined_call_operand.vmem [shape: f32[2,8,128], index: 1, kind: input, shape index: {}]
  %s2 = inlined_call_operand.hbm [shape: f32[128,128], index: 2, kind: input, shape index: {}]
  %s3 = inlined_call_operand.vmem [shape: f32[1,128], index: 3, kind: input, shape index: {}]
  %s4 = inlined_call_operand.hbm [shape: f32[128,256], index: 4, kind: input, shape index: {}]
  %s5 = inlined_call_operand.vmem [shape: f32[1,256], index: 5, kind: input, shape index: {}]
  %s6 = inlined_call_operand.hbm [shape: f32[128,128], index: 6, kind: input, shape index: {}]
  %s7 = inlined_call_operand.hbm [shape: f32[1,128], index: 7, kind: input, shape index: {}]
  %s8 = inlined_call_operand.vmem [shape: f32[2,8,128], index: 8, kind: output, shape index: {}]
  %s9 = sld [smem:[#allocation0]]
  $region81: #{desa_forward.11} parent=0
    _
  %s11 = ssub.s32 1, %s9
  %s12 = scalar_select 0, %s11, %s9
  $region1: #{desa_forward.11} parent=0
    #allocation2 [shape = 'u8[65536]{0}', space=vmem, size = 0x10000, scoped, tag = 'input window, operand 2, single buffered']
    #allocation3 [shape = 's32[2]{0}', space=sflag, size = 0x8, scoped, tag = 'scoped memory for desa_forward.11']
    #allocation4 [shape = 'u8[131072]{0}', space=vmem, size = 0x20000, scoped, tag = 'input window, operand 4, single buffered']
    #allocation5 [shape = 's32[1]{0}', space=sflag, size = 0x4, scoped, tag = 'scoped memory for desa_forward.11']
    #allocation6 [shape = 'u8[65536]{0}', space=vmem, size = 0x10000, scoped, tag = 'input window, operand 6, single buffered']
    #allocation7 [shape = 'u8[512]{0}', space=vmem, size = 0x400, scoped, tag = 'input window, operand 7, single buffered']
    #allocation8 [shape = 's32[1]{0}', space=sflag, size = 0x4, scoped, tag = 'scoped memory for desa_forward.11']
    %13 = vsyncpa [#allocation3], 0
    %14 = vsyncpa [#allocation5], 0
    %15 = vsyncpa [#allocation8], 0
    loop: start=0, step=1, limit=4
    $region2: #{desa_forward.11} parent=1 // loop_pre_header
      _
    $region3: #{desa_forward.11} parent=1 // loop_header
      %s17 = sphi 0, %s21
      %p18 = scmp.ge.s32.totalorder %s17, 4
      %s27 = sphi 0, %s29
      %s30 = sphi 0, %s27
      %s31 = sphi 0, %s30
      %s47 = sphi 0, %s31
      %s53 = sphi 0, %s55
      %s56 = sphi 0, %s53
      %s57 = sphi 0, %s56
      %s73 = sphi 0, %s57
      %s77 = sphi 0, %s77
      %s79 = sphi 0, %s77
      %s80 = sphi 0, %s79
      %s94 = sphi 0, %s80
      %s98 = sphi 0, %s98
      %s100 = sphi 0, %s98
      %s101 = sphi 0, %s100
      %s115 = sphi 0, %s101
      %s119 = sphi 0, %s119
      %s121 = sphi 0, %s119
      %s122 = sphi 0, %s121
      %s136 = sphi 0, %s122
      %s140 = sphi 0, %s140
      %s142 = sphi 0, %s140
      %s143 = sphi 0, %s142
      %s157 = sphi 0, %s143
      %s161 = sphi 0, %s161
      %s163 = sphi 0, %s161
      %s164 = sphi 0, %s163
      %s178 = sphi 0, %s164
      %s182 = sphi 0, %s182
      %s184 = sphi 0, %s182
      %s185 = sphi 0, %s184
      %s199 = sphi 0, %s185
      %s205 = sphi 0, %s207
      %s208 = sphi 0, %s205
      %s209 = sphi 0, %s208
      %s225 = sphi 0, %s209
    $region4: #{desa_forward.11} parent=1 // loop_header_branch
      %20 = sbr.rel (%p18) target = $region8
    $region5: #{desa_forward.11} parent=1 // loop_body
      %s22 = ssub.s32 %s17, 1
      %s23 = ssub.s32 %s17, 2
      %s24 = sadd.s32 %s17, 1
      %s25 = ssub.s32 %s17, %s24
      %p26 = scmp.eq.s32.totalorder %s25, 0
      %s28 = sadd.s32 %s27, 1
      %s29 = scalar_select %p26, %s27, %s28
      %p32 = pneg %p26
      %p33 = scmp.eq.s32.totalorder %s17, 1
      %p34 = por %p32, %p33
      %p35 = scmp.ne.s32.totalorder %s27, %s30
      %p36 = scmp.eq.s32.totalorder %s17, 0
      %p37 = por %p35, %p36
      %p38 = scmp.ne.s32.totalorder %s27, %s30
      %p39 = scmp.eq.s32.totalorder %s22, 1
      %p40 = por %p38, %p39
      %p41 = scmp.ne.s32.totalorder %s30, %s31
      %p42 = scmp.eq.s32.totalorder %s22, 0
      %p43 = por %p41, %p42
      %p44 = scmp.ne.s32.totalorder %s30, %s31
      %p45 = scmp.eq.s32.totalorder %s23, 1
      %p46 = por %p44, %p45
      %p48 = scmp.ne.s32.totalorder %s31, %s47
      %p49 = scmp.eq.s32.totalorder %s23, 0
      %p50 = por %p48, %p49
      %s51 = ssub.s32 %s17, %s24
      %p52 = scmp.eq.s32.totalorder %s51, 0
      %s54 = sadd.s32 %s53, 1
      %s55 = scalar_select %p52, %s53, %s54
      %p58 = pneg %p52
      %p59 = scmp.eq.s32.totalorder %s17, 1
      %p60 = por %p58, %p59
      %p61 = scmp.ne.s32.totalorder %s53, %s56
      %p62 = scmp.eq.s32.totalorder %s17, 0
      %p63 = por %p61, %p62
      %p64 = scmp.ne.s32.totalorder %s53, %s56
      %p65 = scmp.eq.s32.totalorder %s22, 1
      %p66 = por %p64, %p65
      %p67 = scmp.ne.s32.totalorder %s56, %s57
      %p68 = scmp.eq.s32.totalorder %s22, 0
      %p69 = por %p67, %p68
      %p70 = scmp.ne.s32.totalorder %s56, %s57
      %p71 = scmp.eq.s32.totalorder %s23, 1
      %p72 = por %p70, %p71
      %p74 = scmp.ne.s32.totalorder %s57, %s73
      %p75 = scmp.eq.s32.totalorder %s23, 0
      %p76 = por %p74, %p75
      %s78 = sadd.s32 %s77, 1
      %p81 = scmp.eq.s32.totalorder %s17, 1
      %p82 = scmp.ne.s32.totalorder %s77, %s79
      %p83 = scmp.eq.s32.totalorder %s17, 0
      %p84 = por %p82, %p83
      %p85 = scmp.ne.s32.totalorder %s77, %s79
      %p86 = scmp.eq.s32.totalorder %s22, 1
      %p87 = por %p85, %p86
      %p88 = scmp.ne.s32.totalorder %s79, %s80
      %p89 = scmp.eq.s32.totalorder %s22, 0
      %p90 = por %p88, %p89
      %p91 = scmp.ne.s32.totalorder %s79, %s80
      %p92 = scmp.eq.s32.totalorder %s23, 1
      %p93 = por %p91, %p92
      %p95 = scmp.ne.s32.totalorder %s80, %s94
      %p96 = scmp.eq.s32.totalorder %s23, 0
      %p97 = por %p95, %p96
      %s99 = sadd.s32 %s98, 1
      %p102 = scmp.eq.s32.totalorder %s17, 1
      %p103 = scmp.ne.s32.totalorder %s98, %s100
      %p104 = scmp.eq.s32.totalorder %s17, 0
      %p105 = por %p103, %p104
      %p106 = scmp.ne.s32.totalorder %s98, %s100
      %p107 = scmp.eq.s32.totalorder %s22, 1
      %p108 = por %p106, %p107
      %p109 = scmp.ne.s32.totalorder %s100, %s101
      %p110 = scmp.eq.s32.totalorder %s22, 0
      %p111 = por %p109, %p110
      %p112 = scmp.ne.s32.totalorder %s100, %s101
      %p113 = scmp.eq.s32.totalorder %s23, 1
      %p114 = por %p112, %p113
      %p116 = scmp.ne.s32.totalorder %s101, %s115
      %p117 = scmp.eq.s32.totalorder %s23, 0
      %p118 = por %p116, %p117
      %s120 = sadd.s32 %s119, 1
      %p123 = scmp.eq.s32.totalorder %s17, 1
      %p124 = scmp.ne.s32.totalorder %s119, %s121
      %p125 = scmp.eq.s32.totalorder %s17, 0
      %p126 = por %p124, %p125
      %p127 = scmp.ne.s32.totalorder %s119, %s121
      %p128 = scmp.eq.s32.totalorder %s22, 1
      %p129 = por %p127, %p128
      %p130 = scmp.ne.s32.totalorder %s121, %s122
      %p131 = scmp.eq.s32.totalorder %s22, 0
      %p132 = por %p130, %p131
      %p133 = scmp.ne.s32.totalorder %s121, %s122
      %p134 = scmp.eq.s32.totalorder %s23, 1
      %p135 = por %p133, %p134
      %p137 = scmp.ne.s32.totalorder %s122, %s136
      %p138 = scmp.eq.s32.totalorder %s23, 0
      %p139 = por %p137, %p138
      %s141 = sadd.s32 %s140, 1
      %p144 = scmp.eq.s32.totalorder %s17, 1
      %p145 = scmp.ne.s32.totalorder %s140, %s142
      %p146 = scmp.eq.s32.totalorder %s17, 0
      %p147 = por %p145, %p146
      %p148 = scmp.ne.s32.totalorder %s140, %s142
      %p149 = scmp.eq.s32.totalorder %s22, 1
      %p150 = por %p148, %p149
      %p151 = scmp.ne.s32.totalorder %s142, %s143
      %p152 = scmp.eq.s32.totalorder %s22, 0
      %p153 = por %p151, %p152
      %p154 = scmp.ne.s32.totalorder %s142, %s143
      %p155 = scmp.eq.s32.totalorder %s23, 1
      %p156 = por %p154, %p155
      %p158 = scmp.ne.s32.totalorder %s143, %s157
      %p159 = scmp.eq.s32.totalorder %s23, 0
      %p160 = por %p158, %p159
      %s162 = sadd.s32 %s161, 1
      %p165 = scmp.eq.s32.totalorder %s17, 1
      %p166 = scmp.ne.s32.totalorder %s161, %s163
      %p167 = scmp.eq.s32.totalorder %s17, 0
      %p168 = por %p166, %p167
      %p169 = scmp.ne.s32.totalorder %s161, %s163
      %p170 = scmp.eq.s32.totalorder %s22, 1
      %p171 = por %p169, %p170
      %p172 = scmp.ne.s32.totalorder %s163, %s164
      %p173 = scmp.eq.s32.totalorder %s22, 0
      %p174 = por %p172, %p173
      %p175 = scmp.ne.s32.totalorder %s163, %s164
      %p176 = scmp.eq.s32.totalorder %s23, 1
      %p177 = por %p175, %p176
      %p179 = scmp.ne.s32.totalorder %s164, %s178
      %p180 = scmp.eq.s32.totalorder %s23, 0
      %p181 = por %p179, %p180
      %s183 = sadd.s32 %s182, 1
      %p186 = scmp.eq.s32.totalorder %s17, 1
      %p187 = scmp.ne.s32.totalorder %s182, %s184
      %p188 = scmp.eq.s32.totalorder %s17, 0
      %p189 = por %p187, %p188
      %p190 = scmp.ne.s32.totalorder %s182, %s184
      %p191 = scmp.eq.s32.totalorder %s22, 1
      %p192 = por %p190, %p191
      %p193 = scmp.ne.s32.totalorder %s184, %s185
      %p194 = scmp.eq.s32.totalorder %s22, 0
      %p195 = por %p193, %p194
      %p196 = scmp.ne.s32.totalorder %s184, %s185
      %p197 = scmp.eq.s32.totalorder %s23, 1
      %p198 = por %p196, %p197
      %p200 = scmp.ne.s32.totalorder %s185, %s199
      %p201 = scmp.eq.s32.totalorder %s23, 0
      %p202 = por %p200, %p201
      %s203 = ssub.s32 %s17, %s24
      %p204 = scmp.eq.s32.totalorder %s203, 0
      %s206 = sadd.s32 %s205, 1
      %s207 = scalar_select %p204, %s205, %s206
      %p210 = pneg %p204
      %p211 = scmp.eq.s32.totalorder %s17, 1
      %p212 = por %p210, %p211
      %p213 = scmp.ne.s32.totalorder %s205, %s208
      %p214 = scmp.eq.s32.totalorder %s17, 0
      %p215 = por %p213, %p214
      %p216 = scmp.ne.s32.totalorder %s205, %s208
      %p217 = scmp.eq.s32.totalorder %s22, 1
      %p218 = por %p216, %p217
      %p219 = scmp.ne.s32.totalorder %s208, %s209
      %p220 = scmp.eq.s32.totalorder %s22, 0
      %p221 = por %p219, %p220
      %p222 = scmp.ne.s32.totalorder %s208, %s209
      %p223 = scmp.eq.s32.totalorder %s23, 1
      %p224 = por %p222, %p223
      %p226 = scmp.ne.s32.totalorder %s209, %s225
      %p227 = scmp.eq.s32.totalorder %s23, 0
      %p228 = por %p226, %p227
      %p229 = scmp.le.s32.totalorder 1, %s17
      %p230 = scmp.lt.s32.totalorder %s17, 3
      %p231 = pnand %p229, %p230
      %p232 = pneg %p231
      // Predicated region
      $region9: #{desa_forward.11} parent=5 // pred_check
        _
      $region10: #{desa_forward.11} parent=5 // pred_check_branch
        %234 = sbr.rel (%p231) target = $region12
      $region11: #{desa_forward.11} parent=5 // pred_region
        %s235 = ssub.s32 %s17, 1
        // Predicated region
        $region13: #{desa_forward.11} parent=11 // pred_check
          %p236 = pneg %p90
        $region14: #{desa_forward.11} parent=11 // pred_check_branch
          %238 = sbr.rel (%p236) target = $region16
        $region15: #{desa_forward.11} parent=11 // pred_region
          %240 = vsyncadd [#allocation3], 0
          %s241 = sshll.u32 %s2, 4
          %s242 = int_to_ptr.hbm [resolvable:$true] %s241
          %s243 = sshll.u32 [#allocation2], 4
          %s244 = int_to_ptr.vmem [resolvable:$true] %s243
          %249 = dma.hbm_to_vmem [thread:$0]  %s242, 2048, %s244, [#allocation3], 128, 128, 8
        $region16: #{desa_forward.11} parent=11 // pred_fallthru
          _
        // Predicated region
        $region17: #{desa_forward.11} parent=11 // pred_check
          %p250 = pneg %p111
        $region18: #{desa_forward.11} parent=11 // pred_check_branch
          %252 = sbr.rel (%p250) target = $region20
        $region19: #{desa_forward.11} parent=11 // pred_region
          _
        $region20: #{desa_forward.11} parent=11 // pred_fallthru
          _
        // Predicated region
        $region21: #{desa_forward.11} parent=11 // pred_check
          %p253 = pneg %p132
        $region22: #{desa_forward.11} parent=11 // pred_check_branch
          %255 = sbr.rel (%p253) target = $region24
        $region23: #{desa_forward.11} parent=11 // pred_region
          %257 = vsyncadd [#allocation5], 0
          %s258 = sshll.u32 %s4, 4
          %s259 = int_to_ptr.hbm [resolvable:$true] %s258
          %s260 = sshll.u32 [#allocation4], 4
          %s261 = int_to_ptr.vmem [resolvable:$true] %s260
          %266 = dma.hbm_to_vmem [thread:$0]  %s259, 4096, %s261, [#allocation5], 256, 256, 16
        $region24: #{desa_forward.11} parent=11 // pred_fallthru
          _
        // Predicated region
        $region25: #{desa_forward.11} parent=11 // pred_check
          %p267 = pneg %p153
        $region26: #{desa_forward.11} parent=11 // pred_check_branch
          %269 = sbr.rel (%p267) target = $region28
        $region27: #{desa_forward.11} parent=11 // pred_region
          _
        $region28: #{desa_forward.11} parent=11 // pred_fallthru
          _
        // Predicated region
        $region29: #{desa_forward.11} parent=11 // pred_check
          %p270 = pneg %p174
        $region30: #{desa_forward.11} parent=11 // pred_check_branch
          %272 = sbr.rel (%p270) target = $region32
        $region31: #{desa_forward.11} parent=11 // pred_region
          %274 = vsyncadd [#allocation5], 0
          %s275 = sshll.u32 %s6, 4
          %s276 = int_to_ptr.hbm [resolvable:$true] %s275
          %s277 = sshll.u32 [#allocation6], 4
          %s278 = int_to_ptr.vmem [resolvable:$true] %s277
          %283 = dma.hbm_to_vmem [thread:$0]  %s276, 2048, %s278, [#allocation5], 128, 128, 8
        $region32: #{desa_forward.11} parent=11 // pred_fallthru
          _
        // Predicated region
        $region33: #{desa_forward.11} parent=11 // pred_check
          %p284 = pneg %p195
        $region34: #{desa_forward.11} parent=11 // pred_check_branch
          %286 = sbr.rel (%p284) target = $region36
        $region35: #{desa_forward.11} parent=11 // pred_region
          %288 = vsyncadd [#allocation8], 0
          %s290 = sshll.u32 %s7, 4
          %s291 = int_to_ptr.hbm [resolvable:$true] %s290
          %s292 = sshll.u32 [#allocation7], 4
          %s293 = int_to_ptr.vmem [resolvable:$true] %s292
          %295 = dma.hbm_to_vmem [thread:$0]  %s291, 16, %s293, [#allocation8]
        $region36: #{desa_forward.11} parent=11 // pred_fallthru
          _
      $region12: #{desa_forward.11} parent=5 // pred_fallthru
        _
      %p296 = scmp.lt.s32.totalorder %s17, 2
      // Predicated region
      $region37: #{desa_forward.11} parent=5 // pred_check
        %p297 = pneg %p296
      $region38: #{desa_forward.11} parent=5 // pred_check_branch
        %299 = sbr.rel (%p297) target = $region40
      $region39: #{desa_forward.11} parent=5 // pred_region
        // Predicated region
        $region41: #{desa_forward.11} parent=39 // pred_check
          %p300 = pneg %p37
        $region42: #{desa_forward.11} parent=39 // pred_check_branch
          %302 = sbr.rel (%p300) target = $region44
        $region43: #{desa_forward.11} parent=39 // pred_region
          %p303 = scmp.lt.s32.totalorder %s17, 1
          %s304 = scalar_select %p303, %s17, 1
          %s305 = smul.addr %s304, 8
          %s306 = scalar_lea.vmem %s0, %s305
        $region44: #{desa_forward.11} parent=39 // pred_fallthru
          _
        // Predicated region
        $region45: #{desa_forward.11} parent=39 // pred_check
          %p307 = pneg %p63
        $region46: #{desa_forward.11} parent=39 // pred_check_branch
          %309 = sbr.rel (%p307) target = $region48
        $region47: #{desa_forward.11} parent=39 // pred_region
          %p310 = scmp.lt.s32.totalorder %s17, 1
          %s311 = scalar_select %p310, %s17, 1
          %s312 = smul.addr %s311, 8
          %s313 = scalar_lea.vmem %s1, %s312
        $region48: #{desa_forward.11} parent=39 // pred_fallthru
          _
      $region40: #{desa_forward.11} parent=5 // pred_fallthru
        _
      %p314 = scmp.le.s32.totalorder 1, %s17
      %p315 = scmp.lt.s32.totalorder %s17, 3
      %p316 = pnand %p314, %p315
      %p317 = pneg %p316
      // Predicated region
      $region49: #{desa_forward.11} parent=5 // pred_check
        _
      $region50: #{desa_forward.11} parent=5 // pred_check_branch
        %319 = sbr.rel (%p316) target = $region52
      $region51: #{desa_forward.11} parent=5 // pred_region
        %s320 = ssub.s32 %s17, 1
        // Predicated region
        $region53: #{desa_forward.11} parent=51 // pred_check
          %p321 = pneg %p90
        $region54: #{desa_forward.11} parent=51 // pred_check_branch
          %323 = sbr.rel (%p321) target = $region56
        $region55: #{desa_forward.11} parent=51 // pred_region
          %325 = dma.done [#allocation3], 2048
        $region56: #{desa_forward.11} parent=51 // pred_fallthru
          _
        // Predicated region
        $region57: #{desa_forward.11} parent=51 // pred_check
          %p326 = pneg %p132
        $region58: #{desa_forward.11} parent=51 // pred_check_branch
          %328 = sbr.rel (%p326) target = $region60
        $region59: #{desa_forward.11} parent=51 // pred_region
          %330 = dma.done [#allocation5], 4096
        $region60: #{desa_forward.11} parent=51 // pred_fallthru
          _
        // Predicated region
        $region61: #{desa_forward.11} parent=51 // pred_check
          %p331 = pneg %p174
        $region62: #{desa_forward.11} parent=51 // pred_check_branch
          %333 = sbr.rel (%p331) target = $region64
        $region63: #{desa_forward.11} parent=51 // pred_region
          %335 = dma.done [#allocation5], 2048
        $region64: #{desa_forward.11} parent=51 // pred_fallthru
          _
        // Predicated region
        $region65: #{desa_forward.11} parent=51 // pred_check
          %p336 = pneg %p195
        $region66: #{desa_forward.11} parent=51 // pred_check_branch
          %338 = sbr.rel (%p336) target = $region68
        $region67: #{desa_forward.11} parent=51 // pred_region
          %340 = dma.done [#allocation8], 16
        $region68: #{desa_forward.11} parent=51 // pred_fallthru
          _
        %p341 = scmp.lt.s32.totalorder %s22, 1
        %s342 = scalar_select %p341, %s22, 1
        %s343 = smul.addr %s342, 8
        %s344 = scalar_lea.vmem %s0, %s343
        %p345 = pneg %p43
        %p346 = pneg %p40
        %p347 = scmp.lt.s32.totalorder %s22, 1
        %s348 = scalar_select %p347, %s22, 1
        %s349 = smul.addr %s348, 8
        %s350 = scalar_lea.vmem %s1, %s349
        %p351 = pneg %p69
        %p352 = pneg %p66
        %p353 = pneg %p90
        %p354 = pneg %p87
        %p355 = pneg %p111
        %p356 = pneg %p108
        %p357 = pneg %p132
        %p358 = pneg %p129
        %p359 = pneg %p153
        %p360 = pneg %p150
        %p361 = pneg %p174
        %p362 = pneg %p171
        %p363 = pneg %p195
        %p364 = pneg %p192
        %p365 = pneg %p221
        %p366 = pneg %p218
        %p367 = scmp.lt.s32.totalorder %s22, 1
        %s368 = scalar_select %p367, %s22, 1
        %s369 = smul.addr %s368, 8
        %s370 = scalar_lea.vmem %s8, %s369
        %p371 = scmp.lt.s32.totalorder %s22, 1
        %s372 = scalar_select %p371, %s22, 1
        %s373 = smul.addr %s372, 8
        %s374 = scalar_lea.vmem %s0, %s373
        %p375 = scmp.lt.s32.totalorder %s22, 1
        %s376 = scalar_select %p375, %s22, 1
        %s377 = smul.addr %s376, 8
        %s378 = scalar_lea.vmem %s1, %s377
        %p379 = scmp.lt.s32.totalorder %s22, 1
        %s380 = scalar_select %p379, %s22, 1
        %s381 = smul.addr %s380, 8
        %s382 = scalar_lea.vmem %s8, %s381
        %v383 = vld [vmem:[%s374] sm:$0xff]
        %v384 = vld [vmem:[%s378] sm:$0xff]
        %v385 = vld [vmem:[#allocation2] sm:$0xff]
        %v386 = vld [vmem:[#allocation2 + $0x8] sm:$0xff]
        %v387 = vld [vmem:[#allocation2 + $0x10] sm:$0xff]
        %v388 = vld [vmem:[#allocation2 + $0x18] sm:$0xff]
        %v389 = vld [vmem:[#allocation2 + $0x20] sm:$0xff]
        %v390 = vld [vmem:[#allocation2 + $0x28] sm:$0xff]
        %v391 = vld [vmem:[#allocation2 + $0x30] sm:$0xff]
        %v392 = vld [vmem:[#allocation2 + $0x38] sm:$0xff]
        %v393 = vld [vmem:[#allocation2 + $0x40] sm:$0xff]
        %v394 = vld [vmem:[#allocation2 + $0x48] sm:$0xff]
        %v395 = vld [vmem:[#allocation2 + $0x50] sm:$0xff]
        %v396 = vld [vmem:[#allocation2 + $0x58] sm:$0xff]
        %v397 = vld [vmem:[#allocation2 + $0x60] sm:$0xff]
        %v398 = vld [vmem:[#allocation2 + $0x68] sm:$0xff]
        %v399 = vld [vmem:[#allocation2 + $0x70] sm:$0xff]
        %v400 = vld [vmem:[#allocation2 + $0x78] sm:$0xff]
        %v401 = vld [vmem:[%s3] sm:$0x1]
        %v403 = vperm.slane %v401, 0
        %405 = vmatpush.msra.mxu0 %v400
        %406 = vmatpush.msra.mxu0 %v399
        %407 = vmatpush.msra.mxu0 %v398
        %408 = vmatpush.msra.mxu0 %v397
        %409 = vmatpush.msra.mxu0 %v396
        %410 = vmatpush.msra.mxu0 %v395
        %411 = vmatpush.msra.mxu0 %v394
        %412 = vmatpush.msra.mxu0 %v393
        %413 = vmatpush.msra.mxu0 %v392
        %414 = vmatpush.msra.mxu0 %v391
        %415 = vmatpush.msra.mxu0 %v390
        %416 = vmatpush.msra.mxu0 %v389
        %417 = vmatpush.msra.mxu0 %v388
        %418 = vmatpush.msra.mxu0 %v387
        %419 = vmatpush.msra.mxu0 %v386
        %420 = vmatpush.msra.mxu0 %v385
        %421 = vmatmul.f32.gmra.mxu0 %v383
        %v422 = vpop.f32.mrf.mxu0
        %v423 = vadd.f32 %v403, %v422
        %424 = vdwg.mxu0
        %v425 = vld [vmem:[#allocation4] sm:$0xff]
        %v426 = vld [vmem:[#allocation4 + $0x8] sm:$0xff]
        %v427 = vld [vmem:[#allocation4 + $0x10] sm:$0xff]
        %v428 = vld [vmem:[#allocation4 + $0x18] sm:$0xff]
        %v429 = vld [vmem:[#allocation4 + $0x20] sm:$0xff]
        %v430 = vld [vmem:[#allocation4 + $0x28] sm:$0xff]
        %v431 = vld [vmem:[#allocation4 + $0x30] sm:$0xff]
        %v432 = vld [vmem:[#allocation4 + $0x38] sm:$0xff]
        %v433 = vld [vmem:[#allocation4 + $0x40] sm:$0xff]
        %v434 = vld [vmem:[#allocation4 + $0x48] sm:$0xff]
        %v435 = vld [vmem:[#allocation4 + $0x50] sm:$0xff]
        %v436 = vld [vmem:[#allocation4 + $0x58] sm:$0xff]
        %v437 = vld [vmem:[#allocation4 + $0x60] sm:$0xff]
        %v438 = vld [vmem:[#allocation4 + $0x68] sm:$0xff]
        %v439 = vld [vmem:[#allocation4 + $0x70] sm:$0xff]
        %v440 = vld [vmem:[#allocation4 + $0x78] sm:$0xff]
        %v441 = vld [vmem:[#allocation4 + $0x80] sm:$0xff]
        %v442 = vld [vmem:[#allocation4 + $0x88] sm:$0xff]
        %v443 = vld [vmem:[#allocation4 + $0x90] sm:$0xff]
        %v444 = vld [vmem:[#allocation4 + $0x98] sm:$0xff]
        %v445 = vld [vmem:[#allocation4 + $0xa0] sm:$0xff]
        %v446 = vld [vmem:[#allocation4 + $0xa8] sm:$0xff]
        %v447 = vld [vmem:[#allocation4 + $0xb0] sm:$0xff]
        %v448 = vld [vmem:[#allocation4 + $0xb8] sm:$0xff]
        %v449 = vld [vmem:[#allocation4 + $0xc0] sm:$0xff]
        %v450 = vld [vmem:[#allocation4 + $0xc8] sm:$0xff]
        %v451 = vld [vmem:[#allocation4 + $0xd0] sm:$0xff]
        %v452 = vld [vmem:[#allocation4 + $0xd8] sm:$0xff]
        %v453 = vld [vmem:[#allocation4 + $0xe0] sm:$0xff]
        %v454 = vld [vmem:[#allocation4 + $0xe8] sm:$0xff]
        %v455 = vld [vmem:[#allocation4 + $0xf0] sm:$0xff]
        %v456 = vld [vmem:[#allocation4 + $0xf8] sm:$0xff]
        %v457 = vld [vmem:[%s5] sm:$0x3]
        %v459 = vperm.slane %v457, 0
        %v460 = vperm.slane %v457, 1
        %463 = vmatpush.msra.mxu0 %v455
        %464 = vmatpush.msra.mxu0 %v453
        %465 = vmatpush.msra.mxu0 %v451
        %466 = vmatpush.msra.mxu0 %v449
        %467 = vmatpush.msra.mxu0 %v447
        %468 = vmatpush.msra.mxu0 %v445
        %469 = vmatpush.msra.mxu0 %v443
        %470 = vmatpush.msra.mxu0 %v441
        %471 = vmatpush.msra.mxu0 %v439
        %472 = vmatpush.msra.mxu0 %v437
        %473 = vmatpush.msra.mxu0 %v435
        %474 = vmatpush.msra.mxu0 %v433
        %475 = vmatpush.msra.mxu0 %v431
        %476 = vmatpush.msra.mxu0 %v429
        %477 = vmatpush.msra.mxu0 %v427
        %478 = vmatpush.msra.mxu0 %v425
        %479 = vmatmul.f32.gmra.mxu0 %v384
        %v480 = vpop.f32.mrf.mxu0
        %v481 = vadd.f32 %v459, %v480
        %482 = vdwg.mxu0
        %483 = vmatpush.msra.mxu0 %v456
        %484 = vmatpush.msra.mxu0 %v454
        %485 = vmatpush.msra.mxu0 %v452
        %486 = vmatpush.msra.mxu0 %v450
        %487 = vmatpush.msra.mxu0 %v448
        %488 = vmatpush.msra.mxu0 %v446
        %489 = vmatpush.msra.mxu0 %v444
        %490 = vmatpush.msra.mxu0 %v442
        %491 = vmatpush.msra.mxu0 %v440
        %492 = vmatpush.msra.mxu0 %v438
        %493 = vmatpush.msra.mxu0 %v436
        %494 = vmatpush.msra.mxu0 %v434
        %495 = vmatpush.msra.mxu0 %v432
        %496 = vmatpush.msra.mxu0 %v430
        %497 = vmatpush.msra.mxu0 %v428
        %498 = vmatpush.msra.mxu0 %v426
        %499 = vmatmul.f32.gmra.mxu0 %v384
        %v500 = vpop.f32.mrf.mxu0
        %v501 = vadd.f32 %v460, %v500
        %502 = vdwg.mxu0
        %vm503 = vcmask 261120
        %v505 = vsel %vm503, %v423, 0
        %v508 = vsel %vm503, %v481, 0
        %510 = vmatpush.xpose.msra.mxu0 0.0
        %511 = vmatpush.xpose.msra.mxu0 0.0
        %512 = vmatpush.xpose.msra.mxu0 0.0
        %513 = vmatpush.xpose.msra.mxu0 0.0
        %514 = vmatpush.xpose.msra.mxu0 0.0
        %515 = vmatpush.xpose.msra.mxu0 0.0
        %516 = vmatpush.xpose.msra.mxu0 0.0
        %517 = vmatpush.xpose.msra.mxu0 0.0
        %518 = vmatpush.xpose.msra.mxu0 0.0
        %519 = vmatpush.xpose.msra.mxu0 0.0
        %520 = vmatpush.xpose.msra.mxu0 0.0
        %521 = vmatpush.xpose.msra.mxu0 0.0
        %522 = vmatpush.xpose.msra.mxu0 0.0
        %523 = vmatpush.xpose.msra.mxu0 0.0
        %524 = vmatpush.xpose.msra.mxu0 0.0
        %525 = vmatpush.xpose.msra.mxu0 %v508
        %526 = vmatmul.f32.gmra.mxu0 %v505
        %v527 = vpop.f32.mrf.mxu0
        %v528 = vadd.f32 0.0, %v527
        %529 = vdwg.mxu0
        %v530 = vmul.f32 %v528, 0.17677669
        %vm531 = vcmask 64512
        %v532 = vsel %vm531, %v530, -inf
        %533 = vmax.xlane.f32.xlu0 %v532
        %v534 = vpop.xlane.xlu0 %533
        %v535 = vsub.f32 %v530, %v534
        %v536 = vmul.f32 %v535, 1.442695
        %v537 = vpow.pop %v536
        %v538 = vsel %vm531, %v537, 0.0
        %539 = vadd.xlane.f32.xlu0 %v538
        %v540 = vpop.xlane.xlu0 %539
        %v541 = vrcp.pop %v540
        %v542 = vmul.f32 %v537, %v541
        %v544 = vsel %vm531, %v542, 0
        %546 = vmatpush.msra.mxu0 0.0
        %547 = vmatpush.msra.mxu0 0.0
        %548 = vmatpush.msra.mxu0 0.0
        %549 = vmatpush.msra.mxu0 0.0
        %550 = vmatpush.msra.mxu0 0.0
        %551 = vmatpush.msra.mxu0 0.0
        %552 = vmatpush.msra.mxu0 0.0
        %553 = vmatpush.msra.mxu0 0.0
        %554 = vmatpush.msra.mxu0 0.0
        %555 = vmatpush.msra.mxu0 0.0
        %556 = vmatpush.msra.mxu0 0.0
        %557 = vmatpush.msra.mxu0 0.0
        %558 = vmatpush.msra.mxu0 0.0
        %559 = vmatpush.msra.mxu0 0.0
        %560 = vmatpush.msra.mxu0 0.0
        %561 = vmatpush.msra.mxu0 %v501
        %562 = vmatmul.f32.gmra.mxu0 %v544
        %v563 = vpop.f32.mrf.mxu0
        %v564 = vadd.f32 0.0, %v563
        %565 = vdwg.mxu0
        %566 = vrot.lane.b32.xlu0 %v423, 96
        %v567 = vpop.permute.xlu0 %566
        %568 = vrot.lane.b32.xlu0 %v481, 96
        %v569 = vpop.permute.xlu0 %568
        %v570 = vsel %vm503, %v567, 0
        %v572 = vsel %vm503, %v569, 0
        %574 = vmatpush.xpose.msra.mxu0 0.0
        %575 = vmatpush.xpose.msra.mxu0 0.0
        %576 = vmatpush.xpose.msra.mxu0 0.0
        %577 = vmatpush.xpose.msra.mxu0 0.0
        %578 = vmatpush.xpose.msra.mxu0 0.0
        %579 = vmatpush.xpose.msra.mxu0 0.0
        %580 = vmatpush.xpose.msra.mxu0 0.0
        %581 = vmatpush.xpose.msra.mxu0 0.0
        %582 = vmatpush.xpose.msra.mxu0 0.0
        %583 = vmatpush.xpose.msra.mxu0 0.0
        %584 = vmatpush.xpose.msra.mxu0 0.0
        %585 = vmatpush.xpose.msra.mxu0 0.0
        %586 = vmatpush.xpose.msra.mxu0 0.0
        %587 = vmatpush.xpose.msra.mxu0 0.0
        %588 = vmatpush.xpose.msra.mxu0 0.0
        %589 = vmatpush.xpose.msra.mxu0 %v572
        %590 = vmatmul.f32.gmra.mxu0 %v570
        %v591 = vpop.f32.mrf.mxu0
        %v592 = vadd.f32 0.0, %v591
        %593 = vdwg.mxu0
        %v594 = vmul.f32 %v592, 0.17677669
        %v595 = vsel %vm531, %v594, -inf
        %596 = vmax.xlane.f32.xlu0 %v595
        %v597 = vpop.xlane.xlu0 %596
        %v598 = vsub.f32 %v594, %v597
        %v599 = vmul.f32 %v598, 1.442695
        %v600 = vpow.pop %v599
        %v601 = vsel %vm531, %v600, 0.0
        %602 = vadd.xlane.f32.xlu0 %v601
        %v603 = vpop.xlane.xlu0 %602
        %v604 = vrcp.pop %v603
        %v605 = vmul.f32 %v600, %v604
        %607 = vrot.lane.b32.xlu0 %v501, 96
        %v608 = vpop.permute.xlu0 %607
        %v611 = vsel %vm531, %v605, 0
        %613 = vmatpush.msra.mxu0 0.0
        %614 = vmatpush.msra.mxu0 0.0
        %615 = vmatpush.msra.mxu0 0.0
        %616 = vmatpush.msra.mxu0 0.0
        %617 = vmatpush.msra.mxu0 0.0
        %618 = vmatpush.msra.mxu0 0.0
        %619 = vmatpush.msra.mxu0 0.0
        %620 = vmatpush.msra.mxu0 0.0
        %621 = vmatpush.msra.mxu0 0.0
        %622 = vmatpush.msra.mxu0 0.0
        %623 = vmatpush.msra.mxu0 0.0
        %624 = vmatpush.msra.mxu0 0.0
        %625 = vmatpush.msra.mxu0 0.0
        %626 = vmatpush.msra.mxu0 0.0
        %627 = vmatpush.msra.mxu0 0.0
        %628 = vmatpush.msra.mxu0 %v608
        %629 = vmatmul.f32.gmra.mxu0 %v611
        %v630 = vpop.f32.mrf.mxu0
        %v631 = vadd.f32 0.0, %v630
        %632 = vdwg.mxu0
        %633 = vrot.lane.b32.xlu0 %v423, 64
        %v634 = vpop.permute.xlu0 %633
        %635 = vrot.lane.b32.xlu0 %v481, 64
        %v636 = vpop.permute.xlu0 %635
        %v637 = vsel %vm503, %v634, 0
        %v639 = vsel %vm503, %v636, 0
        %641 = vmatpush.xpose.msra.mxu0 0.0
        %642 = vmatpush.xpose.msra.mxu0 0.0
        %643 = vmatpush.xpose.msra.mxu0 0.0
        %644 = vmatpush.xpose.msra.mxu0 0.0
        %645 = vmatpush.xpose.msra.mxu0 0.0
        %646 = vmatpush.xpose.msra.mxu0 0.0
        %647 = vmatpush.xpose.msra.mxu0 0.0
        %648 = vmatpush.xpose.msra.mxu0 0.0
        %649 = vmatpush.xpose.msra.mxu0 0.0
        %650 = vmatpush.xpose.msra.mxu0 0.0
        %651 = vmatpush.xpose.msra.mxu0 0.0
        %652 = vmatpush.xpose.msra.mxu0 0.0
        %653 = vmatpush.xpose.msra.mxu0 0.0
        %654 = vmatpush.xpose.msra.mxu0 0.0
        %655 = vmatpush.xpose.msra.mxu0 0.0
        %656 = vmatpush.xpose.msra.mxu0 %v639
        %657 = vmatmul.f32.gmra.mxu0 %v637
        %v658 = vpop.f32.mrf.mxu0
        %v659 = vadd.f32 0.0, %v658
        %660 = vdwg.mxu0
        %v661 = vmul.f32 %v659, 0.17677669
        %v662 = vsel %vm531, %v661, -inf
        %663 = vmax.xlane.f32.xlu0 %v662
        %v664 = vpop.xlane.xlu0 %663
        %v665 = vsub.f32 %v661, %v664
        %v666 = vmul.f32 %v665, 1.442695
        %v667 = vpow.pop %v666
        %v668 = vsel %vm531, %v667, 0.0
        %669 = vadd.xlane.f32.xlu0 %v668
        %v670 = vpop.xlane.xlu0 %669
        %v671 = vrcp.pop %v670
        %v672 = vmul.f32 %v667, %v671
        %673 = vrot.lane.b32.xlu0 %v501, 64
        %v674 = vpop.permute.xlu0 %673
        %v677 = vsel %vm531, %v672, 0
        %679 = vmatpush.msra.mxu0 0.0
        %680 = vmatpush.msra.mxu0 0.0
        %681 = vmatpush.msra.mxu0 0.0
        %682 = vmatpush.msra.mxu0 0.0
        %683 = vmatpush.msra.mxu0 0.0
        %684 = vmatpush.msra.mxu0 0.0
        %685 = vmatpush.msra.mxu0 0.0
        %686 = vmatpush.msra.mxu0 0.0
        %687 = vmatpush.msra.mxu0 0.0
        %688 = vmatpush.msra.mxu0 0.0
        %689 = vmatpush.msra.mxu0 0.0
        %690 = vmatpush.msra.mxu0 0.0
        %691 = vmatpush.msra.mxu0 0.0
        %692 = vmatpush.msra.mxu0 0.0
        %693 = vmatpush.msra.mxu0 0.0
        %694 = vmatpush.msra.mxu0 %v674
        %695 = vmatmul.f32.gmra.mxu0 %v677
        %v696 = vpop.f32.mrf.mxu0
        %v697 = vadd.f32 0.0, %v696
        %698 = vdwg.mxu0
        %699 = vrot.lane.b32.xlu0 %v423, 32
        %v700 = vpop.permute.xlu0 %699
        %701 = vrot.lane.b32.xlu0 %v481, 32
        %v702 = vpop.permute.xlu0 %701
        %v703 = vsel %vm503, %v700, 0
        %v705 = vsel %vm503, %v702, 0
        %707 = vmatpush.xpose.msra.mxu0 0.0
        %708 = vmatpush.xpose.msra.mxu0 0.0
        %709 = vmatpush.xpose.msra.mxu0 0.0
        %710 = vmatpush.xpose.msra.mxu0 0.0
        %711 = vmatpush.xpose.msra.mxu0 0.0
        %712 = vmatpush.xpose.msra.mxu0 0.0
        %713 = vmatpush.xpose.msra.mxu0 0.0
        %714 = vmatpush.xpose.msra.mxu0 0.0
        %715 = vmatpush.xpose.msra.mxu0 0.0
        %716 = vmatpush.xpose.msra.mxu0 0.0
        %717 = vmatpush.xpose.msra.mxu0 0.0
        %718 = vmatpush.xpose.msra.mxu0 0.0
        %719 = vmatpush.xpose.msra.mxu0 0.0
        %720 = vmatpush.xpose.msra.mxu0 0.0
        %721 = vmatpush.xpose.msra.mxu0 0.0
        %722 = vmatpush.xpose.msra.mxu0 %v705
        %723 = vmatmul.f32.gmra.mxu0 %v703
        %v724 = vpop.f32.mrf.mxu0
        %v725 = vadd.f32 0.0, %v724
        %726 = vdwg.mxu0
        %v727 = vmul.f32 %v725, 0.17677669
        %v728 = vsel %vm531, %v727, -inf
        %729 = vmax.xlane.f32.xlu0 %v728
        %v730 = vpop.xlane.xlu0 %729
        %v731 = vsub.f32 %v727, %v730
        %v732 = vmul.f32 %v731, 1.442695
        %v733 = vpow.pop %v732
        %v734 = vsel %vm531, %v733, 0.0
        %735 = vadd.xlane.f32.xlu0 %v734
        %v736 = vpop.xlane.xlu0 %735
        %v737 = vrcp.pop %v736
        %v738 = vmul.f32 %v733, %v737
        %739 = vrot.lane.b32.xlu0 %v501, 32
        %v740 = vpop.permute.xlu0 %739
        %v743 = vsel %vm531, %v738, 0
        %745 = vmatpush.msra.mxu0 0.0
        %746 = vmatpush.msra.mxu0 0.0
        %747 = vmatpush.msra.mxu0 0.0
        %748 = vmatpush.msra.mxu0 0.0
        %749 = vmatpush.msra.mxu0 0.0
        %750 = vmatpush.msra.mxu0 0.0
        %751 = vmatpush.msra.mxu0 0.0
        %752 = vmatpush.msra.mxu0 0.0
        %753 = vmatpush.msra.mxu0 0.0
        %754 = vmatpush.msra.mxu0 0.0
        %755 = vmatpush.msra.mxu0 0.0
        %756 = vmatpush.msra.mxu0 0.0
        %757 = vmatpush.msra.mxu0 0.0
        %758 = vmatpush.msra.mxu0 0.0
        %759 = vmatpush.msra.mxu0 0.0
        %760 = vmatpush.msra.mxu0 %v740
        %761 = vmatmul.f32.gmra.mxu0 %v743
        %v762 = vpop.f32.mrf.mxu0
        %v763 = vadd.f32 0.0, %v762
        %764 = vdwg.mxu0
        %766 = vrot.lane.b32.xlu0 %v631, 32
        %v767 = vpop.permute.xlu0 %766
        %770 = vrot.lane.b32.xlu0 %v697, 64
        %v771 = vpop.permute.xlu0 %770
        %774 = vrot.lane.b32.xlu0 %v763, 96
        %v775 = vpop.permute.xlu0 %774
        %v777 = vsel %vm503, %v564, %v767
        %vm778 = vcmask 523264
        %v779 = vsel %vm778, %v777, %v771
        %vm780 = vcmask 785408
        %v781 = vsel %vm780, %v779, %v775
        %v782 = vld [vmem:[#allocation6] sm:$0xff]
        %v783 = vld [vmem:[#allocation6 + $0x8] sm:$0xff]
        %v784 = vld [vmem:[#allocation6 + $0x10] sm:$0xff]
        %v785 = vld [vmem:[#allocation6 + $0x18] sm:$0xff]
        %v786 = vld [vmem:[#allocation6 + $0x20] sm:$0xff]
        %v787 = vld [vmem:[#allocation6 + $0x28] sm:$0xff]
        %v788 = vld [vmem:[#allocation6 + $0x30] sm:$0xff]
        %v789 = vld [vmem:[#allocation6 + $0x38] sm:$0xff]
        %v790 = vld [vmem:[#allocation6 + $0x40] sm:$0xff]
        %v791 = vld [vmem:[#allocation6 + $0x48] sm:$0xff]
        %v792 = vld [vmem:[#allocation6 + $0x50] sm:$0xff]
        %v793 = vld [vmem:[#allocation6 + $0x58] sm:$0xff]
        %v794 = vld [vmem:[#allocation6 + $0x60] sm:$0xff]
        %v795 = vld [vmem:[#allocation6 + $0x68] sm:$0xff]
        %v796 = vld [vmem:[#allocation6 + $0x70] sm:$0xff]
        %v797 = vld [vmem:[#allocation6 + $0x78] sm:$0xff]
        %v798 = vld [vmem:[#allocation7] sm:$0x1]
        %v800 = vperm.slane %v798, 0
        %802 = vmatpush.msra.mxu0 %v797
        %803 = vmatpush.msra.mxu0 %v796
        %804 = vmatpush.msra.mxu0 %v795
        %805 = vmatpush.msra.mxu0 %v794
        %806 = vmatpush.msra.mxu0 %v793
        %807 = vmatpush.msra.mxu0 %v792
        %808 = vmatpush.msra.mxu0 %v791
        %809 = vmatpush.msra.mxu0 %v790
        %810 = vmatpush.msra.mxu0 %v789
        %811 = vmatpush.msra.mxu0 %v788
        %812 = vmatpush.msra.mxu0 %v787
        %813 = vmatpush.msra.mxu0 %v786
        %814 = vmatpush.msra.mxu0 %v785
        %815 = vmatpush.msra.mxu0 %v784
        %816 = vmatpush.msra.mxu0 %v783
        %817 = vmatpush.msra.mxu0 %v782
        %818 = vmatmul.f32.gmra.mxu0 %v781
        %v819 = vpop.f32.mrf.mxu0
        %v820 = vadd.f32 %v800, %v819
        %821 = vdwg.mxu0
        %822 = vst [vmem:[%s382] sm:$0xff] %v820
        %p823 = scmp.lt.s32.totalorder %s22, 1
        %s824 = scalar_select %p823, %s22, 1
        %s825 = smul.addr %s824, 8
        %s826 = scalar_lea.vmem %s8, %s825
        // Predicated region
        $region69: #{desa_forward.11} parent=51 // pred_check
          %p827 = pneg %p218
        $region70: #{desa_forward.11} parent=51 // pred_check_branch
          %829 = sbr.rel (%p827) target = $region72
        $region71: #{desa_forward.11} parent=51 // pred_region
          _
        $region72: #{desa_forward.11} parent=51 // pred_fallthru
          _
      $region52: #{desa_forward.11} parent=5 // pred_fallthru
        _
      %p830 = scmp.le.s32.totalorder 2, %s17
      // Predicated region
      $region73: #{desa_forward.11} parent=5 // pred_check
        %p831 = pneg %p830
      $region74: #{desa_forward.11} parent=5 // pred_check_branch
        %833 = sbr.rel (%p831) target = $region76
      $region75: #{desa_forward.11} parent=5 // pred_region
        %s834 = ssub.s32 %s17, 2
        // Predicated region
        $region77: #{desa_forward.11} parent=75 // pred_check
          %p835 = pneg %p224
        $region78: #{desa_forward.11} parent=75 // pred_check_branch
          %837 = sbr.rel (%p835) target = $region80
        $region79: #{desa_forward.11} parent=75 // pred_region
          %p838 = scmp.lt.s32.totalorder %s23, 1
          %s839 = scalar_select %p838, %s23, 1
          %s840 = smul.addr %s839, 8
          %s841 = scalar_lea.vmem %s8, %s840
        $region80: #{desa_forward.11} parent=75 // pred_fallthru
          _
      $region76: #{desa_forward.11} parent=5 // pred_fallthru
        _
    $region6: #{desa_forward.11} parent=1 // loop_footer
      %s21 = sadd.s32 1, %s17
    $region7: #{desa_forward.11} parent=1 // loop_footer_branch
      %16 = sbr.rel target = $region3
    $region8: #{desa_forward.11} parent=1 // loop_exit
      _
    %842 = vsyncpa [#allocation3], 1
    %s843 = scalar_lea.sflag [#allocation3], 1
    %844 = vsyncpa %s843, 1
    %845 = vsyncpa [#allocation5], 1
    %846 = vsyncpa [#allocation8], 1

// kernel: desa_forward.7
$region0: #{desa_forward.7}
  #allocation0 [shape = 'u32[]', space=smem, size = 0x4, offset = 0x4, fixed_abs, tag = 'smem constant byte address 0x4 - core index']
  #allocation1 [shape = 'u32[72,128]{1,0:T(1,128)}', space=vmem, size = 0x9000, scoped, tag = 'internal scratch']
  %s0 = inlined_call_operand.vmem [shape: f32[2,8,128], index: 0, kind: input, shape index: {}]
  %s1 = inlined_call_operand.vmem [shape: f32[2,1,8], index: 1, kind: input, shape index: {}]
  %s2 = inlined_call_operand.hbm [shape: f32[128,384], index: 2, kind: input, shape index: {}]
  %s3 = inlined_call_operand.hbm [shape: f32[1,384], index: 3, kind: input, shape index: {}]
  %s4 = inlined_call_operand.hbm [shape: f32[128,128], index: 4, kind: input, shape index: {}]
  %s5 = inlined_call_operand.hbm [shape: f32[1,128], index: 5, kind: input, shape index: {}]
  %s6 = inlined_call_operand.hbm [shape: f32[1,128], index: 6, kind: input, shape index: {}]
  %s7 = inlined_call_operand.hbm [shape: f32[1,128], index: 7, kind: input, shape index: {}]
  %s8 = inlined_call_operand.hbm [shape: f32[128,512], index: 8, kind: input, shape index: {}]
  %s9 = inlined_call_operand.vmem [shape: f32[1,512], index: 9, kind: input, shape index: {}]
  %s10 = inlined_call_operand.hbm [shape: f32[512,128], index: 10, kind: input, shape index: {}]
  %s11 = inlined_call_operand.hbm [shape: f32[1,128], index: 11, kind: input, shape index: {}]
  %s12 = inlined_call_operand.hbm [shape: f32[1,128], index: 12, kind: input, shape index: {}]
  %s13 = inlined_call_operand.hbm [shape: f32[1,128], index: 13, kind: input, shape index: {}]
  %s14 = inlined_call_operand.vmem [shape: f32[2,8,128], index: 14, kind: output, shape index: {}]
  %s15 = sld [smem:[#allocation0]]
  $region133: #{desa_forward.7} parent=0
    _
  %s17 = ssub.s32 1, %s15
  %s18 = scalar_select 0, %s17, %s15
  $region1: #{desa_forward.7} parent=0
    #allocation2 [shape = 'u8[196608]{0}', space=vmem, size = 0x30000, scoped, tag = 'input window, operand 2, single buffered']
    #allocation3 [shape = 's32[2]{0}', space=sflag, size = 0x8, scoped, tag = 'scoped memory for desa_forward.7']
    #allocation4 [shape = 'u8[1536]{0}', space=vmem, size = 0x800, scoped, tag = 'input window, operand 3, single buffered']
    #allocation5 [shape = 's32[1]{0}', space=sflag, size = 0x4, scoped, tag = 'scoped memory for desa_forward.7']
    #allocation6 [shape = 'u8[65536]{0}', space=vmem, size = 0x10000, scoped, tag = 'input window, operand 4, single buffered']
    #allocation7 [shape = 'u8[512]{0}', space=vmem, size = 0x400, scoped, tag = 'input window, operand 5, single buffered']
    #allocation8 [shape = 's32[1]{0}', space=sflag, size = 0x4, scoped, tag = 'scoped memory for desa_forward.7']
    #allocation9 [shape = 'u8[512]{0}', space=vmem, size = 0x400, scoped, tag = 'input window, operand 6, single buffered']
    #allocation10 [shape = 'u8[512]{0}', space=vmem, size = 0x400, scoped, tag = 'input window, operand 7, single buffered']
    #allocation11 [shape = 's32[1]{0}', space=sflag, size = 0x4, scoped, tag = 'scoped memory for desa_forward.7']
    #allocation12 [shape = 'u8[262144]{0}', space=vmem, size = 0x40000, scoped, tag = 'input window, operand 8, single buffered']
    #allocation13 [shape = 'u8[262144]{0}', space=vmem, size = 0x40000, scoped, tag = 'input window, operand 10, single buffered']
    #allocation14 [shape = 's32[1]{0}', space=sflag, size = 0x4, scoped, tag = 'scoped memory for desa_forward.7']
    #allocation15 [shape = 'u8[512]{0}', space=vmem, size = 0x400, scoped, tag = 'input window, operand 11, single buffered']
    #allocation16 [shape = 'u8[512]{0}', space=vmem, size = 0x400, scoped, tag = 'input window, operand 12, single buffered']
    #allocation17 [shape = 's32[1]{0}', space=sflag, size = 0x4, scoped, tag = 'scoped memory for desa_forward.7']
    #allocation18 [shape = 'u8[512]{0}', space=vmem, size = 0x400, scoped, tag = 'input window, operand 13, single buffered']
    %19 = vsyncpa [#allocation3], 0
    %20 = vsyncpa [#allocation5], 0
    %21 = vsyncpa [#allocation8], 0
    %22 = vsyncpa [#allocation11], 0
    %23 = vsyncpa [#allocation14], 0
    %24 = vsyncpa [#allocation17], 0
    loop: start=0, step=1, limit=4
    $region2: #{desa_forward.7} parent=1 // loop_pre_header
      _
    $region3: #{desa_forward.7} parent=1 // loop_header
      %s26 = sphi 0, %s30
      %p27 = scmp.ge.s32.totalorder %s26, 4
      %s36 = sphi 0, %s38
      %s39 = sphi 0, %s36
      %s40 = sphi 0, %s39
      %s56 = sphi 0, %s40
      %s62 = sphi 0, %s64
      %s65 = sphi 0, %s62
      %s66 = sphi 0, %s65
      %s82 = sphi 0, %s66
      %s86 = sphi 0, %s86
      %s88 = sphi 0, %s86
      %s89 = sphi 0, %s88
      %s103 = sphi 0, %s89
      %s107 = sphi 0, %s107
      %s109 = sphi 0, %s107
      %s110 = sphi 0, %s109
      %s124 = sphi 0, %s110
      %s128 = sphi 0, %s128
      %s130 = sphi 0, %s128
      %s131 = sphi 0, %s130
      %s145 = sphi 0, %s131
      %s149 = sphi 0, %s149
      %s151 = sphi 0, %s149
      %s152 = sphi 0, %s151
      %s166 = sphi 0, %s152
      %s170 = sphi 0, %s170
      %s172 = sphi 0, %s170
      %s173 = sphi 0, %s172
      %s187 = sphi 0, %s173
      %s191 = sphi 0, %s191
      %s193 = sphi 0, %s191
      %s194 = sphi 0, %s193
      %s208 = sphi 0, %s194
      %s212 = sphi 0, %s212
      %s214 = sphi 0, %s212
      %s215 = sphi 0, %s214
      %s229 = sphi 0, %s215
      %s233 = sphi 0, %s233
      %s235 = sphi 0, %s233
      %s236 = sphi 0, %s235
      %s250 = sphi 0, %s236
      %s254 = sphi 0, %s254
      %s256 = sphi 0, %s254
      %s257 = sphi 0, %s256
      %s271 = sphi 0, %s257
      %s275 = sphi 0, %s275
      %s277 = sphi 0, %s275
      %s278 = sphi 0, %s277
      %s292 = sphi 0, %s278
      %s296 = sphi 0, %s296
      %s298 = sphi 0, %s296
      %s299 = sphi 0, %s298
      %s313 = sphi 0, %s299
      %s317 = sphi 0, %s317
      %s319 = sphi 0, %s317
      %s320 = sphi 0, %s319
      %s334 = sphi 0, %s320
      %s340 = sphi 0, %s342
      %s343 = sphi 0, %s340
      %s344 = sphi 0, %s343
      %s360 = sphi 0, %s344
    $region4: #{desa_forward.7} parent=1 // loop_header_branch
      %29 = sbr.rel (%p27) target = $region8
    $region5: #{desa_forward.7} parent=1 // loop_body
      %s31 = ssub.s32 %s26, 1
      %s32 = ssub.s32 %s26, 2
      %s33 = sadd.s32 %s26, 1
      %s34 = ssub.s32 %s26, %s33
      %p35 = scmp.eq.s32.totalorder %s34, 0
      %s37 = sadd.s32 %s36, 1
      %s38 = scalar_select %p35, %s36, %s37
      %p41 = pneg %p35
      %p42 = scmp.eq.s32.totalorder %s26, 1
      %p43 = por %p41, %p42
      %p44 = scmp.ne.s32.totalorder %s36, %s39
      %p45 = scmp.eq.s32.totalorder %s26, 0
      %p46 = por %p44, %p45
      %p47 = scmp.ne.s32.totalorder %s36, %s39
      %p48 = scmp.eq.s32.totalorder %s31, 1
      %p49 = por %p47, %p48
      %p50 = scmp.ne.s32.totalorder %s39, %s40
      %p51 = scmp.eq.s32.totalorder %s31, 0
      %p52 = por %p50, %p51
      %p53 = scmp.ne.s32.totalorder %s39, %s40
      %p54 = scmp.eq.s32.totalorder %s32, 1
      %p55 = por %p53, %p54
      %p57 = scmp.ne.s32.totalorder %s40, %s56
      %p58 = scmp.eq.s32.totalorder %s32, 0
      %p59 = por %p57, %p58
      %s60 = ssub.s32 %s26, %s33
      %p61 = scmp.eq.s32.totalorder %s60, 0
      %s63 = sadd.s32 %s62, 1
      %s64 = scalar_select %p61, %s62, %s63
      %p67 = pneg %p61
      %p68 = scmp.eq.s32.totalorder %s26, 1
      %p69 = por %p67, %p68
      %p70 = scmp.ne.s32.totalorder %s62, %s65
      %p71 = scmp.eq.s32.totalorder %s26, 0
      %p72 = por %p70, %p71
      %p73 = scmp.ne.s32.totalorder %s62, %s65
      %p74 = scmp.eq.s32.totalorder %s31, 1
      %p75 = por %p73, %p74
      %p76 = scmp.ne.s32.totalorder %s65, %s66
      %p77 = scmp.eq.s32.totalorder %s31, 0
      %p78 = por %p76, %p77
      %p79 = scmp.ne.s32.totalorder %s65, %s66
      %p80 = scmp.eq.s32.totalorder %s32, 1
      %p81 = por %p79, %p80
      %p83 = scmp.ne.s32.totalorder %s66, %s82
      %p84 = scmp.eq.s32.totalorder %s32, 0
      %p85 = por %p83, %p84
      %s87 = sadd.s32 %s86, 1
      %p90 = scmp.eq.s32.totalorder %s26, 1
      %p91 = scmp.ne.s32.totalorder %s86, %s88
      %p92 = scmp.eq.s32.totalorder %s26, 0
      %p93 = por %p91, %p92
      %p94 = scmp.ne.s32.totalorder %s86, %s88
      %p95 = scmp.eq.s32.totalorder %s31, 1
      %p96 = por %p94, %p95
      %p97 = scmp.ne.s32.totalorder %s88, %s89
      %p98 = scmp.eq.s32.totalorder %s31, 0
      %p99 = por %p97, %p98
      %p100 = scmp.ne.s32.totalorder %s88, %s89
      %p101 = scmp.eq.s32.totalorder %s32, 1
      %p102 = por %p100, %p101
      %p104 = scmp.ne.s32.totalorder %s89, %s103
      %p105 = scmp.eq.s32.totalorder %s32, 0
      %p106 = por %p104, %p105
      %s108 = sadd.s32 %s107, 1
      %p111 = scmp.eq.s32.totalorder %s26, 1
      %p112 = scmp.ne.s32.totalorder %s107, %s109
      %p113 = scmp.eq.s32.totalorder %s26, 0
      %p114 = por %p112, %p113
      %p115 = scmp.ne.s32.totalorder %s107, %s109
      %p116 = scmp.eq.s32.totalorder %s31, 1
      %p117 = por %p115, %p116
      %p118 = scmp.ne.s32.totalorder %s109, %s110
      %p119 = scmp.eq.s32.totalorder %s31, 0
      %p120 = por %p118, %p119
      %p121 = scmp.ne.s32.totalorder %s109, %s110
      %p122 = scmp.eq.s32.totalorder %s32, 1
      %p123 = por %p121, %p122
      %p125 = scmp.ne.s32.totalorder %s110, %s124
      %p126 = scmp.eq.s32.totalorder %s32, 0
      %p127 = por %p125, %p126
      %s129 = sadd.s32 %s128, 1
      %p132 = scmp.eq.s32.totalorder %s26, 1
      %p133 = scmp.ne.s32.totalorder %s128, %s130
      %p134 = scmp.eq.s32.totalorder %s26, 0
      %p135 = por %p133, %p134
      %p136 = scmp.ne.s32.totalorder %s128, %s130
      %p137 = scmp.eq.s32.totalorder %s31, 1
      %p138 = por %p136, %p137
      %p139 = scmp.ne.s32.totalorder %s130, %s131
      %p140 = scmp.eq.s32.totalorder %s31, 0
      %p141 = por %p139, %p140
      %p142 = scmp.ne.s32.totalorder %s130, %s131
      %p143 = scmp.eq.s32.totalorder %s32, 1
      %p144 = por %p142, %p143
      %p146 = scmp.ne.s32.totalorder %s131, %s145
      %p147 = scmp.eq.s32.totalorder %s32, 0
      %p148 = por %p146, %p147
      %s150 = sadd.s32 %s149, 1
      %p153 = scmp.eq.s32.totalorder %s26, 1
      %p154 = scmp.ne.s32.totalorder %s149, %s151
      %p155 = scmp.eq.s32.totalorder %s26, 0
      %p156 = por %p154, %p155
      %p157 = scmp.ne.s32.totalorder %s149, %s151
      %p158 = scmp.eq.s32.totalorder %s31, 1
      %p159 = por %p157, %p158
      %p160 = scmp.ne.s32.totalorder %s151, %s152
      %p161 = scmp.eq.s32.totalorder %s31, 0
      %p162 = por %p160, %p161
      %p163 = scmp.ne.s32.totalorder %s151, %s152
      %p164 = scmp.eq.s32.totalorder %s32, 1
      %p165 = por %p163, %p164
      %p167 = scmp.ne.s32.totalorder %s152, %s166
      %p168 = scmp.eq.s32.totalorder %s32, 0
      %p169 = por %p167, %p168
      %s171 = sadd.s32 %s170, 1
      %p174 = scmp.eq.s32.totalorder %s26, 1
      %p175 = scmp.ne.s32.totalorder %s170, %s172
      %p176 = scmp.eq.s32.totalorder %s26, 0
      %p177 = por %p175, %p176
      %p178 = scmp.ne.s32.totalorder %s170, %s172
      %p179 = scmp.eq.s32.totalorder %s31, 1
      %p180 = por %p178, %p179
      %p181 = scmp.ne.s32.totalorder %s172, %s173
      %p182 = scmp.eq.s32.totalorder %s31, 0
      %p183 = por %p181, %p182
      %p184 = scmp.ne.s32.totalorder %s172, %s173
      %p185 = scmp.eq.s32.totalorder %s32, 1
      %p186 = por %p184, %p185
      %p188 = scmp.ne.s32.totalorder %s173, %s187
      %p189 = scmp.eq.s32.totalorder %s32, 0
      %p190 = por %p188, %p189
      %s192 = sadd.s32 %s191, 1
      %p195 = scmp.eq.s32.totalorder %s26, 1
      %p196 = scmp.ne.s32.totalorder %s191, %s193
      %p197 = scmp.eq.s32.totalorder %s26, 0
      %p198 = por %p196, %p197
      %p199 = scmp.ne.s32.totalorder %s191, %s193
      %p200 = scmp.eq.s32.totalorder %s31, 1
      %p201 = por %p199, %p200
      %p202 = scmp.ne.s32.totalorder %s193, %s194
      %p203 = scmp.eq.s32.totalorder %s31, 0
      %p204 = por %p202, %p203
      %p205 = scmp.ne.s32.totalorder %s193, %s194
      %p206 = scmp.eq.s32.totalorder %s32, 1
      %p207 = por %p205, %p206
      %p209 = scmp.ne.s32.totalorder %s194, %s208
      %p210 = scmp.eq.s32.totalorder %s32, 0
      %p211 = por %p209, %p210
      %s213 = sadd.s32 %s212, 1
      %p216 = scmp.eq.s32.totalorder %s26, 1
      %p217 = scmp.ne.s32.totalorder %s212, %s214
      %p218 = scmp.eq.s32.totalorder %s26, 0
      %p219 = por %p217, %p218
      %p220 = scmp.ne.s32.totalorder %s212, %s214
      %p221 = scmp.eq.s32.totalorder %s31, 1
      %p222 = por %p220, %p221
      %p223 = scmp.ne.s32.totalorder %s214, %s215
      %p224 = scmp.eq.s32.totalorder %s31, 0
      %p225 = por %p223, %p224
      %p226 = scmp.ne.s32.totalorder %s214, %s215
      %p227 = scmp.eq.s32.totalorder %s32, 1
      %p228 = por %p226, %p227
      %p230 = scmp.ne.s32.totalorder %s215, %s229
      %p231 = scmp.eq.s32.totalorder %s32, 0
      %p232 = por %p230, %p231
      %s234 = sadd.s32 %s233, 1
      %p237 = scmp.eq.s32.totalorder %s26, 1
      %p238 = scmp.ne.s32.totalorder %s233, %s235
      %p239 = scmp.eq.s32.totalorder %s26, 0
      %p240 = por %p238, %p239
      %p241 = scmp.ne.s32.totalorder %s233, %s235
      %p242 = scmp.eq.s32.totalorder %s31, 1
      %p243 = por %p241, %p242
      %p244 = scmp.ne.s32.totalorder %s235, %s236
      %p245 = scmp.eq.s32.totalorder %s31, 0
      %p246 = por %p244, %p245
      %p247 = scmp.ne.s32.totalorder %s235, %s236
      %p248 = scmp.eq.s32.totalorder %s32, 1
      %p249 = por %p247, %p248
      %p251 = scmp.ne.s32.totalorder %s236, %s250
      %p252 = scmp.eq.s32.totalorder %s32, 0
      %p253 = por %p251, %p252
      %s255 = sadd.s32 %s254, 1
      %p258 = scmp.eq.s32.totalorder %s26, 1
      %p259 = scmp.ne.s32.totalorder %s254, %s256
      %p260 = scmp.eq.s32.totalorder %s26, 0
      %p261 = por %p259, %p260
      %p262 = scmp.ne.s32.totalorder %s254, %s256
      %p263 = scmp.eq.s32.totalorder %s31, 1
      %p264 = por %p262, %p263
      %p265 = scmp.ne.s32.totalorder %s256, %s257
      %p266 = scmp.eq.s32.totalorder %s31, 0
      %p267 = por %p265, %p266
      %p268 = scmp.ne.s32.totalorder %s256, %s257
      %p269 = scmp.eq.s32.totalorder %s32, 1
      %p270 = por %p268, %p269
      %p272 = scmp.ne.s32.totalorder %s257, %s271
      %p273 = scmp.eq.s32.totalorder %s32, 0
      %p274 = por %p272, %p273
      %s276 = sadd.s32 %s275, 1
      %p279 = scmp.eq.s32.totalorder %s26, 1
      %p280 = scmp.ne.s32.totalorder %s275, %s277
      %p281 = scmp.eq.s32.totalorder %s26, 0
      %p282 = por %p280, %p281
      %p283 = scmp.ne.s32.totalorder %s275, %s277
      %p284 = scmp.eq.s32.totalorder %s31, 1
      %p285 = por %p283, %p284
      %p286 = scmp.ne.s32.totalorder %s277, %s278
      %p287 = scmp.eq.s32.totalorder %s31, 0
      %p288 = por %p286, %p287
      %p289 = scmp.ne.s32.totalorder %s277, %s278
      %p290 = scmp.eq.s32.totalorder %s32, 1
      %p291 = por %p289, %p290
      %p293 = scmp.ne.s32.totalorder %s278, %s292
      %p294 = scmp.eq.s32.totalorder %s32, 0
      %p295 = por %p293, %p294
      %s297 = sadd.s32 %s296, 1
      %p300 = scmp.eq.s32.totalorder %s26, 1
      %p301 = scmp.ne.s32.totalorder %s296, %s298
      %p302 = scmp.eq.s32.totalorder %s26, 0
      %p303 = por %p301, %p302
      %p304 = scmp.ne.s32.totalorder %s296, %s298
      %p305 = scmp.eq.s32.totalorder %s31, 1
      %p306 = por %p304, %p305
      %p307 = scmp.ne.s32.totalorder %s298, %s299
      %p308 = scmp.eq.s32.totalorder %s31, 0
      %p309 = por %p307, %p308
      %p310 = scmp.ne.s32.totalorder %s298, %s299
      %p311 = scmp.eq.s32.totalorder %s32, 1
      %p312 = por %p310, %p311
      %p314 = scmp.ne.s32.totalorder %s299, %s313
      %p315 = scmp.eq.s32.totalorder %s32, 0
      %p316 = por %p314, %p315
      %s318 = sadd.s32 %s317, 1
      %p321 = scmp.eq.s32.totalorder %s26, 1
      %p322 = scmp.ne.s32.totalorder %s317, %s319
      %p323 = scmp.eq.s32.totalorder %s26, 0
      %p324 = por %p322, %p323
      %p325 = scmp.ne.s32.totalorder %s317, %s319
      %p326 = scmp.eq.s32.totalorder %s31, 1
      %p327 = por %p325, %p326
      %p328 = scmp.ne.s32.totalorder %s319, %s320
      %p329 = scmp.eq.s32.totalorder %s31, 0
      %p330 = por %p328, %p329
      %p331 = scmp.ne.s32.totalorder %s319, %s320
      %p332 = scmp.eq.s32.totalorder %s32, 1
      %p333 = por %p331, %p332
      %p335 = scmp.ne.s32.totalorder %s320, %s334
      %p336 = scmp.eq.s32.totalorder %s32, 0
      %p337 = por %p335, %p336
      %s338 = ssub.s32 %s26, %s33
      %p339 = scmp.eq.s32.totalorder %s338, 0
      %s341 = sadd.s32 %s340, 1
      %s342 = scalar_select %p339, %s340, %s341
      %p345 = pneg %p339
      %p346 = scmp.eq.s32.totalorder %s26, 1
      %p347 = por %p345, %p346
      %p348 = scmp.ne.s32.totalorder %s340, %s343
      %p349 = scmp.eq.s32.totalorder %s26, 0
      %p350 = por %p348, %p349
      %p351 = scmp.ne.s32.totalorder %s340, %s343
      %p352 = scmp.eq.s32.totalorder %s31, 1
      %p353 = por %p351, %p352
      %p354 = scmp.ne.s32.totalorder %s343, %s344
      %p355 = scmp.eq.s32.totalorder %s31, 0
      %p356 = por %p354, %p355
      %p357 = scmp.ne.s32.totalorder %s343, %s344
      %p358 = scmp.eq.s32.totalorder %s32, 1
      %p359 = por %p357, %p358
      %p361 = scmp.ne.s32.totalorder %s344, %s360
      %p362 = scmp.eq.s32.totalorder %s32, 0
      %p363 = por %p361, %p362
      %p364 = scmp.le.s32.totalorder 1, %s26
      %p365 = scmp.lt.s32.totalorder %s26, 3
      %p366 = pnand %p364, %p365
      %p367 = pneg %p366
      // Predicated region
      $region9: #{desa_forward.7} parent=5 // pred_check
        _
      $region10: #{desa_forward.7} parent=5 // pred_check_branch
        %369 = sbr.rel (%p366) target = $region12
      $region11: #{desa_forward.7} parent=5 // pred_region
        %s370 = ssub.s32 %s26, 1
        // Predicated region
        $region13: #{desa_forward.7} parent=11 // pred_check
          %p371 = pneg %p99
        $region14: #{desa_forward.7} parent=11 // pred_check_branch
          %373 = sbr.rel (%p371) target = $region16
        $region15: #{desa_forward.7} parent=11 // pred_region
          %375 = vsyncadd [#allocation3], 0
          %s376 = sshll.u32 %s2, 4
          %s377 = int_to_ptr.hbm [resolvable:$true] %s376
          %s378 = sshll.u32 [#allocation2], 4
          %s379 = int_to_ptr.vmem [resolvable:$true] %s378
          %384 = dma.hbm_to_vmem [thread:$0]  %s377, 6144, %s379, [#allocation3], 384, 384, 24
        $region16: #{desa_forward.7} parent=11 // pred_fallthru
          _
        // Predicated region
        $region17: #{desa_forward.7} parent=11 // pred_check
          %p385 = pneg %p120
        $region18: #{desa_forward.7} parent=11 // pred_check_branch
          %387 = sbr.rel (%p385) target = $region20
        $region19: #{desa_forward.7} parent=11 // pred_region
          %389 = vsyncadd [#allocation5], 0
          %s391 = sshll.u32 %s3, 4
          %s392 = int_to_ptr.hbm [resolvable:$true] %s391
          %s393 = sshll.u32 [#allocation4], 4
          %s394 = int_to_ptr.vmem [resolvable:$true] %s393
          %396 = dma.hbm_to_vmem [thread:$0]  %s392, 48, %s394, [#allocation5]
        $region20: #{desa_forward.7} parent=11 // pred_fallthru
          _
        // Predicated region
        $region21: #{desa_forward.7} parent=11 // pred_check
          %p397 = pneg %p141
        $region22: #{desa_forward.7} parent=11 // pred_check_branch
          %399 = sbr.rel (%p397) target = $region24
        $region23: #{desa_forward.7} parent=11 // pred_region
          %401 = vsyncadd [#allocation5], 0
          %s402 = sshll.u32 %s4, 4
          %s403 = int_to_ptr.hbm [resolvable:$true] %s402
          %s404 = sshll.u32 [#allocation6], 4
          %s405 = int_to_ptr.vmem [resolvable:$true] %s404
          %410 = dma.hbm_to_vmem [thread:$0]  %s403, 2048, %s405, [#allocation5], 128, 128, 8
        $region24: #{desa_forward.7} parent=11 // pred_fallthru
          _
        // Predicated region
        $region25: #{desa_forward.7} parent=11 // pred_check
          %p411 = pneg %p162
        $region26: #{desa_forward.7} parent=11 // pred_check_branch
          %413 = sbr.rel (%p411) target = $region28
        $region27: #{desa_forward.7} parent=11 // pred_region
          %415 = vsyncadd [#allocation8], 0
          %s417 = sshll.u32 %s5, 4
          %s418 = int_to_ptr.hbm [resolvable:$true] %s417
          %s419 = sshll.u32 [#allocation7], 4
          %s420 = int_to_ptr.vmem [resolvable:$true] %s419
          %422 = dma.hbm_to_vmem [thread:$0]  %s418, 16, %s420, [#allocation8]
        $region28: #{desa_forward.7} parent=11 // pred_fallthru
          _
        // Predicated region
        $region29: #{desa_forward.7} parent=11 // pred_check
          %p423 = pneg %p183
        $region30: #{desa_forward.7} parent=11 // pred_check_branch
          %425 = sbr.rel (%p423) target = $region32
        $region31: #{desa_forward.7} parent=11 // pred_region
          %427 = vsyncadd [#allocation8], 0
          %s429 = sshll.u32 %s6, 4
          %s430 = int_to_ptr.hbm [resolvable:$true] %s429
          %s431 = sshll.u32 [#allocation9], 4
          %s432 = int_to_ptr.vmem [resolvable:$true] %s431
          %434 = dma.hbm_to_vmem [thread:$0]  %s430, 16, %s432, [#allocation8]
        $region32: #{desa_forward.7} parent=11 // pred_fallthru
          _
        // Predicated region
        $region33: #{desa_forward.7} parent=11 // pred_check
          %p435 = pneg %p204
        $region34: #{desa_forward.7} parent=11 // pred_check_branch
          %437 = sbr.rel (%p435) target = $region36
        $region35: #{desa_forward.7} parent=11 // pred_region
          %439 = vsyncadd [#allocation11], 0
          %s441 = sshll.u32 %s7, 4
          %s442 = int_to_ptr.hbm [resolvable:$true] %s441
          %s443 = sshll.u32 [#allocation10], 4
          %s444 = int_to_ptr.vmem [resolvable:$true] %s443
          %446 = dma.hbm_to_vmem [thread:$0]  %s442, 16, %s444, [#allocation11]
        $region36: #{desa_forward.7} parent=11 // pred_fallthru
          _
        // Predicated region
        $region37: #{desa_forward.7} parent=11 // pred_check
          %p447 = pneg %p225
        $region38: #{desa_forward.7} parent=11 // pred_check_branch
          %449 = sbr.rel (%p447) target = $region40
        $region39: #{desa_forward.7} parent=11 // pred_region
          %451 = vsyncadd [#allocation11], 0
          %s452 = sshll.u32 %s8, 4
          %s453 = int_to_ptr.hbm [resolvable:$true] %s452
          %s454 = sshll.u32 [#allocation12], 4
          %s455 = int_to_ptr.vmem [resolvable:$true] %s454
          %460 = dma.hbm_to_vmem [thread:$0]  %s453, 8192, %s455, [#allocation11], 512, 512, 32
        $region40: #{desa_forward.7} parent=11 // pred_fallthru
          _
        // Predicated region
        $region41: #{desa_forward.7} parent=11 // pred_check
          %p461 = pneg %p246
        $region42: #{desa_forward.7} parent=11 // pred_check_branch
          %463 = sbr.rel (%p461) target = $region44
        $region43: #{desa_forward.7} parent=11 // pred_region
          _
        $region44: #{desa_forward.7} parent=11 // pred_fallthru
          _
        // Predicated region
        $region45: #{desa_forward.7} parent=11 // pred_check
          %p464 = pneg %p267
        $region46: #{desa_forward.7} parent=11 // pred_check_branch
          %466 = sbr.rel (%p464) target = $region48
        $region47: #{desa_forward.7} parent=11 // pred_region
          %468 = vsyncadd [#allocation14], 0
          %s469 = sshll.u32 %s10, 4
          %s470 = int_to_ptr.hbm [resolvable:$true] %s469
          %s471 = sshll.u32 [#allocation13], 4
          %s472 = int_to_ptr.vmem [resolvable:$true] %s471
          %477 = dma.hbm_to_vmem [thread:$0]  %s470, 8192, %s472, [#allocation14], 128, 128, 8
        $region48: #{desa_forward.7} parent=11 // pred_fallthru
          _
        // Predicated region
        $region49: #{desa_forward.7} parent=11 // pred_check
          %p478 = pneg %p288
        $region50: #{desa_forward.7} parent=11 // pred_check_branch
          %480 = sbr.rel (%p478) target = $region52
        $region51: #{desa_forward.7} parent=11 // pred_region
          %482 = vsyncadd [#allocation14], 0
          %s484 = sshll.u32 %s11, 4
          %s485 = int_to_ptr.hbm [resolvable:$true] %s484
          %s486 = sshll.u32 [#allocation15], 4
          %s487 = int_to_ptr.vmem [resolvable:$true] %s486
          %489 = dma.hbm_to_vmem [thread:$0]  %s485, 16, %s487, [#allocation14]
        $region52: #{desa_forward.7} parent=11 // pred_fallthru
          _
        // Predicated region
        $region53: #{desa_forward.7} parent=11 // pred_check
          %p490 = pneg %p309
        $region54: #{desa_forward.7} parent=11 // pred_check_branch
          %492 = sbr.rel (%p490) target = $region56
        $region55: #{desa_forward.7} parent=11 // pred_region
          %494 = vsyncadd [#allocation17], 0
          %s496 = sshll.u32 %s12, 4
          %s497 = int_to_ptr.hbm [resolvable:$true] %s496
          %s498 = sshll.u32 [#allocation16], 4
          %s499 = int_to_ptr.vmem [resolvable:$true] %s498
          %501 = dma.hbm_to_vmem [thread:$0]  %s497, 16, %s499, [#allocation17]
        $region56: #{desa_forward.7} parent=11 // pred_fallthru
          _
        // Predicated region
        $region57: #{desa_forward.7} parent=11 // pred_check
          %p502 = pneg %p330
        $region58: #{desa_forward.7} parent=11 // pred_check_branch
          %504 = sbr.rel (%p502) target = $region60
        $region59: #{desa_forward.7} parent=11 // pred_region
          %506 = vsyncadd [#allocation17], 0
          %s508 = sshll.u32 %s13, 4
          %s509 = int_to_ptr.hbm [resolvable:$true] %s508
          %s510 = sshll.u32 [#allocation18], 4
          %s511 = int_to_ptr.vmem [resolvable:$true] %s510
          %513 = dma.hbm_to_vmem [thread:$0]  %s509, 16, %s511, [#allocation17]
        $region60: #{desa_forward.7} parent=11 // pred_fallthru
          _
      $region12: #{desa_forward.7} parent=5 // pred_fallthru
        _
      %p514 = scmp.lt.s32.totalorder %s26, 2
      // Predicated region
      $region61: #{desa_forward.7} parent=5 // pred_check
        %p515 = pneg %p514
      $region62: #{desa_forward.7} parent=5 // pred_check_branch
        %517 = sbr.rel (%p515) target = $region64
      $region63: #{desa_forward.7} parent=5 // pred_region
        // Predicated region
        $region65: #{desa_forward.7} parent=63 // pred_check
          %p518 = pneg %p46
        $region66: #{desa_forward.7} parent=63 // pred_check_branch
          %520 = sbr.rel (%p518) target = $region68
        $region67: #{desa_forward.7} parent=63 // pred_region
          %p521 = scmp.lt.s32.totalorder %s26, 1
          %s522 = scalar_select %p521, %s26, 1
          %s523 = smul.addr %s522, 8
          %s524 = scalar_lea.vmem %s0, %s523
        $region68: #{desa_forward.7} parent=63 // pred_fallthru
          _
        // Predicated region
        $region69: #{desa_forward.7} parent=63 // pred_check
          %p525 = pneg %p72
        $region70: #{desa_forward.7} parent=63 // pred_check_branch
          %527 = sbr.rel (%p525) target = $region72
        $region71: #{desa_forward.7} parent=63 // pred_region
          %p528 = scmp.lt.s32.totalorder %s26, 1
          %s529 = scalar_select %p528, %s26, 1
          %s530 = scalar_lea.vmem %s1, %s529
        $region72: #{desa_forward.7} parent=63 // pred_fallthru
          _
      $region64: #{desa_forward.7} parent=5 // pred_fallthru
        _
      %p531 = scmp.le.s32.totalorder 1, %s26
      %p532 = scmp.lt.s32.totalorder %s26, 3
      %p533 = pnand %p531, %p532
      %p534 = pneg %p533
      // Predicated region
      $region73: #{desa_forward.7} parent=5 // pred_check
        _
      $region74: #{desa_forward.7} parent=5 // pred_check_branch
        %536 = sbr.rel (%p533) target = $region76
      $region75: #{desa_forward.7} parent=5 // pred_region
        %s537 = ssub.s32 %s26, 1
        // Predicated region
        $region77: #{desa_forward.7} parent=75 // pred_check
          %p538 = pneg %p99
        $region78: #{desa_forward.7} parent=75 // pred_check_branch
          %540 = sbr.rel (%p538) target = $region80
        $region79: #{desa_forward.7} parent=75 // pred_region
          %542 = dma.done [#allocation3], 6144
        $region80: #{desa_forward.7} parent=75 // pred_fallthru
          _
        // Predicated region
        $region81: #{desa_forward.7} parent=75 // pred_check
          %p543 = pneg %p120
        $region82: #{desa_forward.7} parent=75 // pred_check_branch
          %545 = sbr.rel (%p543) target = $region84
        $region83: #{desa_forward.7} parent=75 // pred_region
          %547 = dma.done [#allocation5], 48
        $region84: #{desa_forward.7} parent=75 // pred_fallthru
          _
        // Predicated region
        $region85: #{desa_forward.7} parent=75 // pred_check
          %p548 = pneg %p141
        $region86: #{desa_forward.7} parent=75 // pred_check_branch
          %550 = sbr.rel (%p548) target = $region88
        $region87: #{desa_forward.7} parent=75 // pred_region
          %552 = dma.done [#allocation5], 2048
        $region88: #{desa_forward.7} parent=75 // pred_fallthru
          _
        // Predicated region
        $region89: #{desa_forward.7} parent=75 // pred_check
          %p553 = pneg %p162
        $region90: #{desa_forward.7} parent=75 // pred_check_branch
          %555 = sbr.rel (%p553) target = $region92
        $region91: #{desa_forward.7} parent=75 // pred_region
          %557 = dma.done [#allocation8], 16
        $region92: #{desa_forward.7} parent=75 // pred_fallthru
          _
        // Predicated region
        $region93: #{desa_forward.7} parent=75 // pred_check
          %p558 = pneg %p183
        $region94: #{desa_forward.7} parent=75 // pred_check_branch
          %560 = sbr.rel (%p558) target = $region96
        $region95: #{desa_forward.7} parent=75 // pred_region
          %562 = dma.done [#allocation8], 16
        $region96: #{desa_forward.7} parent=75 // pred_fallthru
          _
        // Predicated region
        $region97: #{desa_forward.7} parent=75 // pred_check
          %p563 = pneg %p204
        $region98: #{desa_forward.7} parent=75 // pred_check_branch
          %565 = sbr.rel (%p563) target = $region100
        $region99: #{desa_forward.7} parent=75 // pred_region
          %567 = dma.done [#allocation11], 16
        $region100: #{desa_forward.7} parent=75 // pred_fallthru
          _
        // Predicated region
        $region101: #{desa_forward.7} parent=75 // pred_check
          %p568 = pneg %p225
        $region102: #{desa_forward.7} parent=75 // pred_check_branch
          %570 = sbr.rel (%p568) target = $region104
        $region103: #{desa_forward.7} parent=75 // pred_region
          %572 = dma.done [#allocation11], 8192
        $region104: #{desa_forward.7} parent=75 // pred_fallthru
          _
        // Predicated region
        $region105: #{desa_forward.7} parent=75 // pred_check
          %p573 = pneg %p267
        $region106: #{desa_forward.7} parent=75 // pred_check_branch
          %575 = sbr.rel (%p573) target = $region108
        $region107: #{desa_forward.7} parent=75 // pred_region
          %577 = dma.done [#allocation14], 8192
        $region108: #{desa_forward.7} parent=75 // pred_fallthru
          _
        // Predicated region
        $region109: #{desa_forward.7} parent=75 // pred_check
          %p578 = pneg %p288
        $region110: #{desa_forward.7} parent=75 // pred_check_branch
          %580 = sbr.rel (%p578) target = $region112
        $region111: #{desa_forward.7} parent=75 // pred_region
          %582 = dma.done [#allocation14], 16
        $region112: #{desa_forward.7} parent=75 // pred_fallthru
          _
        // Predicated region
        $region113: #{desa_forward.7} parent=75 // pred_check
          %p583 = pneg %p309
        $region114: #{desa_forward.7} parent=75 // pred_check_branch
          %585 = sbr.rel (%p583) target = $region116
        $region115: #{desa_forward.7} parent=75 // pred_region
          %587 = dma.done [#allocation17], 16
        $region116: #{desa_forward.7} parent=75 // pred_fallthru
          _
        // Predicated region
        $region117: #{desa_forward.7} parent=75 // pred_check
          %p588 = pneg %p330
        $region118: #{desa_forward.7} parent=75 // pred_check_branch
          %590 = sbr.rel (%p588) target = $region120
        $region119: #{desa_forward.7} parent=75 // pred_region
          %592 = dma.done [#allocation17], 16
        $region120: #{desa_forward.7} parent=75 // pred_fallthru
          _
        %p593 = scmp.lt.s32.totalorder %s31, 1
        %s594 = scalar_select %p593, %s31, 1
        %s595 = smul.addr %s594, 8
        %s596 = scalar_lea.vmem %s0, %s595
        %p597 = pneg %p52
        %p598 = pneg %p49
        %p599 = scmp.lt.s32.totalorder %s31, 1
        %s600 = scalar_select %p599, %s31, 1
        %s601 = scalar_lea.vmem %s1, %s600
        %p602 = pneg %p78
        %p603 = pneg %p75
        %p604 = pneg %p99
        %p605 = pneg %p96
        %p606 = pneg %p120
        %p607 = pneg %p117
        %p608 = pneg %p141
        %p609 = pneg %p138
        %p610 = pneg %p162
        %p611 = pneg %p159
        %p612 = pneg %p183
        %p613 = pneg %p180
        %p614 = pneg %p204
        %p615 = pneg %p201
        %p616 = pneg %p225
        %p617 = pneg %p222
        %p618 = pneg %p246
        %p619 = pneg %p243
        %p620 = pneg %p267
        %p621 = pneg %p264
        %p622 = pneg %p288
        %p623 = pneg %p285
        %p624 = pneg %p309
        %p625 = pneg %p306
        %p626 = pneg %p330
        %p627 = pneg %p327
        %p628 = pneg %p356
        %p629 = pneg %p353
        %p630 = scmp.lt.s32.totalorder %s31, 1
        %s631 = scalar_select %p630, %s31, 1
        %s632 = smul.addr %s631, 8
        %s633 = scalar_lea.vmem %s14, %s632
        %p634 = scmp.lt.s32.totalorder %s31, 1
        %s635 = scalar_select %p634, %s31, 1
        %s636 = smul.addr %s635, 8
        %s637 = scalar_lea.vmem %s0, %s636
        %p638 = scmp.lt.s32.totalorder %s31, 1
        %s639 = scalar_select %p638, %s31, 1
        %s640 = scalar_lea.vmem %s1, %s639
        %p641 = scmp.lt.s32.totalorder %s31, 1
        %s642 = scalar_select %p641, %s31, 1
        %s643 = smul.addr %s642, 8
        %s644 = scalar_lea.vmem %s14, %s643
        %v645 = vld [vmem:[%s637] sm:$0xff]
        %v646 = vld [vmem:[%s640] sm:$0x1]
        %v647 = vld [vmem:[#allocation2] sm:$0xff]
        %v648 = vld [vmem:[#allocation2 + $0x8] sm:$0xff]
        %v649 = vld [vmem:[#allocation2 + $0x10] sm:$0xff]
        %v650 = vld [vmem:[#allocation2 + $0x18] sm:$0xff]
        %v651 = vld [vmem:[#allocation2 + $0x20] sm:$0xff]
        %v652 = vld [vmem:[#allocation2 + $0x28] sm:$0xff]
        %v653 = vld [vmem:[#allocation2 + $0x30] sm:$0xff]
        %v654 = vld [vmem:[#allocation2 + $0x38] sm:$0xff]
        %v655 = vld [vmem:[#allocation2 + $0x40] sm:$0xff]
        %v656 = vld [vmem:[#allocation2 + $0x48] sm:$0xff]
        %v657 = vld [vmem:[#allocation2 + $0x50] sm:$0xff]
        %v658 = vld [vmem:[#allocation2 + $0x58] sm:$0xff]
        %v659 = vld [vmem:[#allocation2 + $0x60] sm:$0xff]
        %v660 = vld [vmem:[#allocation2 + $0x68] sm:$0xff]
        %v661 = vld [vmem:[#allocation2 + $0x70] sm:$0xff]
        %v662 = vld [vmem:[#allocation2 + $0x78] sm:$0xff]
        %v663 = vld [vmem:[#allocation2 + $0x80] sm:$0xff]
        %v664 = vld [vmem:[#allocation2 + $0x88] sm:$0xff]
        %v665 = vld [vmem:[#allocation2 + $0x90] sm:$0xff]
        %v666 = vld [vmem:[#allocation2 + $0x98] sm:$0xff]
        %v667 = vld [vmem:[#allocation2 + $0xa0] sm:$0xff]
        %v668 = vld [vmem:[#allocation2 + $0xa8] sm:$0xff]
        %v669 = vld [vmem:[#allocation2 + $0xb0] sm:$0xff]
        %v670 = vld [vmem:[#allocation2 + $0xb8] sm:$0xff]
        %v671 = vld [vmem:[#allocation2 + $0xc0] sm:$0xff]
        %v672 = vld [vmem:[#allocation2 + $0xc8] sm:$0xff]
        %v673 = vld [vmem:[#allocation2 + $0xd0] sm:$0xff]
        %v674 = vld [vmem:[#allocation2 + $0xd8] sm:$0xff]
        %v675 = vld [vmem:[#allocation2 + $0xe0] sm:$0xff]
        %v676 = vld [vmem:[#allocation2 + $0xe8] sm:$0xff]
        %v677 = vld [vmem:[#allocation2 + $0xf0] sm:$0xff]
        %v678 = vld [vmem:[#allocation2 + $0xf8] sm:$0xff]
        %v679 = vld [vmem:[#allocation2 + $0x100] sm:$0xff]
        %v680 = vld [vmem:[#allocation2 + $0x108] sm:$0xff]
        %v681 = vld [vmem:[#allocation2 + $0x110] sm:$0xff]
        %v682 = vld [vmem:[#allocation2 + $0x118] sm:$0xff]
        %v683 = vld [vmem:[#allocation2 + $0x120] sm:$0xff]
        %v684 = vld [vmem:[#allocation2 + $0x128] sm:$0xff]
        %v685 = vld [vmem:[#allocation2 + $0x130] sm:$0xff]
        %v686 = vld [vmem:[#allocation2 + $0x138] sm:$0xff]
        %v687 = vld [vmem:[#allocation2 + $0x140] sm:$0xff]
        %v688 = vld [vmem:[#allocation2 + $0x148] sm:$0xff]
        %v689 = vld [vmem:[#allocation2 + $0x150] sm:$0xff]
        %v690 = vld [vmem:[#allocation2 + $0x158] sm:$0xff]
        %v691 = vld [vmem:[#allocation2 + $0x160] sm:$0xff]
        %v692 = vld [vmem:[#allocation2 + $0x168] sm:$0xff]
        %v693 = vld [vmem:[#allocation2 + $0x170] sm:$0xff]
        %v694 = vld [vmem:[#allocation2 + $0x178] sm:$0xff]
        %v695 = vld [vmem:[#allocation4] sm:$0x7]
        %v697 = vperm.slane %v695, 0
        %v698 = vperm.slane %v695, 1
        %v699 = vperm.slane %v695, 2
        %703 = vmatpush.msra.mxu0 %v692
        %704 = vmatpush.msra.mxu0 %v689
        %705 = vmatpush.msra.mxu0 %v686
        %706 = vmatpush.msra.mxu0 %v683
        %707 = vmatpush.msra.mxu0 %v680
        %708 = vmatpush.msra.mxu0 %v677
        %709 = vmatpush.msra.mxu0 %v674
        %710 = vmatpush.msra.mxu0 %v671
        %711 = vmatpush.msra.mxu0 %v668
        %712 = vmatpush.msra.mxu0 %v665
        %713 = vmatpush.msra.mxu0 %v662
        %714 = vmatpush.msra.mxu0 %v659
        %715 = vmatpush.msra.mxu0 %v656
        %716 = vmatpush.msra.mxu0 %v653
        %717 = vmatpush.msra.mxu0 %v650
        %718 = vmatpush.msra.mxu0 %v647
        %719 = vmatmul.f32.gmra.mxu0 %v645
        %v720 = vpop.f32.mrf.mxu0
        %v721 = vadd.f32 %v697, %v720
        %722 = vdwg.mxu0
        %723 = vmatpush.msra.mxu0 %v693
        %724 = vmatpush.msra.mxu0 %v690
        %725 = vmatpush.msra.mxu0 %v687
        %726 = vmatpush.msra.mxu0 %v684
        %727 = vmatpush.msra.mxu0 %v681
        %728 = vmatpush.msra.mxu0 %v678
        %729 = vmatpush.msra.mxu0 %v675
        %730 = vmatpush.msra.mxu0 %v672
        %731 = vmatpush.msra.mxu0 %v669
        %732 = vmatpush.msra.mxu0 %v666
        %733 = vmatpush.msra.mxu0 %v663
        %734 = vmatpush.msra.mxu0 %v660
        %735 = vmatpush.msra.mxu0 %v657
        %736 = vmatpush.msra.mxu0 %v654
        %737 = vmatpush.msra.mxu0 %v651
        %738 = vmatpush.msra.mxu0 %v648
        %739 = vmatmul.f32.gmra.mxu0 %v645
        %v740 = vpop.f32.mrf.mxu0
        %v741 = vadd.f32 %v698, %v740
        %742 = vdwg.mxu0
        %743 = vmatpush.msra.mxu0 %v694
        %744 = vmatpush.msra.mxu0 %v691
        %745 = vmatpush.msra.mxu0 %v688
        %746 = vmatpush.msra.mxu0 %v685
        %747 = vmatpush.msra.mxu0 %v682
        %748 = vmatpush.msra.mxu0 %v679
        %749 = vmatpush.msra.mxu0 %v676
        %750 = vmatpush.msra.mxu0 %v673
        %751 = vmatpush.msra.mxu0 %v670
        %752 = vmatpush.msra.mxu0 %v667
        %753 = vmatpush.msra.mxu0 %v664
        %754 = vmatpush.msra.mxu0 %v661
        %755 = vmatpush.msra.mxu0 %v658
        %756 = vmatpush.msra.mxu0 %v655
        %757 = vmatpush.msra.mxu0 %v652
        %758 = vmatpush.msra.mxu0 %v649
        %759 = vmatmul.f32.gmra.mxu0 %v645
        %v760 = vpop.f32.mrf.mxu0
        %v761 = vadd.f32 %v699, %v760
        %762 = vdwg.mxu0
        %vm763 = vcmask 261120
        %v765 = vsel %vm763, %v721, 0
        %v768 = vsel %vm763, %v741, 0
        %770 = vmatpush.xpose.msra.mxu0 0.0
        %771 = vmatpush.xpose.msra.mxu0 0.0
        %772 = vmatpush.xpose.msra.mxu0 0.0
        %773 = vmatpush.xpose.msra.mxu0 0.0
        %774 = vmatpush.xpose.msra.mxu0 0.0
        %775 = vmatpush.xpose.msra.mxu0 0.0
        %776 = vmatpush.xpose.msra.mxu0 0.0
        %777 = vmatpush.xpose.msra.mxu0 0.0
        %778 = vmatpush.xpose.msra.mxu0 0.0
        %779 = vmatpush.xpose.msra.mxu0 0.0
        %780 = vmatpush.xpose.msra.mxu0 0.0
        %781 = vmatpush.xpose.msra.mxu0 0.0
        %782 = vmatpush.xpose.msra.mxu0 0.0
        %783 = vmatpush.xpose.msra.mxu0 0.0
        %784 = vmatpush.xpose.msra.mxu0 0.0
        %785 = vmatpush.xpose.msra.mxu0 %v768
        %786 = vmatmul.f32.gmra.mxu0 %v765
        %v787 = vpop.f32.mrf.mxu0
        %v788 = vadd.f32 0.0, %v787
        %789 = vdwg.mxu0
        %v790 = vmul.f32 %v788, 0.17677669
        %v792 = vperm.slane %v646, 0
        %v794 = vadd.f32 %v790, %v792
        %vm795 = vcmask 64512
        %v796 = vsel %vm795, %v794, -inf
        %797 = vmax.xlane.f32.xlu0 %v796
        %v798 = vpop.xlane.xlu0 %797
        %v799 = vsub.f32 %v794, %v798
        %v800 = vmul.f32 %v799, 1.442695
        %v801 = vpow.pop %v800
        %v802 = vsel %vm795, %v801, 0.0
        %803 = vadd.xlane.f32.xlu0 %v802
        %v804 = vpop.xlane.xlu0 %803
        %v805 = vrcp.pop %v804
        %v806 = vmul.f32 %v801, %v805
        %v808 = vsel %vm795, %v806, 0
        %810 = vmatpush.msra.mxu0 0.0
        %811 = vmatpush.msra.mxu0 0.0
        %812 = vmatpush.msra.mxu0 0.0
        %813 = vmatpush.msra.mxu0 0.0
        %814 = vmatpush.msra.mxu0 0.0
        %815 = vmatpush.msra.mxu0 0.0
        %816 = vmatpush.msra.mxu0 0.0
        %817 = vmatpush.msra.mxu0 0.0
        %818 = vmatpush.msra.mxu0 0.0
        %819 = vmatpush.msra.mxu0 0.0
        %820 = vmatpush.msra.mxu0 0.0
        %821 = vmatpush.msra.mxu0 0.0
        %822 = vmatpush.msra.mxu0 0.0
        %823 = vmatpush.msra.mxu0 0.0
        %824 = vmatpush.msra.mxu0 0.0
        %825 = vmatpush.msra.mxu0 %v761
        %826 = vmatmul.f32.gmra.mxu0 %v808
        %v827 = vpop.f32.mrf.mxu0
        %v828 = vadd.f32 0.0, %v827
        %829 = vdwg.mxu0
        %830 = vrot.lane.b32.xlu0 %v721, 96
        %v831 = vpop.permute.xlu0 %830
        %832 = vrot.lane.b32.xlu0 %v741, 96
        %v833 = vpop.permute.xlu0 %832
        %v834 = vsel %vm763, %v831, 0
        %v836 = vsel %vm763, %v833, 0
        %838 = vmatpush.xpose.msra.mxu0 0.0
        %839 = vmatpush.xpose.msra.mxu0 0.0
        %840 = vmatpush.xpose.msra.mxu0 0.0
        %841 = vmatpush.xpose.msra.mxu0 0.0
        %842 = vmatpush.xpose.msra.mxu0 0.0
        %843 = vmatpush.xpose.msra.mxu0 0.0
        %844 = vmatpush.xpose.msra.mxu0 0.0
        %845 = vmatpush.xpose.msra.mxu0 0.0
        %846 = vmatpush.xpose.msra.mxu0 0.0
        %847 = vmatpush.xpose.msra.mxu0 0.0
        %848 = vmatpush.xpose.msra.mxu0 0.0
        %849 = vmatpush.xpose.msra.mxu0 0.0
        %850 = vmatpush.xpose.msra.mxu0 0.0
        %851 = vmatpush.xpose.msra.mxu0 0.0
        %852 = vmatpush.xpose.msra.mxu0 0.0
        %853 = vmatpush.xpose.msra.mxu0 %v836
        %854 = vmatmul.f32.gmra.mxu0 %v834
        %v855 = vpop.f32.mrf.mxu0
        %v856 = vadd.f32 0.0, %v855
        %857 = vdwg.mxu0
        %v858 = vmul.f32 %v856, 0.17677669
        %v859 = vadd.f32 %v858, %v792
        %v860 = vsel %vm795, %v859, -inf
        %861 = vmax.xlane.f32.xlu0 %v860
        %v862 = vpop.xlane.xlu0 %861
        %v863 = vsub.f32 %v859, %v862
        %v864 = vmul.f32 %v863, 1.442695
        %v865 = vpow.pop %v864
        %v866 = vsel %vm795, %v865, 0.0
        %867 = vadd.xlane.f32.xlu0 %v866
        %v868 = vpop.xlane.xlu0 %867
        %v869 = vrcp.pop %v868
        %v870 = vmul.f32 %v865, %v869
        %872 = vrot.lane.b32.xlu0 %v761, 96
        %v873 = vpop.permute.xlu0 %872
        %v876 = vsel %vm795, %v870, 0
        %878 = vmatpush.msra.mxu0 0.0
        %879 = vmatpush.msra.mxu0 0.0
        %880 = vmatpush.msra.mxu0 0.0
        %881 = vmatpush.msra.mxu0 0.0
        %882 = vmatpush.msra.mxu0 0.0
        %883 = vmatpush.msra.mxu0 0.0
        %884 = vmatpush.msra.mxu0 0.0
        %885 = vmatpush.msra.mxu0 0.0
        %886 = vmatpush.msra.mxu0 0.0
        %887 = vmatpush.msra.mxu0 0.0
        %888 = vmatpush.msra.mxu0 0.0
        %889 = vmatpush.msra.mxu0 0.0
        %890 = vmatpush.msra.mxu0 0.0
        %891 = vmatpush.msra.mxu0 0.0
        %892 = vmatpush.msra.mxu0 0.0
        %893 = vmatpush.msra.mxu0 %v873
        %894 = vmatmul.f32.gmra.mxu0 %v876
        %v895 = vpop.f32.mrf.mxu0
        %v896 = vadd.f32 0.0, %v895
        %897 = vdwg.mxu0
        %898 = vrot.lane.b32.xlu0 %v721, 64
        %v899 = vpop.permute.xlu0 %898
        %900 = vrot.lane.b32.xlu0 %v741, 64
        %v901 = vpop.permute.xlu0 %900
        %v902 = vsel %vm763, %v899, 0
        %v904 = vsel %vm763, %v901, 0
        %906 = vmatpush.xpose.msra.mxu0 0.0
        %907 = vmatpush.xpose.msra.mxu0 0.0
        %908 = vmatpush.xpose.msra.mxu0 0.0
        %909 = vmatpush.xpose.msra.mxu0 0.0
        %910 = vmatpush.xpose.msra.mxu0 0.0
        %911 = vmatpush.xpose.msra.mxu0 0.0
        %912 = vmatpush.xpose.msra.mxu0 0.0
        %913 = vmatpush.xpose.msra.mxu0 0.0
        %914 = vmatpush.xpose.msra.mxu0 0.0
        %915 = vmatpush.xpose.msra.mxu0 0.0
        %916 = vmatpush.xpose.msra.mxu0 0.0
        %917 = vmatpush.xpose.msra.mxu0 0.0
        %918 = vmatpush.xpose.msra.mxu0 0.0
        %919 = vmatpush.xpose.msra.mxu0 0.0
        %920 = vmatpush.xpose.msra.mxu0 0.0
        %921 = vmatpush.xpose.msra.mxu0 %v904
        %922 = vmatmul.f32.gmra.mxu0 %v902
        %v923 = vpop.f32.mrf.mxu0
        %v924 = vadd.f32 0.0, %v923
        %925 = vdwg.mxu0
        %v926 = vmul.f32 %v924, 0.17677669
        %v927 = vadd.f32 %v926, %v792
        %v928 = vsel %vm795, %v927, -inf
        %929 = vmax.xlane.f32.xlu0 %v928
        %v930 = vpop.xlane.xlu0 %929
        %v931 = vsub.f32 %v927, %v930
        %v932 = vmul.f32 %v931, 1.442695
        %v933 = vpow.pop %v932
        %v934 = vsel %vm795, %v933, 0.0
        %935 = vadd.xlane.f32.xlu0 %v934
        %v936 = vpop.xlane.xlu0 %935
        %v937 = vrcp.pop %v936
        %v938 = vmul.f32 %v933, %v937
        %939 = vrot.lane.b32.xlu0 %v761, 64
        %v940 = vpop.permute.xlu0 %939
        %v943 = vsel %vm795, %v938, 0
        %945 = vmatpush.msra.mxu0 0.0
        %946 = vmatpush.msra.mxu0 0.0
        %947 = vmatpush.msra.mxu0 0.0
        %948 = vmatpush.msra.mxu0 0.0
        %949 = vmatpush.msra.mxu0 0.0
        %950 = vmatpush.msra.mxu0 0.0
        %951 = vmatpush.msra.mxu0 0.0
        %952 = vmatpush.msra.mxu0 0.0
        %953 = vmatpush.msra.mxu0 0.0
        %954 = vmatpush.msra.mxu0 0.0
        %955 = vmatpush.msra.mxu0 0.0
        %956 = vmatpush.msra.mxu0 0.0
        %957 = vmatpush.msra.mxu0 0.0
        %958 = vmatpush.msra.mxu0 0.0
        %959 = vmatpush.msra.mxu0 0.0
        %960 = vmatpush.msra.mxu0 %v940
        %961 = vmatmul.f32.gmra.mxu0 %v943
        %v962 = vpop.f32.mrf.mxu0
        %v963 = vadd.f32 0.0, %v962
        %964 = vdwg.mxu0
        %965 = vrot.lane.b32.xlu0 %v721, 32
        %v966 = vpop.permute.xlu0 %965
        %967 = vrot.lane.b32.xlu0 %v741, 32
        %v968 = vpop.permute.xlu0 %967
        %v969 = vsel %vm763, %v966, 0
        %v971 = vsel %vm763, %v968, 0
        %973 = vmatpush.xpose.msra.mxu0 0.0
        %974 = vmatpush.xpose.msra.mxu0 0.0
        %975 = vmatpush.xpose.msra.mxu0 0.0
        %976 = vmatpush.xpose.msra.mxu0 0.0
        %977 = vmatpush.xpose.msra.mxu0 0.0
        %978 = vmatpush.xpose.msra.mxu0 0.0
        %979 = vmatpush.xpose.msra.mxu0 0.0
        %980 = vmatpush.xpose.msra.mxu0 0.0
        %981 = vmatpush.xpose.msra.mxu0 0.0
        %982 = vmatpush.xpose.msra.mxu0 0.0
        %983 = vmatpush.xpose.msra.mxu0 0.0
        %984 = vmatpush.xpose.msra.mxu0 0.0
        %985 = vmatpush.xpose.msra.mxu0 0.0
        %986 = vmatpush.xpose.msra.mxu0 0.0
        %987 = vmatpush.xpose.msra.mxu0 0.0
        %988 = vmatpush.xpose.msra.mxu0 %v971
        %989 = vmatmul.f32.gmra.mxu0 %v969
        %v990 = vpop.f32.mrf.mxu0
        %v991 = vadd.f32 0.0, %v990
        %992 = vdwg.mxu0
        %v993 = vmul.f32 %v991, 0.17677669
        %v994 = vadd.f32 %v993, %v792
        %v995 = vsel %vm795, %v994, -inf
        %996 = vmax.xlane.f32.xlu0 %v995
        %v997 = vpop.xlane.xlu0 %996
        %v998 = vsub.f32 %v994, %v997
        %v999 = vmul.f32 %v998, 1.442695
        %v1000 = vpow.pop %v999
        %v1001 = vsel %vm795, %v1000, 0.0
        %1002 = vadd.xlane.f32.xlu0 %v1001
        %v1003 = vpop.xlane.xlu0 %1002
        %v1004 = vrcp.pop %v1003
        %v1005 = vmul.f32 %v1000, %v1004
        %1006 = vrot.lane.b32.xlu0 %v761, 32
        %v1007 = vpop.permute.xlu0 %1006
        %v1010 = vsel %vm795, %v1005, 0
        %1012 = vmatpush.msra.mxu0 0.0
        %1013 = vmatpush.msra.mxu0 0.0
        %1014 = vmatpush.msra.mxu0 0.0
        %1015 = vmatpush.msra.mxu0 0.0
        %1016 = vmatpush.msra.mxu0 0.0
        %1017 = vmatpush.msra.mxu0 0.0
        %1018 = vmatpush.msra.mxu0 0.0
        %1019 = vmatpush.msra.mxu0 0.0
        %1020 = vmatpush.msra.mxu0 0.0
        %1021 = vmatpush.msra.mxu0 0.0
        %1022 = vmatpush.msra.mxu0 0.0
        %1023 = vmatpush.msra.mxu0 0.0
        %1024 = vmatpush.msra.mxu0 0.0
        %1025 = vmatpush.msra.mxu0 0.0
        %1026 = vmatpush.msra.mxu0 0.0
        %1027 = vmatpush.msra.mxu0 %v1007
        %1028 = vmatmul.f32.gmra.mxu0 %v1010
        %v1029 = vpop.f32.mrf.mxu0
        %v1030 = vadd.f32 0.0, %v1029
        %1031 = vdwg.mxu0
        %1033 = vrot.lane.b32.xlu0 %v896, 32
        %v1034 = vpop.permute.xlu0 %1033
        %1037 = vrot.lane.b32.xlu0 %v963, 64
        %v1038 = vpop.permute.xlu0 %1037
        %1041 = vrot.lane.b32.xlu0 %v1030, 96
        %v1042 = vpop.permute.xlu0 %1041
        %v1044 = vsel %vm763, %v828, %v1034
        %vm1045 = vcmask 523264
        %v1046 = vsel %vm1045, %v1044, %v1038
        %vm1047 = vcmask 785408
        %v1048 = vsel %vm1047, %v1046, %v1042
        %v1049 = vld [vmem:[#allocation6] sm:$0xff]
        %v1050 = vld [vmem:[#allocation6 + $0x8] sm:$0xff]
        %v1051 = vld [vmem:[#allocation6 + $0x10] sm:$0xff]
        %v1052 = vld [vmem:[#allocation6 + $0x18] sm:$0xff]
        %v1053 = vld [vmem:[#allocation6 + $0x20] sm:$0xff]
        %v1054 = vld [vmem:[#allocation6 + $0x28] sm:$0xff]
        %v1055 = vld [vmem:[#allocation6 + $0x30] sm:$0xff]
        %v1056 = vld [vmem:[#allocation6 + $0x38] sm:$0xff]
        %v1057 = vld [vmem:[#allocation6 + $0x40] sm:$0xff]
        %v1058 = vld [vmem:[#allocation6 + $0x48] sm:$0xff]
        %v1059 = vld [vmem:[#allocation6 + $0x50] sm:$0xff]
        %v1060 = vld [vmem:[#allocation6 + $0x58] sm:$0xff]
        %v1061 = vld [vmem:[#allocation6 + $0x60] sm:$0xff]
        %v1062 = vld [vmem:[#allocation6 + $0x68] sm:$0xff]
        %v1063 = vld [vmem:[#allocation6 + $0x70] sm:$0xff]
        %v1064 = vld [vmem:[#allocation6 + $0x78] sm:$0xff]
        %v1065 = vld [vmem:[#allocation7] sm:$0x1]
        %v1067 = vperm.slane %v1065, 0
        %1069 = vmatpush.msra.mxu0 %v1064
        %1070 = vmatpush.msra.mxu0 %v1063
        %1071 = vmatpush.msra.mxu0 %v1062
        %1072 = vmatpush.msra.mxu0 %v1061
        %1073 = vmatpush.msra.mxu0 %v1060
        %1074 = vmatpush.msra.mxu0 %v1059
        %1075 = vmatpush.msra.mxu0 %v1058
        %1076 = vmatpush.msra.mxu0 %v1057
        %1077 = vmatpush.msra.mxu0 %v1056
        %1078 = vmatpush.msra.mxu0 %v1055
        %1079 = vmatpush.msra.mxu0 %v1054
        %1080 = vmatpush.msra.mxu0 %v1053
        %1081 = vmatpush.msra.mxu0 %v1052
        %1082 = vmatpush.msra.mxu0 %v1051
        %1083 = vmatpush.msra.mxu0 %v1050
        %1084 = vmatpush.msra.mxu0 %v1049
        %1085 = vmatmul.f32.gmra.mxu0 %v1048
        %v1086 = vpop.f32.mrf.mxu0
        %v1087 = vadd.f32 %v1067, %v1086
        %1088 = vdwg.mxu0
        %v1089 = vadd.f32 %v645, %v1087
        %v1090 = vld [vmem:[#allocation9] sm:$0x1]
        %v1091 = vld [vmem:[#allocation10] sm:$0x1]
        %1092 = vadd.xlane.f32.xlu0 %v1089
        %v1093 = vpop.xlane.xlu0 %1092
        %v1094 = vrcp.pop 128.0
        %v1095 = vmul.f32 128.0, %v1094
        %v1096 = vsub.f32 1.0, %v1095
        %v1097 = vmul.f32 %v1094, %v1096
        %v1098 = vadd.f32 %v1094, %v1097
        %vm1099 = vweird.f32 %v1094
        %v1100 = vsel %vm1099, %v1094, %v1098
        %v1101 = vmul.f32 %v1093, %v1100
        %v1102 = vsub.f32 %v1089, %v1101
        %v1103 = vmul.f32 %v1102, %v1102
        %1104 = vadd.xlane.f32.xlu0 %v1103
        %v1105 = vpop.xlane.xlu0 %1104
        %v1106 = vmul.f32 %v1105, %v1100
        %v1107 = vadd.f32 %v1106, 1e-05
        %v1108 = vrsqrt.pop %v1107
        %v1109 = vmul.f32 %v1108, %v1107
        %v1110 = vmul.f32 %v1109, %v1108
        %v1111 = vmul.f32 0.5, %v1110
        %v1112 = vsub.f32 1.5, %v1111
        %v1113 = vmul.f32 %v1108, %v1112
        %vm1114 = vweird.f32 %v1107
        %vm1115 = vweird.f32 %v1108
        %vm1116 = vmor %vm1114, %vm1115
        %v1117 = vsel %vm1116, %v1108, %v1113
        %v1118 = vmul.f32 %v1102, %v1117
        %v1120 = vperm.slane %v1090, 0
        %v1122 = vmul.f32 %v1118, %v1120
        %v1124 = vperm.slane %v1091, 0
        %v1126 = vadd.f32 %v1122, %v1124
        %v1127 = vld [vmem:[#allocation12] sm:$0xff]
        %v1128 = vld [vmem:[#allocation12 + $0x8] sm:$0xff]
        %v1129 = vld [vmem:[#allocation12 + $0x10] sm:$0xff]
        %v1130 = vld [vmem:[#allocation12 + $0x18] sm:$0xff]
        %v1131 = vld [vmem:[#allocation12 + $0x20] sm:$0xff]
        %v1132 = vld [vmem:[#allocation12 + $0x28] sm:$0xff]
        %v1133 = vld [vmem:[#allocation12 + $0x30] sm:$0xff]
        %v1134 = vld [vmem:[#allocation12 + $0x38] sm:$0xff]
        %v1135 = vld [vmem:[#allocation12 + $0x40] sm:$0xff]
        %v1136 = vld [vmem:[#allocation12 + $0x48] sm:$0xff]
        %v1137 = vld [vmem:[#allocation12 + $0x50] sm:$0xff]
        %v1138 = vld [vmem:[#allocation12 + $0x58] sm:$0xff]
        %v1139 = vld [vmem:[#allocation12 + $0x60] sm:$0xff]
        %v1140 = vld [vmem:[#allocation12 + $0x68] sm:$0xff]
        %v1141 = vld [vmem:[#allocation12 + $0x70] sm:$0xff]
        %v1142 = vld [vmem:[#allocation12 + $0x78] sm:$0xff]
        %v1143 = vld [vmem:[#allocation12 + $0x80] sm:$0xff]
        %v1144 = vld [vmem:[#allocation12 + $0x88] sm:$0xff]
        %v1145 = vld [vmem:[#allocation12 + $0x90] sm:$0xff]
        %v1146 = vld [vmem:[#allocation12 + $0x98] sm:$0xff]
        %v1147 = vld [vmem:[#allocation12 + $0xa0] sm:$0xff]
        %v1148 = vld [vmem:[#allocation12 + $0xa8] sm:$0xff]
        %v1149 = vld [vmem:[#allocation12 + $0xb0] sm:$0xff]
        %v1150 = vld [vmem:[#allocation12 + $0xb8] sm:$0xff]
        %v1151 = vld [vmem:[#allocation12 + $0xc0] sm:$0xff]
        %v1152 = vld [vmem:[#allocation12 + $0xc8] sm:$0xff]
        %v1153 = vld [vmem:[#allocation12 + $0xd0] sm:$0xff]
        %v1154 = vld [vmem:[#allocation12 + $0xd8] sm:$0xff]
        %v1155 = vld [vmem:[#allocation12 + $0xe0] sm:$0xff]
        %v1156 = vld [vmem:[#allocation12 + $0xe8] sm:$0xff]
        %v1157 = vld [vmem:[#allocation12 + $0xf0] sm:$0xff]
        %v1158 = vld [vmem:[#allocation12 + $0xf8] sm:$0xff]
        %v1159 = vld [vmem:[#allocation12 + $0x100] sm:$0xff]
        %v1160 = vld [vmem:[#allocation12 + $0x108] sm:$0xff]
        %v1161 = vld [vmem:[#allocation12 + $0x110] sm:$0xff]
        %v1162 = vld [vmem:[#allocation12 + $0x118] sm:$0xff]
        %v1163 = vld [vmem:[#allocation12 + $0x120] sm:$0xff]
        %v1164 = vld [vmem:[#allocation12 + $0x128] sm:$0xff]
        %v1165 = vld [vmem:[#allocation12 + $0x130] sm:$0xff]
        %v1166 = vld [vmem:[#allocation12 + $0x138] sm:$0xff]
        %v1167 = vld [vmem:[#allocation12 + $0x140] sm:$0xff]
        %v1168 = vld [vmem:[#allocation12 + $0x148] sm:$0xff]
        %v1169 = vld [vmem:[#allocation12 + $0x150] sm:$0xff]
        %v1170 = vld [vmem:[#allocation12 + $0x158] sm:$0xff]
        %v1171 = vld [vmem:[#allocation12 + $0x160] sm:$0xff]
        %v1172 = vld [vmem:[#allocation12 + $0x168] sm:$0xff]
        %v1173 = vld [vmem:[#allocation12 + $0x170] sm:$0xff]
        %v1174 = vld [vmem:[#allocation12 + $0x178] sm:$0xff]
        %v1175 = vld [vmem:[#allocation12 + $0x180] sm:$0xff]
        %v1176 = vld [vmem:[#allocation12 + $0x188] sm:$0xff]
        %v1177 = vld [vmem:[#allocation12 + $0x190] sm:$0xff]
        %v1178 = vld [vmem:[#allocation12 + $0x198] sm:$0xff]
        %v1179 = vld [vmem:[#allocation12 + $0x1a0] sm:$0xff]
        %v1180 = vld [vmem:[#allocation12 + $0x1a8] sm:$0xff]
        %v1181 = vld [vmem:[#allocation12 + $0x1b0] sm:$0xff]
        %v1182 = vld [vmem:[#allocation12 + $0x1b8] sm:$0xff]
        %v1183 = vld [vmem:[#allocation12 + $0x1c0] sm:$0xff]
        %v1184 = vld [vmem:[#allocation12 + $0x1c8] sm:$0xff]
        %v1185 = vld [vmem:[#allocation12 + $0x1d0] sm:$0xff]
        %v1186 = vld [vmem:[#allocation12 + $0x1d8] sm:$0xff]
        %v1187 = vld [vmem:[#allocation12 + $0x1e0] sm:$0xff]
        %v1188 = vld [vmem:[#allocation12 + $0x1e8] sm:$0xff]
        %v1189 = vld [vmem:[#allocation12 + $0x1f0] sm:$0xff]
        %v1190 = vld [vmem:[#allocation12 + $0x1f8] sm:$0xff]
        %v1191 = vld [vmem:[%s9] sm:$0xf]
        %v1193 = vperm.slane %v1191, 0
        %v1194 = vperm.slane %v1191, 1
        %v1195 = vperm.slane %v1191, 2
        %v1196 = vperm.slane %v1191, 3
        %1201 = vmatpush.msra.mxu0 %v1187
        %1202 = vmatpush.msra.mxu0 %v1183
        %1203 = vmatpush.msra.mxu0 %v1179
        %1204 = vmatpush.msra.mxu0 %v1175
        %1205 = vmatpush.msra.mxu0 %v1171
        %1206 = vmatpush.msra.mxu0 %v1167
        %1207 = vmatpush.msra.mxu0 %v1163
        %1208 = vmatpush.msra.mxu0 %v1159
        %1209 = vmatpush.msra.mxu0 %v1155
        %1210 = vmatpush.msra.mxu0 %v1151
        %1211 = vmatpush.msra.mxu0 %v1147
        %1212 = vmatpush.msra.mxu0 %v1143
        %1213 = vmatpush.msra.mxu0 %v1139
        %1214 = vmatpush.msra.mxu0 %v1135
        %1215 = vmatpush.msra.mxu0 %v1131
        %1216 = vmatpush.msra.mxu0 %v1127
        %1217 = vmatmul.f32.gmra.mxu0 %v1126
        %v1218 = vpop.f32.mrf.mxu0
        %v1219 = vadd.f32 %v1193, %v1218
        %1220 = vdwg.mxu0
        %1221 = vmatpush.msra.mxu0 %v1188
        %1222 = vmatpush.msra.mxu0 %v1184
        %1223 = vmatpush.msra.mxu0 %v1180
        %1224 = vmatpush.msra.mxu0 %v1176
        %1225 = vmatpush.msra.mxu0 %v1172
        %1226 = vmatpush.msra.mxu0 %v1168
        %1227 = vmatpush.msra.mxu0 %v1164
        %1228 = vmatpush.msra.mxu0 %v1160
        %1229 = vmatpush.msra.mxu0 %v1156
        %1230 = vmatpush.msra.mxu0 %v1152
        %1231 = vmatpush.msra.mxu0 %v1148
        %1232 = vmatpush.msra.mxu0 %v1144
        %1233 = vmatpush.msra.mxu0 %v1140
        %1234 = vmatpush.msra.mxu0 %v1136
        %1235 = vmatpush.msra.mxu0 %v1132
        %1236 = vmatpush.msra.mxu0 %v1128
        %1237 = vmatmul.f32.gmra.mxu0 %v1126
        %v1238 = vpop.f32.mrf.mxu0
        %v1239 = vadd.f32 %v1194, %v1238
        %1240 = vdwg.mxu0
        %1241 = vmatpush.msra.mxu0 %v1189
        %1242 = vmatpush.msra.mxu0 %v1185
        %1243 = vmatpush.msra.mxu0 %v1181
        %1244 = vmatpush.msra.mxu0 %v1177
        %1245 = vmatpush.msra.mxu0 %v1173
        %1246 = vmatpush.msra.mxu0 %v1169
        %1247 = vmatpush.msra.mxu0 %v1165
        %1248 = vmatpush.msra.mxu0 %v1161
        %1249 = vmatpush.msra.mxu0 %v1157
        %1250 = vmatpush.msra.mxu0 %v1153
        %1251 = vmatpush.msra.mxu0 %v1149
        %1252 = vmatpush.msra.mxu0 %v1145
        %1253 = vmatpush.msra.mxu0 %v1141
        %1254 = vmatpush.msra.mxu0 %v1137
        %1255 = vmatpush.msra.mxu0 %v1133
        %1256 = vmatpush.msra.mxu0 %v1129
        %1257 = vmatmul.f32.gmra.mxu0 %v1126
        %v1258 = vpop.f32.mrf.mxu0
        %v1259 = vadd.f32 %v1195, %v1258
        %1260 = vdwg.mxu0
        %1261 = vmatpush.msra.mxu0 %v1190
        %1262 = vmatpush.msra.mxu0 %v1186
        %1263 = vmatpush.msra.mxu0 %v1182
        %1264 = vmatpush.msra.mxu0 %v1178
        %1265 = vmatpush.msra.mxu0 %v1174
        %1266 = vmatpush.msra.mxu0 %v1170
        %1267 = vmatpush.msra.mxu0 %v1166
        %1268 = vmatpush.msra.mxu0 %v1162
        %1269 = vmatpush.msra.mxu0 %v1158
        %1270 = vmatpush.msra.mxu0 %v1154
        %1271 = vmatpush.msra.mxu0 %v1150
        %1272 = vmatpush.msra.mxu0 %v1146
        %1273 = vmatpush.msra.mxu0 %v1142
        %1274 = vmatpush.msra.mxu0 %v1138
        %1275 = vmatpush.msra.mxu0 %v1134
        %1276 = vmatpush.msra.mxu0 %v1130
        %1277 = vmatmul.f32.gmra.mxu0 %v1126
        %v1278 = vpop.f32.mrf.mxu0
        %v1279 = vadd.f32 %v1196, %v1278
        %1280 = vdwg.mxu0
        %v1281 = vmax.f32 %v1219, 0.0
        %v1282 = vmax.f32 %v1239, 0.0
        %v1283 = vmax.f32 %v1259, 0.0
        %v1284 = vmax.f32 %v1279, 0.0
        %v1285 = vld [vmem:[#allocation13] sm:$0xff]
        %v1286 = vld [vmem:[#allocation13 + $0x8] sm:$0xff]
        %v1287 = vld [vmem:[#allocation13 + $0x10] sm:$0xff]
        %v1288 = vld [vmem:[#allocation13 + $0x18] sm:$0xff]
        %v1289 = vld [vmem:[#allocation13 + $0x20] sm:$0xff]
        %v1290 = vld [vmem:[#allocation13 + $0x28] sm:$0xff]
        %v1291 = vld [vmem:[#allocation13 + $0x30] sm:$0xff]
        %v1292 = vld [vmem:[#allocation13 + $0x38] sm:$0xff]
        %v1293 = vld [vmem:[#allocation13 + $0x40] sm:$0xff]
        %v1294 = vld [vmem:[#allocation13 + $0x48] sm:$0xff]
        %v1295 = vld [vmem:[#allocation13 + $0x50] sm:$0xff]
        %v1296 = vld [vmem:[#allocation13 + $0x58] sm:$0xff]
        %v1297 = vld [vmem:[#allocation13 + $0x60] sm:$0xff]
        %v1298 = vld [vmem:[#allocation13 + $0x68] sm:$0xff]
        %v1299 = vld [vmem:[#allocation13 + $0x70] sm:$0xff]
        %v1300 = vld [vmem:[#allocation13 + $0x78] sm:$0xff]
        %v1301 = vld [vmem:[#allocation13 + $0x80] sm:$0xff]
        %v1302 = vld [vmem:[#allocation13 + $0x88] sm:$0xff]
        %v1303 = vld [vmem:[#allocation13 + $0x90] sm:$0xff]
        %v1304 = vld [vmem:[#allocation13 + $0x98] sm:$0xff]
        %v1305 = vld [vmem:[#allocation13 + $0xa0] sm:$0xff]
        %v1306 = vld [vmem:[#allocation13 + $0xa8] sm:$0xff]
        %v1307 = vld [vmem:[#allocation13 + $0xb0] sm:$0xff]
        %v1308 = vld [vmem:[#allocation13 + $0xb8] sm:$0xff]
        %v1309 = vld [vmem:[#allocation13 + $0xc0] sm:$0xff]
        %v1310 = vld [vmem:[#allocation13 + $0xc8] sm:$0xff]
        %v1311 = vld [vmem:[#allocation13 + $0xd0] sm:$0xff]
        %v1312 = vld [vmem:[#allocation13 + $0xd8] sm:$0xff]
        %v1313 = vld [vmem:[#allocation13 + $0xe0] sm:$0xff]
        %v1314 = vld [vmem:[#allocation13 + $0xe8] sm:$0xff]
        %v1315 = vld [vmem:[#allocation13 + $0xf0] sm:$0xff]
        %v1316 = vld [vmem:[#allocation13 + $0xf8] sm:$0xff]
        %v1317 = vld [vmem:[#allocation13 + $0x100] sm:$0xff]
        %v1318 = vld [vmem:[#allocation13 + $0x108] sm:$0xff]
        %v1319 = vld [vmem:[#allocation13 + $0x110] sm:$0xff]
        %v1320 = vld [vmem:[#allocation13 + $0x118] sm:$0xff]
        %v1321 = vld [vmem:[#allocation13 + $0x120] sm:$0xff]
        %v1322 = vld [vmem:[#allocation13 + $0x128] sm:$0xff]
        %v1323 = vld [vmem:[#allocation13 + $0x130] sm:$0xff]
        %v1324 = vld [vmem:[#allocation13 + $0x138] sm:$0xff]
        %v1325 = vld [vmem:[#allocation13 + $0x140] sm:$0xff]
        %v1326 = vld [vmem:[#allocation13 + $0x148] sm:$0xff]
        %v1327 = vld [vmem:[#allocation13 + $0x150] sm:$0xff]
        %v1328 = vld [vmem:[#allocation13 + $0x158] sm:$0xff]
        %v1329 = vld [vmem:[#allocation13 + $0x160] sm:$0xff]
        %v1330 = vld [vmem:[#allocation13 + $0x168] sm:$0xff]
        %v1331 = vld [vmem:[#allocation13 + $0x170] sm:$0xff]
        %v1332 = vld [vmem:[#allocation13 + $0x178] sm:$0xff]
        %v1333 = vld [vmem:[#allocation13 + $0x180] sm:$0xff]
        %v1334 = vld [vmem:[#allocation13 + $0x188] sm:$0xff]
        %v1335 = vld [vmem:[#allocation13 + $0x190] sm:$0xff]
        %v1336 = vld [vmem:[#allocation13 + $0x198] sm:$0xff]
        %v1337 = vld [vmem:[#allocation13 + $0x1a0] sm:$0xff]
        %v1338 = vld [vmem:[#allocation13 + $0x1a8] sm:$0xff]
        %v1339 = vld [vmem:[#allocation13 + $0x1b0] sm:$0xff]
        %v1340 = vld [vmem:[#allocation13 + $0x1b8] sm:$0xff]
        %v1341 = vld [vmem:[#allocation13 + $0x1c0] sm:$0xff]
        %v1342 = vld [vmem:[#allocation13 + $0x1c8] sm:$0xff]
        %v1343 = vld [vmem:[#allocation13 + $0x1d0] sm:$0xff]
        %v1344 = vld [vmem:[#allocation13 + $0x1d8] sm:$0xff]
        %v1345 = vld [vmem:[#allocation13 + $0x1e0] sm:$0xff]
        %v1346 = vld [vmem:[#allocation13 + $0x1e8] sm:$0xff]
        %v1347 = vld [vmem:[#allocation13 + $0x1f0] sm:$0xff]
        %v1348 = vld [vmem:[#allocation13 + $0x1f8] sm:$0xff]
        %v1349 = vld [vmem:[#allocation15] sm:$0x1]
        %v1351 = vperm.slane %v1349, 0
        %1353 = vmatpush.msra.mxu0 %v1300
        %1354 = vmatpush.msra.mxu0 %v1299
        %1355 = vmatpush.msra.mxu0 %v1298
        %1356 = vmatpush.msra.mxu0 %v1297
        %1357 = vmatpush.msra.mxu0 %v1296
        %1358 = vmatpush.msra.mxu0 %v1295
        %1359 = vmatpush.msra.mxu0 %v1294
        %1360 = vmatpush.msra.mxu0 %v1293
        %1361 = vmatpush.msra.mxu0 %v1292
        %1362 = vmatpush.msra.mxu0 %v1291
        %1363 = vmatpush.msra.mxu0 %v1290
        %1364 = vmatpush.msra.mxu0 %v1289
        %1365 = vmatpush.msra.mxu0 %v1288
        %1366 = vmatpush.msra.mxu0 %v1287
        %1367 = vmatpush.msra.mxu0 %v1286
        %1368 = vmatpush.msra.mxu0 %v1285
        %1369 = vmatmul.f32.gmra.mxu0 %v1281
        %v1370 = vpop.f32.mrf.mxu0
        %v1371 = vadd.f32 %v1351, %v1370
        %1372 = vdwg.mxu0
        %1373 = vmatpush.msra.mxu0 %v1316
        %1374 = vmatpush.msra.mxu0 %v1315
        %1375 = vmatpush.msra.mxu0 %v1314
        %1376 = vmatpush.msra.mxu0 %v1313
        %1377 = vmatpush.msra.mxu0 %v1312
        %1378 = vmatpush.msra.mxu0 %v1311
        %1379 = vmatpush.msra.mxu0 %v1310
        %1380 = vmatpush.msra.mxu0 %v1309
        %1381 = vmatpush.msra.mxu0 %v1308
        %1382 = vmatpush.msra.mxu0 %v1307
        %1383 = vmatpush.msra.mxu0 %v1306
        %1384 = vmatpush.msra.mxu0 %v1305
        %1385 = vmatpush.msra.mxu0 %v1304
        %1386 = vmatpush.msra.mxu0 %v1303
        %1387 = vmatpush.msra.mxu0 %v1302
        %1388 = vmatpush.msra.mxu0 %v1301
        %1389 = vmatmul.f32.gmra.mxu0 %v1282
        %v1390 = vpop.f32.mrf.mxu0
        %v1391 = vadd.f32 %v1371, %v1390
        %1392 = vdwg.mxu0
        %1393 = vmatpush.msra.mxu0 %v1332
        %1394 = vmatpush.msra.mxu0 %v1331
        %1395 = vmatpush.msra.mxu0 %v1330
        %1396 = vmatpush.msra.mxu0 %v1329
        %1397 = vmatpush.msra.mxu0 %v1328
        %1398 = vmatpush.msra.mxu0 %v1327
        %1399 = vmatpush.msra.mxu0 %v1326
        %1400 = vmatpush.msra.mxu0 %v1325
        %1401 = vmatpush.msra.mxu0 %v1324
        %1402 = vmatpush.msra.mxu0 %v1323
        %1403 = vmatpush.msra.mxu0 %v1322
        %1404 = vmatpush.msra.mxu0 %v1321
        %1405 = vmatpush.msra.mxu0 %v1320
        %1406 = vmatpush.msra.mxu0 %v1319
        %1407 = vmatpush.msra.mxu0 %v1318
        %1408 = vmatpush.msra.mxu0 %v1317
        %1409 = vmatmul.f32.gmra.mxu0 %v1283
        %v1410 = vpop.f32.mrf.mxu0
        %v1411 = vadd.f32 %v1391, %v1410
        %1412 = vdwg.mxu0
        %1413 = vmatpush.msra.mxu0 %v1348
        %1414 = vmatpush.msra.mxu0 %v1347
        %1415 = vmatpush.msra.mxu0 %v1346
        %1416 = vmatpush.msra.mxu0 %v1345
        %1417 = vmatpush.msra.mxu0 %v1344
        %1418 = vmatpush.msra.mxu0 %v1343
        %1419 = vmatpush.msra.mxu0 %v1342
        %1420 = vmatpush.msra.mxu0 %v1341
        %1421 = vmatpush.msra.mxu0 %v1340
        %1422 = vmatpush.msra.mxu0 %v1339
        %1423 = vmatpush.msra.mxu0 %v1338
        %1424 = vmatpush.msra.mxu0 %v1337
        %1425 = vmatpush.msra.mxu0 %v1336
        %1426 = vmatpush.msra.mxu0 %v1335
        %1427 = vmatpush.msra.mxu0 %v1334
        %1428 = vmatpush.msra.mxu0 %v1333
        %1429 = vmatmul.f32.gmra.mxu0 %v1284
        %v1430 = vpop.f32.mrf.mxu0
        %v1431 = vadd.f32 %v1411, %v1430
        %1432 = vdwg.mxu0
        %v1433 = vadd.f32 %v1126, %v1431
        %v1434 = vld [vmem:[#allocation16] sm:$0x1]
        %v1435 = vld [vmem:[#allocation18] sm:$0x1]
        %1436 = vadd.xlane.f32.xlu0 %v1433
        %v1437 = vpop.xlane.xlu0 %1436
        %v1438 = vmul.f32 %v1437, %v1100
        %v1439 = vsub.f32 %v1433, %v1438
        %v1440 = vmul.f32 %v1439, %v1439
        %1441 = vadd.xlane.f32.xlu0 %v1440
        %v1442 = vpop.xlane.xlu0 %1441
        %v1443 = vmul.f32 %v1442, %v1100
        %v1444 = vadd.f32 %v1443, 1e-05
        %v1445 = vrsqrt.pop %v1444
        %v1446 = vmul.f32 %v1445, %v1444
        %v1447 = vmul.f32 %v1446, %v1445
        %v1448 = vmul.f32 0.5, %v1447
        %v1449 = vsub.f32 1.5, %v1448
        %v1450 = vmul.f32 %v1445, %v1449
        %vm1451 = vweird.f32 %v1444
        %vm1452 = vweird.f32 %v1445
        %vm1453 = vmor %vm1451, %vm1452
        %v1454 = vsel %vm1453, %v1445, %v1450
        %v1455 = vmul.f32 %v1439, %v1454
        %v1457 = vperm.slane %v1434, 0
        %v1459 = vmul.f32 %v1455, %v1457
        %v1461 = vperm.slane %v1435, 0
        %v1463 = vadd.f32 %v1459, %v1461
        %1464 = vst [vmem:[%s644] sm:$0xff] %v1463
        %p1465 = scmp.lt.s32.totalorder %s31, 1
        %s1466 = scalar_select %p1465, %s31, 1
        %s1467 = smul.addr %s1466, 8
        %s1468 = scalar_lea.vmem %s14, %s1467
        // Predicated region
        $region121: #{desa_forward.7} parent=75 // pred_check
          %p1469 = pneg %p353
        $region122: #{desa_forward.7} parent=75 // pred_check_branch
          %1471 = sbr.rel (%p1469) target = $region124
        $region123: #{desa_forward.7} parent=75 // pred_region
          _
        $region124: #{desa_forward.7} parent=75 // pred_fallthru
          _
      $region76: #{desa_forward.7} parent=5 // pred_fallthru
        _
      %p1472 = scmp.le.s32.totalorder 2, %s26
      // Predicated region
      $region125: #{desa_forward.7} parent=5 // pred_check
        %p1473 = pneg %p1472
      $region126: #{desa_forward.7} parent=5 // pred_check_branch
        %1475 = sbr.rel (%p1473) target = $region128
      $region127: #{desa_forward.7} parent=5 // pred_region
        %s1476 = ssub.s32 %s26, 2
        // Predicated region
        $region129: #{desa_forward.7} parent=127 // pred_check
          %p1477 = pneg %p359
        $region130: #{desa_forward.7} parent=127 // pred_check_branch
          %1479 = sbr.rel (%p1477) target = $region132
        $region131: #{desa_forward.7} parent=127 // pred_region
          %p1480 = scmp.lt.s32.totalorder %s32, 1
          %s1481 = scalar_select %p1480, %s32, 1
          %s1482 = smul.addr %s1481, 8
          %s1483 = scalar_lea.vmem %s14, %s1482
        $region132: #{desa_forward.7} parent=127 // pred_fallthru
          _
      $region128: #{desa_forward.7} parent=5 // pred_fallthru
        _
    $region6: #{desa_forward.7} parent=1 // loop_footer
      %s30 = sadd.s32 1, %s26
    $region7: #{desa_forward.7} parent=1 // loop_footer_branch
      %25 = sbr.rel target = $region3
    $region8: #{desa_forward.7} parent=1 // loop_exit
      _
    %1484 = vsyncpa [#allocation3], 1
    %s1485 = scalar_lea.sflag [#allocation3], 1
    %1486 = vsyncpa %s1485, 1
    %1487 = vsyncpa [#allocation5], 1
    %1488 = vsyncpa [#allocation8], 1
    %1489 = vsyncpa [#allocation11], 1
    %1490 = vsyncpa [#allocation14], 1
    %1491 = vsyncpa [#allocation17], 1

// kernel: desa_forward.10
$region0: #{desa_forward.10}
  #allocation0 [shape = 'u32[]', space=smem, size = 0x4, offset = 0x4, fixed_abs, tag = 'smem constant byte address 0x4 - core index']
  #allocation1 [shape = 'u32[72,128]{1,0:T(1,128)}', space=vmem, size = 0x9000, scoped, tag = 'internal scratch']
  %s0 = inlined_call_operand.vmem [shape: f32[2,8,128], index: 0, kind: input, shape index: {}]
  %s1 = inlined_call_operand.vmem [shape: f32[2,1,8], index: 1, kind: input, shape index: {}]
  %s2 = inlined_call_operand.hbm [shape: f32[128,384], index: 2, kind: input, shape index: {}]
  %s3 = inlined_call_operand.vmem [shape: f32[1,384], index: 3, kind: input, shape index: {}]
  %s4 = inlined_call_operand.hbm [shape: f32[128,128], index: 4, kind: input, shape index: {}]
  %s5 = inlined_call_operand.hbm [shape: f32[1,128], index: 5, kind: input, shape index: {}]
  %s6 = inlined_call_operand.hbm [shape: f32[1,128], index: 6, kind: input, shape index: {}]
  %s7 = inlined_call_operand.hbm [shape: f32[1,128], index: 7, kind: input, shape index: {}]
  %s8 = inlined_call_operand.hbm [shape: f32[128,512], index: 8, kind: input, shape index: {}]
  %s9 = inlined_call_operand.vmem [shape: f32[1,512], index: 9, kind: input, shape index: {}]
  %s10 = inlined_call_operand.hbm [shape: f32[512,128], index: 10, kind: input, shape index: {}]
  %s11 = inlined_call_operand.hbm [shape: f32[1,128], index: 11, kind: input, shape index: {}]
  %s12 = inlined_call_operand.hbm [shape: f32[1,128], index: 12, kind: input, shape index: {}]
  %s13 = inlined_call_operand.hbm [shape: f32[1,128], index: 13, kind: input, shape index: {}]
  %s14 = inlined_call_operand.vmem [shape: f32[2,8,128], index: 14, kind: output, shape index: {}]
  %s15 = sld [smem:[#allocation0]]
  $region129: #{desa_forward.10} parent=0
    _
  %s17 = ssub.s32 1, %s15
  %s18 = scalar_select 0, %s17, %s15
  $region1: #{desa_forward.10} parent=0
    #allocation2 [shape = 'u8[196608]{0}', space=vmem, size = 0x30000, scoped, tag = 'input window, operand 2, single buffered']
    #allocation3 [shape = 's32[2]{0}', space=sflag, size = 0x8, scoped, tag = 'scoped memory for desa_forward.10']
    #allocation4 [shape = 'u8[65536]{0}', space=vmem, size = 0x10000, scoped, tag = 'input window, operand 4, single buffered']
    #allocation5 [shape = 's32[1]{0}', space=sflag, size = 0x4, scoped, tag = 'scoped memory for desa_forward.10']
    #allocation6 [shape = 'u8[512]{0}', space=vmem, size = 0x400, scoped, tag = 'input window, operand 5, single buffered']
    #allocation7 [shape = 'u8[512]{0}', space=vmem, size = 0x400, scoped, tag = 'input window, operand 6, single buffered']
    #allocation8 [shape = 's32[1]{0}', space=sflag, size = 0x4, scoped, tag = 'scoped memory for desa_forward.10']
    #allocation9 [shape = 'u8[512]{0}', space=vmem, size = 0x400, scoped, tag = 'input window, operand 7, single buffered']
    #allocation10 [shape = 'u8[262144]{0}', space=vmem, size = 0x40000, scoped, tag = 'input window, operand 8, single buffered']
    #allocation11 [shape = 's32[1]{0}', space=sflag, size = 0x4, scoped, tag = 'scoped memory for desa_forward.10']
    #allocation12 [shape = 'u8[262144]{0}', space=vmem, size = 0x40000, scoped, tag = 'input window, operand 10, single buffered']
    #allocation13 [shape = 'u8[512]{0}', space=vmem, size = 0x400, scoped, tag = 'input window, operand 11, single buffered']
    #allocation14 [shape = 's32[1]{0}', space=sflag, size = 0x4, scoped, tag = 'scoped memory for desa_forward.10']
    #allocation15 [shape = 'u8[512]{0}', space=vmem, size = 0x400, scoped, tag = 'input window, operand 12, single buffered']
    #allocation16 [shape = 'u8[512]{0}', space=vmem, size = 0x400, scoped, tag = 'input window, operand 13, single buffered']
    #allocation17 [shape = 's32[1]{0}', space=sflag, size = 0x4, scoped, tag = 'scoped memory for desa_forward.10']
    %19 = vsyncpa [#allocation3], 0
    %20 = vsyncpa [#allocation5], 0
    %21 = vsyncpa [#allocation8], 0
    %22 = vsyncpa [#allocation11], 0
    %23 = vsyncpa [#allocation14], 0
    %24 = vsyncpa [#allocation17], 0
    loop: start=0, step=1, limit=4
    $region2: #{desa_forward.10} parent=1 // loop_pre_header
      _
    $region3: #{desa_forward.10} parent=1 // loop_header
      %s26 = sphi 0, %s30
      %p27 = scmp.ge.s32.totalorder %s26, 4
      %s36 = sphi 0, %s38
      %s39 = sphi 0, %s36
      %s40 = sphi 0, %s39
      %s56 = sphi 0, %s40
      %s62 = sphi 0, %s64
      %s65 = sphi 0, %s62
      %s66 = sphi 0, %s65
      %s82 = sphi 0, %s66
      %s86 = sphi 0, %s86
      %s88 = sphi 0, %s86
      %s89 = sphi 0, %s88
      %s103 = sphi 0, %s89
      %s107 = sphi 0, %s107
      %s109 = sphi 0, %s107
      %s110 = sphi 0, %s109
      %s124 = sphi 0, %s110
      %s128 = sphi 0, %s128
      %s130 = sphi 0, %s128
      %s131 = sphi 0, %s130
      %s145 = sphi 0, %s131
      %s149 = sphi 0, %s149
      %s151 = sphi 0, %s149
      %s152 = sphi 0, %s151
      %s166 = sphi 0, %s152
      %s170 = sphi 0, %s170
      %s172 = sphi 0, %s170
      %s173 = sphi 0, %s172
      %s187 = sphi 0, %s173
      %s191 = sphi 0, %s191
      %s193 = sphi 0, %s191
      %s194 = sphi 0, %s193
      %s208 = sphi 0, %s194
      %s212 = sphi 0, %s212
      %s214 = sphi 0, %s212
      %s215 = sphi 0, %s214
      %s229 = sphi 0, %s215
      %s233 = sphi 0, %s233
      %s235 = sphi 0, %s233
      %s236 = sphi 0, %s235
      %s250 = sphi 0, %s236
      %s254 = sphi 0, %s254
      %s256 = sphi 0, %s254
      %s257 = sphi 0, %s256
      %s271 = sphi 0, %s257
      %s275 = sphi 0, %s275
      %s277 = sphi 0, %s275
      %s278 = sphi 0, %s277
      %s292 = sphi 0, %s278
      %s296 = sphi 0, %s296
      %s298 = sphi 0, %s296
      %s299 = sphi 0, %s298
      %s313 = sphi 0, %s299
      %s317 = sphi 0, %s317
      %s319 = sphi 0, %s317
      %s320 = sphi 0, %s319
      %s334 = sphi 0, %s320
      %s340 = sphi 0, %s342
      %s343 = sphi 0, %s340
      %s344 = sphi 0, %s343
      %s360 = sphi 0, %s344
    $region4: #{desa_forward.10} parent=1 // loop_header_branch
      %29 = sbr.rel (%p27) target = $region8
    $region5: #{desa_forward.10} parent=1 // loop_body
      %s31 = ssub.s32 %s26, 1
      %s32 = ssub.s32 %s26, 2
      %s33 = sadd.s32 %s26, 1
      %s34 = ssub.s32 %s26, %s33
      %p35 = scmp.eq.s32.totalorder %s34, 0
      %s37 = sadd.s32 %s36, 1
      %s38 = scalar_select %p35, %s36, %s37
      %p41 = pneg %p35
      %p42 = scmp.eq.s32.totalorder %s26, 1
      %p43 = por %p41, %p42
      %p44 = scmp.ne.s32.totalorder %s36, %s39
      %p45 = scmp.eq.s32.totalorder %s26, 0
      %p46 = por %p44, %p45
      %p47 = scmp.ne.s32.totalorder %s36, %s39
      %p48 = scmp.eq.s32.totalorder %s31, 1
      %p49 = por %p47, %p48
      %p50 = scmp.ne.s32.totalorder %s39, %s40
      %p51 = scmp.eq.s32.totalorder %s31, 0
      %p52 = por %p50, %p51
      %p53 = scmp.ne.s32.totalorder %s39, %s40
      %p54 = scmp.eq.s32.totalorder %s32, 1
      %p55 = por %p53, %p54
      %p57 = scmp.ne.s32.totalorder %s40, %s56
      %p58 = scmp.eq.s32.totalorder %s32, 0
      %p59 = por %p57, %p58
      %s60 = ssub.s32 %s26, %s33
      %p61 = scmp.eq.s32.totalorder %s60, 0
      %s63 = sadd.s32 %s62, 1
      %s64 = scalar_select %p61, %s62, %s63
      %p67 = pneg %p61
      %p68 = scmp.eq.s32.totalorder %s26, 1
      %p69 = por %p67, %p68
      %p70 = scmp.ne.s32.totalorder %s62, %s65
      %p71 = scmp.eq.s32.totalorder %s26, 0
      %p72 = por %p70, %p71
      %p73 = scmp.ne.s32.totalorder %s62, %s65
      %p74 = scmp.eq.s32.totalorder %s31, 1
      %p75 = por %p73, %p74
      %p76 = scmp.ne.s32.totalorder %s65, %s66
      %p77 = scmp.eq.s32.totalorder %s31, 0
      %p78 = por %p76, %p77
      %p79 = scmp.ne.s32.totalorder %s65, %s66
      %p80 = scmp.eq.s32.totalorder %s32, 1
      %p81 = por %p79, %p80
      %p83 = scmp.ne.s32.totalorder %s66, %s82
      %p84 = scmp.eq.s32.totalorder %s32, 0
      %p85 = por %p83, %p84
      %s87 = sadd.s32 %s86, 1
      %p90 = scmp.eq.s32.totalorder %s26, 1
      %p91 = scmp.ne.s32.totalorder %s86, %s88
      %p92 = scmp.eq.s32.totalorder %s26, 0
      %p93 = por %p91, %p92
      %p94 = scmp.ne.s32.totalorder %s86, %s88
      %p95 = scmp.eq.s32.totalorder %s31, 1
      %p96 = por %p94, %p95
      %p97 = scmp.ne.s32.totalorder %s88, %s89
      %p98 = scmp.eq.s32.totalorder %s31, 0
      %p99 = por %p97, %p98
      %p100 = scmp.ne.s32.totalorder %s88, %s89
      %p101 = scmp.eq.s32.totalorder %s32, 1
      %p102 = por %p100, %p101
      %p104 = scmp.ne.s32.totalorder %s89, %s103
      %p105 = scmp.eq.s32.totalorder %s32, 0
      %p106 = por %p104, %p105
      %s108 = sadd.s32 %s107, 1
      %p111 = scmp.eq.s32.totalorder %s26, 1
      %p112 = scmp.ne.s32.totalorder %s107, %s109
      %p113 = scmp.eq.s32.totalorder %s26, 0
      %p114 = por %p112, %p113
      %p115 = scmp.ne.s32.totalorder %s107, %s109
      %p116 = scmp.eq.s32.totalorder %s31, 1
      %p117 = por %p115, %p116
      %p118 = scmp.ne.s32.totalorder %s109, %s110
      %p119 = scmp.eq.s32.totalorder %s31, 0
      %p120 = por %p118, %p119
      %p121 = scmp.ne.s32.totalorder %s109, %s110
      %p122 = scmp.eq.s32.totalorder %s32, 1
      %p123 = por %p121, %p122
      %p125 = scmp.ne.s32.totalorder %s110, %s124
      %p126 = scmp.eq.s32.totalorder %s32, 0
      %p127 = por %p125, %p126
      %s129 = sadd.s32 %s128, 1
      %p132 = scmp.eq.s32.totalorder %s26, 1
      %p133 = scmp.ne.s32.totalorder %s128, %s130
      %p134 = scmp.eq.s32.totalorder %s26, 0
      %p135 = por %p133, %p134
      %p136 = scmp.ne.s32.totalorder %s128, %s130
      %p137 = scmp.eq.s32.totalorder %s31, 1
      %p138 = por %p136, %p137
      %p139 = scmp.ne.s32.totalorder %s130, %s131
      %p140 = scmp.eq.s32.totalorder %s31, 0
      %p141 = por %p139, %p140
      %p142 = scmp.ne.s32.totalorder %s130, %s131
      %p143 = scmp.eq.s32.totalorder %s32, 1
      %p144 = por %p142, %p143
      %p146 = scmp.ne.s32.totalorder %s131, %s145
      %p147 = scmp.eq.s32.totalorder %s32, 0
      %p148 = por %p146, %p147
      %s150 = sadd.s32 %s149, 1
      %p153 = scmp.eq.s32.totalorder %s26, 1
      %p154 = scmp.ne.s32.totalorder %s149, %s151
      %p155 = scmp.eq.s32.totalorder %s26, 0
      %p156 = por %p154, %p155
      %p157 = scmp.ne.s32.totalorder %s149, %s151
      %p158 = scmp.eq.s32.totalorder %s31, 1
      %p159 = por %p157, %p158
      %p160 = scmp.ne.s32.totalorder %s151, %s152
      %p161 = scmp.eq.s32.totalorder %s31, 0
      %p162 = por %p160, %p161
      %p163 = scmp.ne.s32.totalorder %s151, %s152
      %p164 = scmp.eq.s32.totalorder %s32, 1
      %p165 = por %p163, %p164
      %p167 = scmp.ne.s32.totalorder %s152, %s166
      %p168 = scmp.eq.s32.totalorder %s32, 0
      %p169 = por %p167, %p168
      %s171 = sadd.s32 %s170, 1
      %p174 = scmp.eq.s32.totalorder %s26, 1
      %p175 = scmp.ne.s32.totalorder %s170, %s172
      %p176 = scmp.eq.s32.totalorder %s26, 0
      %p177 = por %p175, %p176
      %p178 = scmp.ne.s32.totalorder %s170, %s172
      %p179 = scmp.eq.s32.totalorder %s31, 1
      %p180 = por %p178, %p179
      %p181 = scmp.ne.s32.totalorder %s172, %s173
      %p182 = scmp.eq.s32.totalorder %s31, 0
      %p183 = por %p181, %p182
      %p184 = scmp.ne.s32.totalorder %s172, %s173
      %p185 = scmp.eq.s32.totalorder %s32, 1
      %p186 = por %p184, %p185
      %p188 = scmp.ne.s32.totalorder %s173, %s187
      %p189 = scmp.eq.s32.totalorder %s32, 0
      %p190 = por %p188, %p189
      %s192 = sadd.s32 %s191, 1
      %p195 = scmp.eq.s32.totalorder %s26, 1
      %p196 = scmp.ne.s32.totalorder %s191, %s193
      %p197 = scmp.eq.s32.totalorder %s26, 0
      %p198 = por %p196, %p197
      %p199 = scmp.ne.s32.totalorder %s191, %s193
      %p200 = scmp.eq.s32.totalorder %s31, 1
      %p201 = por %p199, %p200
      %p202 = scmp.ne.s32.totalorder %s193, %s194
      %p203 = scmp.eq.s32.totalorder %s31, 0
      %p204 = por %p202, %p203
      %p205 = scmp.ne.s32.totalorder %s193, %s194
      %p206 = scmp.eq.s32.totalorder %s32, 1
      %p207 = por %p205, %p206
      %p209 = scmp.ne.s32.totalorder %s194, %s208
      %p210 = scmp.eq.s32.totalorder %s32, 0
      %p211 = por %p209, %p210
      %s213 = sadd.s32 %s212, 1
      %p216 = scmp.eq.s32.totalorder %s26, 1
      %p217 = scmp.ne.s32.totalorder %s212, %s214
      %p218 = scmp.eq.s32.totalorder %s26, 0
      %p219 = por %p217, %p218
      %p220 = scmp.ne.s32.totalorder %s212, %s214
      %p221 = scmp.eq.s32.totalorder %s31, 1
      %p222 = por %p220, %p221
      %p223 = scmp.ne.s32.totalorder %s214, %s215
      %p224 = scmp.eq.s32.totalorder %s31, 0
      %p225 = por %p223, %p224
      %p226 = scmp.ne.s32.totalorder %s214, %s215
      %p227 = scmp.eq.s32.totalorder %s32, 1
      %p228 = por %p226, %p227
      %p230 = scmp.ne.s32.totalorder %s215, %s229
      %p231 = scmp.eq.s32.totalorder %s32, 0
      %p232 = por %p230, %p231
      %s234 = sadd.s32 %s233, 1
      %p237 = scmp.eq.s32.totalorder %s26, 1
      %p238 = scmp.ne.s32.totalorder %s233, %s235
      %p239 = scmp.eq.s32.totalorder %s26, 0
      %p240 = por %p238, %p239
      %p241 = scmp.ne.s32.totalorder %s233, %s235
      %p242 = scmp.eq.s32.totalorder %s31, 1
      %p243 = por %p241, %p242
      %p244 = scmp.ne.s32.totalorder %s235, %s236
      %p245 = scmp.eq.s32.totalorder %s31, 0
      %p246 = por %p244, %p245
      %p247 = scmp.ne.s32.totalorder %s235, %s236
      %p248 = scmp.eq.s32.totalorder %s32, 1
      %p249 = por %p247, %p248
      %p251 = scmp.ne.s32.totalorder %s236, %s250
      %p252 = scmp.eq.s32.totalorder %s32, 0
      %p253 = por %p251, %p252
      %s255 = sadd.s32 %s254, 1
      %p258 = scmp.eq.s32.totalorder %s26, 1
      %p259 = scmp.ne.s32.totalorder %s254, %s256
      %p260 = scmp.eq.s32.totalorder %s26, 0
      %p261 = por %p259, %p260
      %p262 = scmp.ne.s32.totalorder %s254, %s256
      %p263 = scmp.eq.s32.totalorder %s31, 1
      %p264 = por %p262, %p263
      %p265 = scmp.ne.s32.totalorder %s256, %s257
      %p266 = scmp.eq.s32.totalorder %s31, 0
      %p267 = por %p265, %p266
      %p268 = scmp.ne.s32.totalorder %s256, %s257
      %p269 = scmp.eq.s32.totalorder %s32, 1
      %p270 = por %p268, %p269
      %p272 = scmp.ne.s32.totalorder %s257, %s271
      %p273 = scmp.eq.s32.totalorder %s32, 0
      %p274 = por %p272, %p273
      %s276 = sadd.s32 %s275, 1
      %p279 = scmp.eq.s32.totalorder %s26, 1
      %p280 = scmp.ne.s32.totalorder %s275, %s277
      %p281 = scmp.eq.s32.totalorder %s26, 0
      %p282 = por %p280, %p281
      %p283 = scmp.ne.s32.totalorder %s275, %s277
      %p284 = scmp.eq.s32.totalorder %s31, 1
      %p285 = por %p283, %p284
      %p286 = scmp.ne.s32.totalorder %s277, %s278
      %p287 = scmp.eq.s32.totalorder %s31, 0
      %p288 = por %p286, %p287
      %p289 = scmp.ne.s32.totalorder %s277, %s278
      %p290 = scmp.eq.s32.totalorder %s32, 1
      %p291 = por %p289, %p290
      %p293 = scmp.ne.s32.totalorder %s278, %s292
      %p294 = scmp.eq.s32.totalorder %s32, 0
      %p295 = por %p293, %p294
      %s297 = sadd.s32 %s296, 1
      %p300 = scmp.eq.s32.totalorder %s26, 1
      %p301 = scmp.ne.s32.totalorder %s296, %s298
      %p302 = scmp.eq.s32.totalorder %s26, 0
      %p303 = por %p301, %p302
      %p304 = scmp.ne.s32.totalorder %s296, %s298
      %p305 = scmp.eq.s32.totalorder %s31, 1
      %p306 = por %p304, %p305
      %p307 = scmp.ne.s32.totalorder %s298, %s299
      %p308 = scmp.eq.s32.totalorder %s31, 0
      %p309 = por %p307, %p308
      %p310 = scmp.ne.s32.totalorder %s298, %s299
      %p311 = scmp.eq.s32.totalorder %s32, 1
      %p312 = por %p310, %p311
      %p314 = scmp.ne.s32.totalorder %s299, %s313
      %p315 = scmp.eq.s32.totalorder %s32, 0
      %p316 = por %p314, %p315
      %s318 = sadd.s32 %s317, 1
      %p321 = scmp.eq.s32.totalorder %s26, 1
      %p322 = scmp.ne.s32.totalorder %s317, %s319
      %p323 = scmp.eq.s32.totalorder %s26, 0
      %p324 = por %p322, %p323
      %p325 = scmp.ne.s32.totalorder %s317, %s319
      %p326 = scmp.eq.s32.totalorder %s31, 1
      %p327 = por %p325, %p326
      %p328 = scmp.ne.s32.totalorder %s319, %s320
      %p329 = scmp.eq.s32.totalorder %s31, 0
      %p330 = por %p328, %p329
      %p331 = scmp.ne.s32.totalorder %s319, %s320
      %p332 = scmp.eq.s32.totalorder %s32, 1
      %p333 = por %p331, %p332
      %p335 = scmp.ne.s32.totalorder %s320, %s334
      %p336 = scmp.eq.s32.totalorder %s32, 0
      %p337 = por %p335, %p336
      %s338 = ssub.s32 %s26, %s33
      %p339 = scmp.eq.s32.totalorder %s338, 0
      %s341 = sadd.s32 %s340, 1
      %s342 = scalar_select %p339, %s340, %s341
      %p345 = pneg %p339
      %p346 = scmp.eq.s32.totalorder %s26, 1
      %p347 = por %p345, %p346
      %p348 = scmp.ne.s32.totalorder %s340, %s343
      %p349 = scmp.eq.s32.totalorder %s26, 0
      %p350 = por %p348, %p349
      %p351 = scmp.ne.s32.totalorder %s340, %s343
      %p352 = scmp.eq.s32.totalorder %s31, 1
      %p353 = por %p351, %p352
      %p354 = scmp.ne.s32.totalorder %s343, %s344
      %p355 = scmp.eq.s32.totalorder %s31, 0
      %p356 = por %p354, %p355
      %p357 = scmp.ne.s32.totalorder %s343, %s344
      %p358 = scmp.eq.s32.totalorder %s32, 1
      %p359 = por %p357, %p358
      %p361 = scmp.ne.s32.totalorder %s344, %s360
      %p362 = scmp.eq.s32.totalorder %s32, 0
      %p363 = por %p361, %p362
      %p364 = scmp.le.s32.totalorder 1, %s26
      %p365 = scmp.lt.s32.totalorder %s26, 3
      %p366 = pnand %p364, %p365
      %p367 = pneg %p366
      // Predicated region
      $region9: #{desa_forward.10} parent=5 // pred_check
        _
      $region10: #{desa_forward.10} parent=5 // pred_check_branch
        %369 = sbr.rel (%p366) target = $region12
      $region11: #{desa_forward.10} parent=5 // pred_region
        %s370 = ssub.s32 %s26, 1
        // Predicated region
        $region13: #{desa_forward.10} parent=11 // pred_check
          %p371 = pneg %p99
        $region14: #{desa_forward.10} parent=11 // pred_check_branch
          %373 = sbr.rel (%p371) target = $region16
        $region15: #{desa_forward.10} parent=11 // pred_region
          %375 = vsyncadd [#allocation3], 0
          %s376 = sshll.u32 %s2, 4
          %s377 = int_to_ptr.hbm [resolvable:$true] %s376
          %s378 = sshll.u32 [#allocation2], 4
          %s379 = int_to_ptr.vmem [resolvable:$true] %s378
          %384 = dma.hbm_to_vmem [thread:$0]  %s377, 6144, %s379, [#allocation3], 384, 384, 24
        $region16: #{desa_forward.10} parent=11 // pred_fallthru
          _
        // Predicated region
        $region17: #{desa_forward.10} parent=11 // pred_check
          %p385 = pneg %p120
        $region18: #{desa_forward.10} parent=11 // pred_check_branch
          %387 = sbr.rel (%p385) target = $region20
        $region19: #{desa_forward.10} parent=11 // pred_region
          _
        $region20: #{desa_forward.10} parent=11 // pred_fallthru
          _
        // Predicated region
        $region21: #{desa_forward.10} parent=11 // pred_check
          %p388 = pneg %p141
        $region22: #{desa_forward.10} parent=11 // pred_check_branch
          %390 = sbr.rel (%p388) target = $region24
        $region23: #{desa_forward.10} parent=11 // pred_region
          %392 = vsyncadd [#allocation5], 0
          %s393 = sshll.u32 %s4, 4
          %s394 = int_to_ptr.hbm [resolvable:$true] %s393
          %s395 = sshll.u32 [#allocation4], 4
          %s396 = int_to_ptr.vmem [resolvable:$true] %s395
          %401 = dma.hbm_to_vmem [thread:$0]  %s394, 2048, %s396, [#allocation5], 128, 128, 8
        $region24: #{desa_forward.10} parent=11 // pred_fallthru
          _
        // Predicated region
        $region25: #{desa_forward.10} parent=11 // pred_check
          %p402 = pneg %p162
        $region26: #{desa_forward.10} parent=11 // pred_check_branch
          %404 = sbr.rel (%p402) target = $region28
        $region27: #{desa_forward.10} parent=11 // pred_region
          %406 = vsyncadd [#allocation5], 0
          %s408 = sshll.u32 %s5, 4
          %s409 = int_to_ptr.hbm [resolvable:$true] %s408
          %s410 = sshll.u32 [#allocation6], 4
          %s411 = int_to_ptr.vmem [resolvable:$true] %s410
          %413 = dma.hbm_to_vmem [thread:$0]  %s409, 16, %s411, [#allocation5]
        $region28: #{desa_forward.10} parent=11 // pred_fallthru
          _
        // Predicated region
        $region29: #{desa_forward.10} parent=11 // pred_check
          %p414 = pneg %p183
        $region30: #{desa_forward.10} parent=11 // pred_check_branch
          %416 = sbr.rel (%p414) target = $region32
        $region31: #{desa_forward.10} parent=11 // pred_region
          %418 = vsyncadd [#allocation8], 0
          %s420 = sshll.u32 %s6, 4
          %s421 = int_to_ptr.hbm [resolvable:$true] %s420
          %s422 = sshll.u32 [#allocation7], 4
          %s423 = int_to_ptr.vmem [resolvable:$true] %s422
          %425 = dma.hbm_to_vmem [thread:$0]  %s421, 16, %s423, [#allocation8]
        $region32: #{desa_forward.10} parent=11 // pred_fallthru
          _
        // Predicated region
        $region33: #{desa_forward.10} parent=11 // pred_check
          %p426 = pneg %p204
        $region34: #{desa_forward.10} parent=11 // pred_check_branch
          %428 = sbr.rel (%p426) target = $region36
        $region35: #{desa_forward.10} parent=11 // pred_region
          %430 = vsyncadd [#allocation8], 0
          %s432 = sshll.u32 %s7, 4
          %s433 = int_to_ptr.hbm [resolvable:$true] %s432
          %s434 = sshll.u32 [#allocation9], 4
          %s435 = int_to_ptr.vmem [resolvable:$true] %s434
          %437 = dma.hbm_to_vmem [thread:$0]  %s433, 16, %s435, [#allocation8]
        $region36: #{desa_forward.10} parent=11 // pred_fallthru
          _
        // Predicated region
        $region37: #{desa_forward.10} parent=11 // pred_check
          %p438 = pneg %p225
        $region38: #{desa_forward.10} parent=11 // pred_check_branch
          %440 = sbr.rel (%p438) target = $region40
        $region39: #{desa_forward.10} parent=11 // pred_region
          %442 = vsyncadd [#allocation11], 0
          %s443 = sshll.u32 %s8, 4
          %s444 = int_to_ptr.hbm [resolvable:$true] %s443
          %s445 = sshll.u32 [#allocation10], 4
          %s446 = int_to_ptr.vmem [resolvable:$true] %s445
          %451 = dma.hbm_to_vmem [thread:$0]  %s444, 8192, %s446, [#allocation11], 512, 512, 32
        $region40: #{desa_forward.10} parent=11 // pred_fallthru
          _
        // Predicated region
        $region41: #{desa_forward.10} parent=11 // pred_check
          %p452 = pneg %p246
        $region42: #{desa_forward.10} parent=11 // pred_check_branch
          %454 = sbr.rel (%p452) target = $region44
        $region43: #{desa_forward.10} parent=11 // pred_region
          _
        $region44: #{desa_forward.10} parent=11 // pred_fallthru
          _
        // Predicated region
        $region45: #{desa_forward.10} parent=11 // pred_check
          %p455 = pneg %p267
        $region46: #{desa_forward.10} parent=11 // pred_check_branch
          %457 = sbr.rel (%p455) target = $region48
        $region47: #{desa_forward.10} parent=11 // pred_region
          %459 = vsyncadd [#allocation11], 0
          %s460 = sshll.u32 %s10, 4
          %s461 = int_to_ptr.hbm [resolvable:$true] %s460
          %s462 = sshll.u32 [#allocation12], 4
          %s463 = int_to_ptr.vmem [resolvable:$true] %s462
          %468 = dma.hbm_to_vmem [thread:$0]  %s461, 8192, %s463, [#allocation11], 128, 128, 8
        $region48: #{desa_forward.10} parent=11 // pred_fallthru
          _
        // Predicated region
        $region49: #{desa_forward.10} parent=11 // pred_check
          %p469 = pneg %p288
        $region50: #{desa_forward.10} parent=11 // pred_check_branch
          %471 = sbr.rel (%p469) target = $region52
        $region51: #{desa_forward.10} parent=11 // pred_region
          %473 = vsyncadd [#allocation14], 0
          %s475 = sshll.u32 %s11, 4
          %s476 = int_to_ptr.hbm [resolvable:$true] %s475
          %s477 = sshll.u32 [#allocation13], 4
          %s478 = int_to_ptr.vmem [resolvable:$true] %s477
          %480 = dma.hbm_to_vmem [thread:$0]  %s476, 16, %s478, [#allocation14]
        $region52: #{desa_forward.10} parent=11 // pred_fallthru
          _
        // Predicated region
        $region53: #{desa_forward.10} parent=11 // pred_check
          %p481 = pneg %p309
        $region54: #{desa_forward.10} parent=11 // pred_check_branch
          %483 = sbr.rel (%p481) target = $region56
        $region55: #{desa_forward.10} parent=11 // pred_region
          %485 = vsyncadd [#allocation14], 0
          %s487 = sshll.u32 %s12, 4
          %s488 = int_to_ptr.hbm [resolvable:$true] %s487
          %s489 = sshll.u32 [#allocation15], 4
          %s490 = int_to_ptr.vmem [resolvable:$true] %s489
          %492 = dma.hbm_to_vmem [thread:$0]  %s488, 16, %s490, [#allocation14]
        $region56: #{desa_forward.10} parent=11 // pred_fallthru
          _
        // Predicated region
        $region57: #{desa_forward.10} parent=11 // pred_check
          %p493 = pneg %p330
        $region58: #{desa_forward.10} parent=11 // pred_check_branch
          %495 = sbr.rel (%p493) target = $region60
        $region59: #{desa_forward.10} parent=11 // pred_region
          %497 = vsyncadd [#allocation17], 0
          %s499 = sshll.u32 %s13, 4
          %s500 = int_to_ptr.hbm [resolvable:$true] %s499
          %s501 = sshll.u32 [#allocation16], 4
          %s502 = int_to_ptr.vmem [resolvable:$true] %s501
          %504 = dma.hbm_to_vmem [thread:$0]  %s500, 16, %s502, [#allocation17]
        $region60: #{desa_forward.10} parent=11 // pred_fallthru
          _
      $region12: #{desa_forward.10} parent=5 // pred_fallthru
        _
      %p505 = scmp.lt.s32.totalorder %s26, 2
      // Predicated region
      $region61: #{desa_forward.10} parent=5 // pred_check
        %p506 = pneg %p505
      $region62: #{desa_forward.10} parent=5 // pred_check_branch
        %508 = sbr.rel (%p506) target = $region64
      $region63: #{desa_forward.10} parent=5 // pred_region
        // Predicated region
        $region65: #{desa_forward.10} parent=63 // pred_check
          %p509 = pneg %p46
        $region66: #{desa_forward.10} parent=63 // pred_check_branch
          %511 = sbr.rel (%p509) target = $region68
        $region67: #{desa_forward.10} parent=63 // pred_region
          %p512 = scmp.lt.s32.totalorder %s26, 1
          %s513 = scalar_select %p512, %s26, 1
          %s514 = smul.addr %s513, 8
          %s515 = scalar_lea.vmem %s0, %s514
        $region68: #{desa_forward.10} parent=63 // pred_fallthru
          _
        // Predicated region
        $region69: #{desa_forward.10} parent=63 // pred_check
          %p516 = pneg %p72
        $region70: #{desa_forward.10} parent=63 // pred_check_branch
          %518 = sbr.rel (%p516) target = $region72
        $region71: #{desa_forward.10} parent=63 // pred_region
          %p519 = scmp.lt.s32.totalorder %s26, 1
          %s520 = scalar_select %p519, %s26, 1
          %s521 = scalar_lea.vmem %s1, %s520
        $region72: #{desa_forward.10} parent=63 // pred_fallthru
          _
      $region64: #{desa_forward.10} parent=5 // pred_fallthru
        _
      %p522 = scmp.le.s32.totalorder 1, %s26
      %p523 = scmp.lt.s32.totalorder %s26, 3
      %p524 = pnand %p522, %p523
      %p525 = pneg %p524
      // Predicated region
      $region73: #{desa_forward.10} parent=5 // pred_check
        _
      $region74: #{desa_forward.10} parent=5 // pred_check_branch
        %527 = sbr.rel (%p524) target = $region76
      $region75: #{desa_forward.10} parent=5 // pred_region
        %s528 = ssub.s32 %s26, 1
        // Predicated region
        $region77: #{desa_forward.10} parent=75 // pred_check
          %p529 = pneg %p99
        $region78: #{desa_forward.10} parent=75 // pred_check_branch
          %531 = sbr.rel (%p529) target = $region80
        $region79: #{desa_forward.10} parent=75 // pred_region
          %533 = dma.done [#allocation3], 6144
        $region80: #{desa_forward.10} parent=75 // pred_fallthru
          _
        // Predicated region
        $region81: #{desa_forward.10} parent=75 // pred_check
          %p534 = pneg %p141
        $region82: #{desa_forward.10} parent=75 // pred_check_branch
          %536 = sbr.rel (%p534) target = $region84
        $region83: #{desa_forward.10} parent=75 // pred_region
          %538 = dma.done [#allocation5], 2048
        $region84: #{desa_forward.10} parent=75 // pred_fallthru
          _
        // Predicated region
        $region85: #{desa_forward.10} parent=75 // pred_check
          %p539 = pneg %p162
        $region86: #{desa_forward.10} parent=75 // pred_check_branch
          %541 = sbr.rel (%p539) target = $region88
        $region87: #{desa_forward.10} parent=75 // pred_region
          %543 = dma.done [#allocation5], 16
        $region88: #{desa_forward.10} parent=75 // pred_fallthru
          _
        // Predicated region
        $region89: #{desa_forward.10} parent=75 // pred_check
          %p544 = pneg %p183
        $region90: #{desa_forward.10} parent=75 // pred_check_branch
          %546 = sbr.rel (%p544) target = $region92
        $region91: #{desa_forward.10} parent=75 // pred_region
          %548 = dma.done [#allocation8], 16
        $region92: #{desa_forward.10} parent=75 // pred_fallthru
          _
        // Predicated region
        $region93: #{desa_forward.10} parent=75 // pred_check
          %p549 = pneg %p204
        $region94: #{desa_forward.10} parent=75 // pred_check_branch
          %551 = sbr.rel (%p549) target = $region96
        $region95: #{desa_forward.10} parent=75 // pred_region
          %553 = dma.done [#allocation8], 16
        $region96: #{desa_forward.10} parent=75 // pred_fallthru
          _
        // Predicated region
        $region97: #{desa_forward.10} parent=75 // pred_check
          %p554 = pneg %p225
        $region98: #{desa_forward.10} parent=75 // pred_check_branch
          %556 = sbr.rel (%p554) target = $region100
        $region99: #{desa_forward.10} parent=75 // pred_region
          %558 = dma.done [#allocation11], 8192
        $region100: #{desa_forward.10} parent=75 // pred_fallthru
          _
        // Predicated region
        $region101: #{desa_forward.10} parent=75 // pred_check
          %p559 = pneg %p267
        $region102: #{desa_forward.10} parent=75 // pred_check_branch
          %561 = sbr.rel (%p559) target = $region104
        $region103: #{desa_forward.10} parent=75 // pred_region
          %563 = dma.done [#allocation11], 8192
        $region104: #{desa_forward.10} parent=75 // pred_fallthru
          _
        // Predicated region
        $region105: #{desa_forward.10} parent=75 // pred_check
          %p564 = pneg %p288
        $region106: #{desa_forward.10} parent=75 // pred_check_branch
          %566 = sbr.rel (%p564) target = $region108
        $region107: #{desa_forward.10} parent=75 // pred_region
          %568 = dma.done [#allocation14], 16
        $region108: #{desa_forward.10} parent=75 // pred_fallthru
          _
        // Predicated region
        $region109: #{desa_forward.10} parent=75 // pred_check
          %p569 = pneg %p309
        $region110: #{desa_forward.10} parent=75 // pred_check_branch
          %571 = sbr.rel (%p569) target = $region112
        $region111: #{desa_forward.10} parent=75 // pred_region
          %573 = dma.done [#allocation14], 16
        $region112: #{desa_forward.10} parent=75 // pred_fallthru
          _
        // Predicated region
        $region113: #{desa_forward.10} parent=75 // pred_check
          %p574 = pneg %p330
        $region114: #{desa_forward.10} parent=75 // pred_check_branch
          %576 = sbr.rel (%p574) target = $region116
        $region115: #{desa_forward.10} parent=75 // pred_region
          %578 = dma.done [#allocation17], 16
        $region116: #{desa_forward.10} parent=75 // pred_fallthru
          _
        %p579 = scmp.lt.s32.totalorder %s31, 1
        %s580 = scalar_select %p579, %s31, 1
        %s581 = smul.addr %s580, 8
        %s582 = scalar_lea.vmem %s0, %s581
        %p583 = pneg %p52
        %p584 = pneg %p49
        %p585 = scmp.lt.s32.totalorder %s31, 1
        %s586 = scalar_select %p585, %s31, 1
        %s587 = scalar_lea.vmem %s1, %s586
        %p588 = pneg %p78
        %p589 = pneg %p75
        %p590 = pneg %p99
        %p591 = pneg %p96
        %p592 = pneg %p120
        %p593 = pneg %p117
        %p594 = pneg %p141
        %p595 = pneg %p138
        %p596 = pneg %p162
        %p597 = pneg %p159
        %p598 = pneg %p183
        %p599 = pneg %p180
        %p600 = pneg %p204
        %p601 = pneg %p201
        %p602 = pneg %p225
        %p603 = pneg %p222
        %p604 = pneg %p246
        %p605 = pneg %p243
        %p606 = pneg %p267
        %p607 = pneg %p264
        %p608 = pneg %p288
        %p609 = pneg %p285
        %p610 = pneg %p309
        %p611 = pneg %p306
        %p612 = pneg %p330
        %p613 = pneg %p327
        %p614 = pneg %p356
        %p615 = pneg %p353
        %p616 = scmp.lt.s32.totalorder %s31, 1
        %s617 = scalar_select %p616, %s31, 1
        %s618 = smul.addr %s617, 8
        %s619 = scalar_lea.vmem %s14, %s618
        %p620 = scmp.lt.s32.totalorder %s31, 1
        %s621 = scalar_select %p620, %s31, 1
        %s622 = smul.addr %s621, 8
        %s623 = scalar_lea.vmem %s0, %s622
        %p624 = scmp.lt.s32.totalorder %s31, 1
        %s625 = scalar_select %p624, %s31, 1
        %s626 = scalar_lea.vmem %s1, %s625
        %p627 = scmp.lt.s32.totalorder %s31, 1
        %s628 = scalar_select %p627, %s31, 1
        %s629 = smul.addr %s628, 8
        %s630 = scalar_lea.vmem %s14, %s629
        %v631 = vld [vmem:[%s623] sm:$0xff]
        %v632 = vld [vmem:[%s626] sm:$0x1]
        %v633 = vld [vmem:[#allocation2] sm:$0xff]
        %v634 = vld [vmem:[#allocation2 + $0x8] sm:$0xff]
        %v635 = vld [vmem:[#allocation2 + $0x10] sm:$0xff]
        %v636 = vld [vmem:[#allocation2 + $0x18] sm:$0xff]
        %v637 = vld [vmem:[#allocation2 + $0x20] sm:$0xff]
        %v638 = vld [vmem:[#allocation2 + $0x28] sm:$0xff]
        %v639 = vld [vmem:[#allocation2 + $0x30] sm:$0xff]
        %v640 = vld [vmem:[#allocation2 + $0x38] sm:$0xff]
        %v641 = vld [vmem:[#allocation2 + $0x40] sm:$0xff]
        %v642 = vld [vmem:[#allocation2 + $0x48] sm:$0xff]
        %v643 = vld [vmem:[#allocation2 + $0x50] sm:$0xff]
        %v644 = vld [vmem:[#allocation2 + $0x58] sm:$0xff]
        %v645 = vld [vmem:[#allocation2 + $0x60] sm:$0xff]
        %v646 = vld [vmem:[#allocation2 + $0x68] sm:$0xff]
        %v647 = vld [vmem:[#allocation2 + $0x70] sm:$0xff]
        %v648 = vld [vmem:[#allocation2 + $0x78] sm:$0xff]
        %v649 = vld [vmem:[#allocation2 + $0x80] sm:$0xff]
        %v650 = vld [vmem:[#allocation2 + $0x88] sm:$0xff]
        %v651 = vld [vmem:[#allocation2 + $0x90] sm:$0xff]
        %v652 = vld [vmem:[#allocation2 + $0x98] sm:$0xff]
        %v653 = vld [vmem:[#allocation2 + $0xa0] sm:$0xff]
        %v654 = vld [vmem:[#allocation2 + $0xa8] sm:$0xff]
        %v655 = vld [vmem:[#allocation2 + $0xb0] sm:$0xff]
        %v656 = vld [vmem:[#allocation2 + $0xb8] sm:$0xff]
        %v657 = vld [vmem:[#allocation2 + $0xc0] sm:$0xff]
        %v658 = vld [vmem:[#allocation2 + $0xc8] sm:$0xff]
        %v659 = vld [vmem:[#allocation2 + $0xd0] sm:$0xff]
        %v660 = vld [vmem:[#allocation2 + $0xd8] sm:$0xff]
        %v661 = vld [vmem:[#allocation2 + $0xe0] sm:$0xff]
        %v662 = vld [vmem:[#allocation2 + $0xe8] sm:$0xff]
        %v663 = vld [vmem:[#allocation2 + $0xf0] sm:$0xff]
        %v664 = vld [vmem:[#allocation2 + $0xf8] sm:$0xff]
        %v665 = vld [vmem:[#allocation2 + $0x100] sm:$0xff]
        %v666 = vld [vmem:[#allocation2 + $0x108] sm:$0xff]
        %v667 = vld [vmem:[#allocation2 + $0x110] sm:$0xff]
        %v668 = vld [vmem:[#allocation2 + $0x118] sm:$0xff]
        %v669 = vld [vmem:[#allocation2 + $0x120] sm:$0xff]
        %v670 = vld [vmem:[#allocation2 + $0x128] sm:$0xff]
        %v671 = vld [vmem:[#allocation2 + $0x130] sm:$0xff]
        %v672 = vld [vmem:[#allocation2 + $0x138] sm:$0xff]
        %v673 = vld [vmem:[#allocation2 + $0x140] sm:$0xff]
        %v674 = vld [vmem:[#allocation2 + $0x148] sm:$0xff]
        %v675 = vld [vmem:[#allocation2 + $0x150] sm:$0xff]
        %v676 = vld [vmem:[#allocation2 + $0x158] sm:$0xff]
        %v677 = vld [vmem:[#allocation2 + $0x160] sm:$0xff]
        %v678 = vld [vmem:[#allocation2 + $0x168] sm:$0xff]
        %v679 = vld [vmem:[#allocation2 + $0x170] sm:$0xff]
        %v680 = vld [vmem:[#allocation2 + $0x178] sm:$0xff]
        %v681 = vld [vmem:[%s3] sm:$0x7]
        %v683 = vperm.slane %v681, 0
        %v684 = vperm.slane %v681, 1
        %v685 = vperm.slane %v681, 2
        %689 = vmatpush.msra.mxu0 %v678
        %690 = vmatpush.msra.mxu0 %v675
        %691 = vmatpush.msra.mxu0 %v672
        %692 = vmatpush.msra.mxu0 %v669
        %693 = vmatpush.msra.mxu0 %v666
        %694 = vmatpush.msra.mxu0 %v663
        %695 = vmatpush.msra.mxu0 %v660
        %696 = vmatpush.msra.mxu0 %v657
        %697 = vmatpush.msra.mxu0 %v654
        %698 = vmatpush.msra.mxu0 %v651
        %699 = vmatpush.msra.mxu0 %v648
        %700 = vmatpush.msra.mxu0 %v645
        %701 = vmatpush.msra.mxu0 %v642
        %702 = vmatpush.msra.mxu0 %v639
        %703 = vmatpush.msra.mxu0 %v636
        %704 = vmatpush.msra.mxu0 %v633
        %705 = vmatmul.f32.gmra.mxu0 %v631
        %v706 = vpop.f32.mrf.mxu0
        %v707 = vadd.f32 %v683, %v706
        %708 = vdwg.mxu0
        %709 = vmatpush.msra.mxu0 %v679
        %710 = vmatpush.msra.mxu0 %v676
        %711 = vmatpush.msra.mxu0 %v673
        %712 = vmatpush.msra.mxu0 %v670
        %713 = vmatpush.msra.mxu0 %v667
        %714 = vmatpush.msra.mxu0 %v664
        %715 = vmatpush.msra.mxu0 %v661
        %716 = vmatpush.msra.mxu0 %v658
        %717 = vmatpush.msra.mxu0 %v655
        %718 = vmatpush.msra.mxu0 %v652
        %719 = vmatpush.msra.mxu0 %v649
        %720 = vmatpush.msra.mxu0 %v646
        %721 = vmatpush.msra.mxu0 %v643
        %722 = vmatpush.msra.mxu0 %v640
        %723 = vmatpush.msra.mxu0 %v637
        %724 = vmatpush.msra.mxu0 %v634
        %725 = vmatmul.f32.gmra.mxu0 %v631
        %v726 = vpop.f32.mrf.mxu0
        %v727 = vadd.f32 %v684, %v726
        %728 = vdwg.mxu0
        %729 = vmatpush.msra.mxu0 %v680
        %730 = vmatpush.msra.mxu0 %v677
        %731 = vmatpush.msra.mxu0 %v674
        %732 = vmatpush.msra.mxu0 %v671
        %733 = vmatpush.msra.mxu0 %v668
        %734 = vmatpush.msra.mxu0 %v665
        %735 = vmatpush.msra.mxu0 %v662
        %736 = vmatpush.msra.mxu0 %v659
        %737 = vmatpush.msra.mxu0 %v656
        %738 = vmatpush.msra.mxu0 %v653
        %739 = vmatpush.msra.mxu0 %v650
        %740 = vmatpush.msra.mxu0 %v647
        %741 = vmatpush.msra.mxu0 %v644
        %742 = vmatpush.msra.mxu0 %v641
        %743 = vmatpush.msra.mxu0 %v638
        %744 = vmatpush.msra.mxu0 %v635
        %745 = vmatmul.f32.gmra.mxu0 %v631
        %v746 = vpop.f32.mrf.mxu0
        %v747 = vadd.f32 %v685, %v746
        %748 = vdwg.mxu0
        %vm749 = vcmask 261120
        %v751 = vsel %vm749, %v707, 0
        %v754 = vsel %vm749, %v727, 0
        %756 = vmatpush.xpose.msra.mxu0 0.0
        %757 = vmatpush.xpose.msra.mxu0 0.0
        %758 = vmatpush.xpose.msra.mxu0 0.0
        %759 = vmatpush.xpose.msra.mxu0 0.0
        %760 = vmatpush.xpose.msra.mxu0 0.0
        %761 = vmatpush.xpose.msra.mxu0 0.0
        %762 = vmatpush.xpose.msra.mxu0 0.0
        %763 = vmatpush.xpose.msra.mxu0 0.0
        %764 = vmatpush.xpose.msra.mxu0 0.0
        %765 = vmatpush.xpose.msra.mxu0 0.0
        %766 = vmatpush.xpose.msra.mxu0 0.0
        %767 = vmatpush.xpose.msra.mxu0 0.0
        %768 = vmatpush.xpose.msra.mxu0 0.0
        %769 = vmatpush.xpose.msra.mxu0 0.0
        %770 = vmatpush.xpose.msra.mxu0 0.0
        %771 = vmatpush.xpose.msra.mxu0 %v754
        %772 = vmatmul.f32.gmra.mxu0 %v751
        %v773 = vpop.f32.mrf.mxu0
        %v774 = vadd.f32 0.0, %v773
        %775 = vdwg.mxu0
        %v776 = vmul.f32 %v774, 0.17677669
        %v778 = vperm.slane %v632, 0
        %v780 = vadd.f32 %v776, %v778
        %vm781 = vcmask 64512
        %v782 = vsel %vm781, %v780, -inf
        %783 = vmax.xlane.f32.xlu0 %v782
        %v784 = vpop.xlane.xlu0 %783
        %v785 = vsub.f32 %v780, %v784
        %v786 = vmul.f32 %v785, 1.442695
        %v787 = vpow.pop %v786
        %v788 = vsel %vm781, %v787, 0.0
        %789 = vadd.xlane.f32.xlu0 %v788
        %v790 = vpop.xlane.xlu0 %789
        %v791 = vrcp.pop %v790
        %v792 = vmul.f32 %v787, %v791
        %v794 = vsel %vm781, %v792, 0
        %796 = vmatpush.msra.mxu0 0.0
        %797 = vmatpush.msra.mxu0 0.0
        %798 = vmatpush.msra.mxu0 0.0
        %799 = vmatpush.msra.mxu0 0.0
        %800 = vmatpush.msra.mxu0 0.0
        %801 = vmatpush.msra.mxu0 0.0
        %802 = vmatpush.msra.mxu0 0.0
        %803 = vmatpush.msra.mxu0 0.0
        %804 = vmatpush.msra.mxu0 0.0
        %805 = vmatpush.msra.mxu0 0.0
        %806 = vmatpush.msra.mxu0 0.0
        %807 = vmatpush.msra.mxu0 0.0
        %808 = vmatpush.msra.mxu0 0.0
        %809 = vmatpush.msra.mxu0 0.0
        %810 = vmatpush.msra.mxu0 0.0
        %811 = vmatpush.msra.mxu0 %v747
        %812 = vmatmul.f32.gmra.mxu0 %v794
        %v813 = vpop.f32.mrf.mxu0
        %v814 = vadd.f32 0.0, %v813
        %815 = vdwg.mxu0
        %816 = vrot.lane.b32.xlu0 %v707, 96
        %v817 = vpop.permute.xlu0 %816
        %818 = vrot.lane.b32.xlu0 %v727, 96
        %v819 = vpop.permute.xlu0 %818
        %v820 = vsel %vm749, %v817, 0
        %v822 = vsel %vm749, %v819, 0
        %824 = vmatpush.xpose.msra.mxu0 0.0
        %825 = vmatpush.xpose.msra.mxu0 0.0
        %826 = vmatpush.xpose.msra.mxu0 0.0
        %827 = vmatpush.xpose.msra.mxu0 0.0
        %828 = vmatpush.xpose.msra.mxu0 0.0
        %829 = vmatpush.xpose.msra.mxu0 0.0
        %830 = vmatpush.xpose.msra.mxu0 0.0
        %831 = vmatpush.xpose.msra.mxu0 0.0
        %832 = vmatpush.xpose.msra.mxu0 0.0
        %833 = vmatpush.xpose.msra.mxu0 0.0
        %834 = vmatpush.xpose.msra.mxu0 0.0
        %835 = vmatpush.xpose.msra.mxu0 0.0
        %836 = vmatpush.xpose.msra.mxu0 0.0
        %837 = vmatpush.xpose.msra.mxu0 0.0
        %838 = vmatpush.xpose.msra.mxu0 0.0
        %839 = vmatpush.xpose.msra.mxu0 %v822
        %840 = vmatmul.f32.gmra.mxu0 %v820
        %v841 = vpop.f32.mrf.mxu0
        %v842 = vadd.f32 0.0, %v841
        %843 = vdwg.mxu0
        %v844 = vmul.f32 %v842, 0.17677669
        %v845 = vadd.f32 %v844, %v778
        %v846 = vsel %vm781, %v845, -inf
        %847 = vmax.xlane.f32.xlu0 %v846
        %v848 = vpop.xlane.xlu0 %847
        %v849 = vsub.f32 %v845, %v848
        %v850 = vmul.f32 %v849, 1.442695
        %v851 = vpow.pop %v850
        %v852 = vsel %vm781, %v851, 0.0
        %853 = vadd.xlane.f32.xlu0 %v852
        %v854 = vpop.xlane.xlu0 %853
        %v855 = vrcp.pop %v854
        %v856 = vmul.f32 %v851, %v855
        %858 = vrot.lane.b32.xlu0 %v747, 96
        %v859 = vpop.permute.xlu0 %858
        %v862 = vsel %vm781, %v856, 0
        %864 = vmatpush.msra.mxu0 0.0
        %865 = vmatpush.msra.mxu0 0.0
        %866 = vmatpush.msra.mxu0 0.0
        %867 = vmatpush.msra.mxu0 0.0
        %868 = vmatpush.msra.mxu0 0.0
        %869 = vmatpush.msra.mxu0 0.0
        %870 = vmatpush.msra.mxu0 0.0
        %871 = vmatpush.msra.mxu0 0.0
        %872 = vmatpush.msra.mxu0 0.0
        %873 = vmatpush.msra.mxu0 0.0
        %874 = vmatpush.msra.mxu0 0.0
        %875 = vmatpush.msra.mxu0 0.0
        %876 = vmatpush.msra.mxu0 0.0
        %877 = vmatpush.msra.mxu0 0.0
        %878 = vmatpush.msra.mxu0 0.0
        %879 = vmatpush.msra.mxu0 %v859
        %880 = vmatmul.f32.gmra.mxu0 %v862
        %v881 = vpop.f32.mrf.mxu0
        %v882 = vadd.f32 0.0, %v881
        %883 = vdwg.mxu0
        %884 = vrot.lane.b32.xlu0 %v707, 64
        %v885 = vpop.permute.xlu0 %884
        %886 = vrot.lane.b32.xlu0 %v727, 64
        %v887 = vpop.permute.xlu0 %886
        %v888 = vsel %vm749, %v885, 0
        %v890 = vsel %vm749, %v887, 0
        %892 = vmatpush.xpose.msra.mxu0 0.0
        %893 = vmatpush.xpose.msra.mxu0 0.0
        %894 = vmatpush.xpose.msra.mxu0 0.0
        %895 = vmatpush.xpose.msra.mxu0 0.0
        %896 = vmatpush.xpose.msra.mxu0 0.0
        %897 = vmatpush.xpose.msra.mxu0 0.0
        %898 = vmatpush.xpose.msra.mxu0 0.0
        %899 = vmatpush.xpose.msra.mxu0 0.0
        %900 = vmatpush.xpose.msra.mxu0 0.0
        %901 = vmatpush.xpose.msra.mxu0 0.0
        %902 = vmatpush.xpose.msra.mxu0 0.0
        %903 = vmatpush.xpose.msra.mxu0 0.0
        %904 = vmatpush.xpose.msra.mxu0 0.0
        %905 = vmatpush.xpose.msra.mxu0 0.0
        %906 = vmatpush.xpose.msra.mxu0 0.0
        %907 = vmatpush.xpose.msra.mxu0 %v890
        %908 = vmatmul.f32.gmra.mxu0 %v888
        %v909 = vpop.f32.mrf.mxu0
        %v910 = vadd.f32 0.0, %v909
        %911 = vdwg.mxu0
        %v912 = vmul.f32 %v910, 0.17677669
        %v913 = vadd.f32 %v912, %v778
        %v914 = vsel %vm781, %v913, -inf
        %915 = vmax.xlane.f32.xlu0 %v914
        %v916 = vpop.xlane.xlu0 %915
        %v917 = vsub.f32 %v913, %v916
        %v918 = vmul.f32 %v917, 1.442695
        %v919 = vpow.pop %v918
        %v920 = vsel %vm781, %v919, 0.0
        %921 = vadd.xlane.f32.xlu0 %v920
        %v922 = vpop.xlane.xlu0 %921
        %v923 = vrcp.pop %v922
        %v924 = vmul.f32 %v919, %v923
        %925 = vrot.lane.b32.xlu0 %v747, 64
        %v926 = vpop.permute.xlu0 %925
        %v929 = vsel %vm781, %v924, 0
        %931 = vmatpush.msra.mxu0 0.0
        %932 = vmatpush.msra.mxu0 0.0
        %933 = vmatpush.msra.mxu0 0.0
        %934 = vmatpush.msra.mxu0 0.0
        %935 = vmatpush.msra.mxu0 0.0
        %936 = vmatpush.msra.mxu0 0.0
        %937 = vmatpush.msra.mxu0 0.0
        %938 = vmatpush.msra.mxu0 0.0
        %939 = vmatpush.msra.mxu0 0.0
        %940 = vmatpush.msra.mxu0 0.0
        %941 = vmatpush.msra.mxu0 0.0
        %942 = vmatpush.msra.mxu0 0.0
        %943 = vmatpush.msra.mxu0 0.0
        %944 = vmatpush.msra.mxu0 0.0
        %945 = vmatpush.msra.mxu0 0.0
        %946 = vmatpush.msra.mxu0 %v926
        %947 = vmatmul.f32.gmra.mxu0 %v929
        %v948 = vpop.f32.mrf.mxu0
        %v949 = vadd.f32 0.0, %v948
        %950 = vdwg.mxu0
        %951 = vrot.lane.b32.xlu0 %v707, 32
        %v952 = vpop.permute.xlu0 %951
        %953 = vrot.lane.b32.xlu0 %v727, 32
        %v954 = vpop.permute.xlu0 %953
        %v955 = vsel %vm749, %v952, 0
        %v957 = vsel %vm749, %v954, 0
        %959 = vmatpush.xpose.msra.mxu0 0.0
        %960 = vmatpush.xpose.msra.mxu0 0.0
        %961 = vmatpush.xpose.msra.mxu0 0.0
        %962 = vmatpush.xpose.msra.mxu0 0.0
        %963 = vmatpush.xpose.msra.mxu0 0.0
        %964 = vmatpush.xpose.msra.mxu0 0.0
        %965 = vmatpush.xpose.msra.mxu0 0.0
        %966 = vmatpush.xpose.msra.mxu0 0.0
        %967 = vmatpush.xpose.msra.mxu0 0.0
        %968 = vmatpush.xpose.msra.mxu0 0.0
        %969 = vmatpush.xpose.msra.mxu0 0.0
        %970 = vmatpush.xpose.msra.mxu0 0.0
        %971 = vmatpush.xpose.msra.mxu0 0.0
        %972 = vmatpush.xpose.msra.mxu0 0.0
        %973 = vmatpush.xpose.msra.mxu0 0.0
        %974 = vmatpush.xpose.msra.mxu0 %v957
        %975 = vmatmul.f32.gmra.mxu0 %v955
        %v976 = vpop.f32.mrf.mxu0
        %v977 = vadd.f32 0.0, %v976
        %978 = vdwg.mxu0
        %v979 = vmul.f32 %v977, 0.17677669
        %v980 = vadd.f32 %v979, %v778
        %v981 = vsel %vm781, %v980, -inf
        %982 = vmax.xlane.f32.xlu0 %v981
        %v983 = vpop.xlane.xlu0 %982
        %v984 = vsub.f32 %v980, %v983
        %v985 = vmul.f32 %v984, 1.442695
        %v986 = vpow.pop %v985
        %v987 = vsel %vm781, %v986, 0.0
        %988 = vadd.xlane.f32.xlu0 %v987
        %v989 = vpop.xlane.xlu0 %988
        %v990 = vrcp.pop %v989
        %v991 = vmul.f32 %v986, %v990
        %992 = vrot.lane.b32.xlu0 %v747, 32
        %v993 = vpop.permute.xlu0 %992
        %v996 = vsel %vm781, %v991, 0
        %998 = vmatpush.msra.mxu0 0.0
        %999 = vmatpush.msra.mxu0 0.0
        %1000 = vmatpush.msra.mxu0 0.0
        %1001 = vmatpush.msra.mxu0 0.0
        %1002 = vmatpush.msra.mxu0 0.0
        %1003 = vmatpush.msra.mxu0 0.0
        %1004 = vmatpush.msra.mxu0 0.0
        %1005 = vmatpush.msra.mxu0 0.0
        %1006 = vmatpush.msra.mxu0 0.0
        %1007 = vmatpush.msra.mxu0 0.0
        %1008 = vmatpush.msra.mxu0 0.0
        %1009 = vmatpush.msra.mxu0 0.0
        %1010 = vmatpush.msra.mxu0 0.0
        %1011 = vmatpush.msra.mxu0 0.0
        %1012 = vmatpush.msra.mxu0 0.0
        %1013 = vmatpush.msra.mxu0 %v993
        %1014 = vmatmul.f32.gmra.mxu0 %v996
        %v1015 = vpop.f32.mrf.mxu0
        %v1016 = vadd.f32 0.0, %v1015
        %1017 = vdwg.mxu0
        %1019 = vrot.lane.b32.xlu0 %v882, 32
        %v1020 = vpop.permute.xlu0 %1019
        %1023 = vrot.lane.b32.xlu0 %v949, 64
        %v1024 = vpop.permute.xlu0 %1023
        %1027 = vrot.lane.b32.xlu0 %v1016, 96
        %v1028 = vpop.permute.xlu0 %1027
        %v1030 = vsel %vm749, %v814, %v1020
        %vm1031 = vcmask 523264
        %v1032 = vsel %vm1031, %v1030, %v1024
        %vm1033 = vcmask 785408
        %v1034 = vsel %vm1033, %v1032, %v1028
        %v1035 = vld [vmem:[#allocation4] sm:$0xff]
        %v1036 = vld [vmem:[#allocation4 + $0x8] sm:$0xff]
        %v1037 = vld [vmem:[#allocation4 + $0x10] sm:$0xff]
        %v1038 = vld [vmem:[#allocation4 + $0x18] sm:$0xff]
        %v1039 = vld [vmem:[#allocation4 + $0x20] sm:$0xff]
        %v1040 = vld [vmem:[#allocation4 + $0x28] sm:$0xff]
        %v1041 = vld [vmem:[#allocation4 + $0x30] sm:$0xff]
        %v1042 = vld [vmem:[#allocation4 + $0x38] sm:$0xff]
        %v1043 = vld [vmem:[#allocation4 + $0x40] sm:$0xff]
        %v1044 = vld [vmem:[#allocation4 + $0x48] sm:$0xff]
        %v1045 = vld [vmem:[#allocation4 + $0x50] sm:$0xff]
        %v1046 = vld [vmem:[#allocation4 + $0x58] sm:$0xff]
        %v1047 = vld [vmem:[#allocation4 + $0x60] sm:$0xff]
        %v1048 = vld [vmem:[#allocation4 + $0x68] sm:$0xff]
        %v1049 = vld [vmem:[#allocation4 + $0x70] sm:$0xff]
        %v1050 = vld [vmem:[#allocation4 + $0x78] sm:$0xff]
        %v1051 = vld [vmem:[#allocation6] sm:$0x1]
        %v1053 = vperm.slane %v1051, 0
        %1055 = vmatpush.msra.mxu0 %v1050
        %1056 = vmatpush.msra.mxu0 %v1049
        %1057 = vmatpush.msra.mxu0 %v1048
        %1058 = vmatpush.msra.mxu0 %v1047
        %1059 = vmatpush.msra.mxu0 %v1046
        %1060 = vmatpush.msra.mxu0 %v1045
        %1061 = vmatpush.msra.mxu0 %v1044
        %1062 = vmatpush.msra.mxu0 %v1043
        %1063 = vmatpush.msra.mxu0 %v1042
        %1064 = vmatpush.msra.mxu0 %v1041
        %1065 = vmatpush.msra.mxu0 %v1040
        %1066 = vmatpush.msra.mxu0 %v1039
        %1067 = vmatpush.msra.mxu0 %v1038
        %1068 = vmatpush.msra.mxu0 %v1037
        %1069 = vmatpush.msra.mxu0 %v1036
        %1070 = vmatpush.msra.mxu0 %v1035
        %1071 = vmatmul.f32.gmra.mxu0 %v1034
        %v1072 = vpop.f32.mrf.mxu0
        %v1073 = vadd.f32 %v1053, %v1072
        %1074 = vdwg.mxu0
        %v1075 = vadd.f32 %v631, %v1073
        %v1076 = vld [vmem:[#allocation7] sm:$0x1]
        %v1077 = vld [vmem:[#allocation9] sm:$0x1]
        %1078 = vadd.xlane.f32.xlu0 %v1075
        %v1079 = vpop.xlane.xlu0 %1078
        %v1080 = vrcp.pop 128.0
        %v1081 = vmul.f32 128.0, %v1080
        %v1082 = vsub.f32 1.0, %v1081
        %v1083 = vmul.f32 %v1080, %v1082
        %v1084 = vadd.f32 %v1080, %v1083
        %vm1085 = vweird.f32 %v1080
        %v1086 = vsel %vm1085, %v1080, %v1084
        %v1087 = vmul.f32 %v1079, %v1086
        %v1088 = vsub.f32 %v1075, %v1087
        %v1089 = vmul.f32 %v1088, %v1088
        %1090 = vadd.xlane.f32.xlu0 %v1089
        %v1091 = vpop.xlane.xlu0 %1090
        %v1092 = vmul.f32 %v1091, %v1086
        %v1093 = vadd.f32 %v1092, 1e-05
        %v1094 = vrsqrt.pop %v1093
        %v1095 = vmul.f32 %v1094, %v1093
        %v1096 = vmul.f32 %v1095, %v1094
        %v1097 = vmul.f32 0.5, %v1096
        %v1098 = vsub.f32 1.5, %v1097
        %v1099 = vmul.f32 %v1094, %v1098
        %vm1100 = vweird.f32 %v1093
        %vm1101 = vweird.f32 %v1094
        %vm1102 = vmor %vm1100, %vm1101
        %v1103 = vsel %vm1102, %v1094, %v1099
        %v1104 = vmul.f32 %v1088, %v1103
        %v1106 = vperm.slane %v1076, 0
        %v1108 = vmul.f32 %v1104, %v1106
        %v1110 = vperm.slane %v1077, 0
        %v1112 = vadd.f32 %v1108, %v1110
        %v1113 = vld [vmem:[#allocation10] sm:$0xff]
        %v1114 = vld [vmem:[#allocation10 + $0x8] sm:$0xff]
        %v1115 = vld [vmem:[#allocation10 + $0x10] sm:$0xff]
        %v1116 = vld [vmem:[#allocation10 + $0x18] sm:$0xff]
        %v1117 = vld [vmem:[#allocation10 + $0x20] sm:$0xff]
        %v1118 = vld [vmem:[#allocation10 + $0x28] sm:$0xff]
        %v1119 = vld [vmem:[#allocation10 + $0x30] sm:$0xff]
        %v1120 = vld [vmem:[#allocation10 + $0x38] sm:$0xff]
        %v1121 = vld [vmem:[#allocation10 + $0x40] sm:$0xff]
        %v1122 = vld [vmem:[#allocation10 + $0x48] sm:$0xff]
        %v1123 = vld [vmem:[#allocation10 + $0x50] sm:$0xff]
        %v1124 = vld [vmem:[#allocation10 + $0x58] sm:$0xff]
        %v1125 = vld [vmem:[#allocation10 + $0x60] sm:$0xff]
        %v1126 = vld [vmem:[#allocation10 + $0x68] sm:$0xff]
        %v1127 = vld [vmem:[#allocation10 + $0x70] sm:$0xff]
        %v1128 = vld [vmem:[#allocation10 + $0x78] sm:$0xff]
        %v1129 = vld [vmem:[#allocation10 + $0x80] sm:$0xff]
        %v1130 = vld [vmem:[#allocation10 + $0x88] sm:$0xff]
        %v1131 = vld [vmem:[#allocation10 + $0x90] sm:$0xff]
        %v1132 = vld [vmem:[#allocation10 + $0x98] sm:$0xff]
        %v1133 = vld [vmem:[#allocation10 + $0xa0] sm:$0xff]
        %v1134 = vld [vmem:[#allocation10 + $0xa8] sm:$0xff]
        %v1135 = vld [vmem:[#allocation10 + $0xb0] sm:$0xff]
        %v1136 = vld [vmem:[#allocation10 + $0xb8] sm:$0xff]
        %v1137 = vld [vmem:[#allocation10 + $0xc0] sm:$0xff]
        %v1138 = vld [vmem:[#allocation10 + $0xc8] sm:$0xff]
        %v1139 = vld [vmem:[#allocation10 + $0xd0] sm:$0xff]
        %v1140 = vld [vmem:[#allocation10 + $0xd8] sm:$0xff]
        %v1141 = vld [vmem:[#allocation10 + $0xe0] sm:$0xff]
        %v1142 = vld [vmem:[#allocation10 + $0xe8] sm:$0xff]
        %v1143 = vld [vmem:[#allocation10 + $0xf0] sm:$0xff]
        %v1144 = vld [vmem:[#allocation10 + $0xf8] sm:$0xff]
        %v1145 = vld [vmem:[#allocation10 + $0x100] sm:$0xff]
        %v1146 = vld [vmem:[#allocation10 + $0x108] sm:$0xff]
        %v1147 = vld [vmem:[#allocation10 + $0x110] sm:$0xff]
        %v1148 = vld [vmem:[#allocation10 + $0x118] sm:$0xff]
        %v1149 = vld [vmem:[#allocation10 + $0x120] sm:$0xff]
        %v1150 = vld [vmem:[#allocation10 + $0x128] sm:$0xff]
        %v1151 = vld [vmem:[#allocation10 + $0x130] sm:$0xff]
        %v1152 = vld [vmem:[#allocation10 + $0x138] sm:$0xff]
        %v1153 = vld [vmem:[#allocation10 + $0x140] sm:$0xff]
        %v1154 = vld [vmem:[#allocation10 + $0x148] sm:$0xff]
        %v1155 = vld [vmem:[#allocation10 + $0x150] sm:$0xff]
        %v1156 = vld [vmem:[#allocation10 + $0x158] sm:$0xff]
        %v1157 = vld [vmem:[#allocation10 + $0x160] sm:$0xff]
        %v1158 = vld [vmem:[#allocation10 + $0x168] sm:$0xff]
        %v1159 = vld [vmem:[#allocation10 + $0x170] sm:$0xff]
        %v1160 = vld [vmem:[#allocation10 + $0x178] sm:$0xff]
        %v1161 = vld [vmem:[#allocation10 + $0x180] sm:$0xff]
        %v1162 = vld [vmem:[#allocation10 + $0x188] sm:$0xff]
        %v1163 = vld [vmem:[#allocation10 + $0x190] sm:$0xff]
        %v1164 = vld [vmem:[#allocation10 + $0x198] sm:$0xff]
        %v1165 = vld [vmem:[#allocation10 + $0x1a0] sm:$0xff]
        %v1166 = vld [vmem:[#allocation10 + $0x1a8] sm:$0xff]
        %v1167 = vld [vmem:[#allocation10 + $0x1b0] sm:$0xff]
        %v1168 = vld [vmem:[#allocation10 + $0x1b8] sm:$0xff]
        %v1169 = vld [vmem:[#allocation10 + $0x1c0] sm:$0xff]
        %v1170 = vld [vmem:[#allocation10 + $0x1c8] sm:$0xff]
        %v1171 = vld [vmem:[#allocation10 + $0x1d0] sm:$0xff]
        %v1172 = vld [vmem:[#allocation10 + $0x1d8] sm:$0xff]
        %v1173 = vld [vmem:[#allocation10 + $0x1e0] sm:$0xff]
        %v1174 = vld [vmem:[#allocation10 + $0x1e8] sm:$0xff]
        %v1175 = vld [vmem:[#allocation10 + $0x1f0] sm:$0xff]
        %v1176 = vld [vmem:[#allocation10 + $0x1f8] sm:$0xff]
        %v1177 = vld [vmem:[%s9] sm:$0xf]
        %v1179 = vperm.slane %v1177, 0
        %v1180 = vperm.slane %v1177, 1
        %v1181 = vperm.slane %v1177, 2
        %v1182 = vperm.slane %v1177, 3
        %1187 = vmatpush.msra.mxu0 %v1173
        %1188 = vmatpush.msra.mxu0 %v1169
        %1189 = vmatpush.msra.mxu0 %v1165
        %1190 = vmatpush.msra.mxu0 %v1161
        %1191 = vmatpush.msra.mxu0 %v1157
        %1192 = vmatpush.msra.mxu0 %v1153
        %1193 = vmatpush.msra.mxu0 %v1149
        %1194 = vmatpush.msra.mxu0 %v1145
        %1195 = vmatpush.msra.mxu0 %v1141
        %1196 = vmatpush.msra.mxu0 %v1137
        %1197 = vmatpush.msra.mxu0 %v1133
        %1198 = vmatpush.msra.mxu0 %v1129
        %1199 = vmatpush.msra.mxu0 %v1125
        %1200 = vmatpush.msra.mxu0 %v1121
        %1201 = vmatpush.msra.mxu0 %v1117
        %1202 = vmatpush.msra.mxu0 %v1113
        %1203 = vmatmul.f32.gmra.mxu0 %v1112
        %v1204 = vpop.f32.mrf.mxu0
        %v1205 = vadd.f32 %v1179, %v1204
        %1206 = vdwg.mxu0
        %1207 = vmatpush.msra.mxu0 %v1174
        %1208 = vmatpush.msra.mxu0 %v1170
        %1209 = vmatpush.msra.mxu0 %v1166
        %1210 = vmatpush.msra.mxu0 %v1162
        %1211 = vmatpush.msra.mxu0 %v1158
        %1212 = vmatpush.msra.mxu0 %v1154
        %1213 = vmatpush.msra.mxu0 %v1150
        %1214 = vmatpush.msra.mxu0 %v1146
        %1215 = vmatpush.msra.mxu0 %v1142
        %1216 = vmatpush.msra.mxu0 %v1138
        %1217 = vmatpush.msra.mxu0 %v1134
        %1218 = vmatpush.msra.mxu0 %v1130
        %1219 = vmatpush.msra.mxu0 %v1126
        %1220 = vmatpush.msra.mxu0 %v1122
        %1221 = vmatpush.msra.mxu0 %v1118
        %1222 = vmatpush.msra.mxu0 %v1114
        %1223 = vmatmul.f32.gmra.mxu0 %v1112
        %v1224 = vpop.f32.mrf.mxu0
        %v1225 = vadd.f32 %v1180, %v1224
        %1226 = vdwg.mxu0
        %1227 = vmatpush.msra.mxu0 %v1175
        %1228 = vmatpush.msra.mxu0 %v1171
        %1229 = vmatpush.msra.mxu0 %v1167
        %1230 = vmatpush.msra.mxu0 %v1163
        %1231 = vmatpush.msra.mxu0 %v1159
        %1232 = vmatpush.msra.mxu0 %v1155
        %1233 = vmatpush.msra.mxu0 %v1151
        %1234 = vmatpush.msra.mxu0 %v1147
        %1235 = vmatpush.msra.mxu0 %v1143
        %1236 = vmatpush.msra.mxu0 %v1139
        %1237 = vmatpush.msra.mxu0 %v1135
        %1238 = vmatpush.msra.mxu0 %v1131
        %1239 = vmatpush.msra.mxu0 %v1127
        %1240 = vmatpush.msra.mxu0 %v1123
        %1241 = vmatpush.msra.mxu0 %v1119
        %1242 = vmatpush.msra.mxu0 %v1115
        %1243 = vmatmul.f32.gmra.mxu0 %v1112
        %v1244 = vpop.f32.mrf.mxu0
        %v1245 = vadd.f32 %v1181, %v1244
        %1246 = vdwg.mxu0
        %1247 = vmatpush.msra.mxu0 %v1176
        %1248 = vmatpush.msra.mxu0 %v1172
        %1249 = vmatpush.msra.mxu0 %v1168
        %1250 = vmatpush.msra.mxu0 %v1164
        %1251 = vmatpush.msra.mxu0 %v1160
        %1252 = vmatpush.msra.mxu0 %v1156
        %1253 = vmatpush.msra.mxu0 %v1152
        %1254 = vmatpush.msra.mxu0 %v1148
        %1255 = vmatpush.msra.mxu0 %v1144
        %1256 = vmatpush.msra.mxu0 %v1140
        %1257 = vmatpush.msra.mxu0 %v1136
        %1258 = vmatpush.msra.mxu0 %v1132
        %1259 = vmatpush.msra.mxu0 %v1128
        %1260 = vmatpush.msra.mxu0 %v1124
        %1261 = vmatpush.msra.mxu0 %v1120
        %1262 = vmatpush.msra.mxu0 %v1116
        %1263 = vmatmul.f32.gmra.mxu0 %v1112
        %v1264 = vpop.f32.mrf.mxu0
        %v1265 = vadd.f32 %v1182, %v1264
        %1266 = vdwg.mxu0
        %v1267 = vmax.f32 %v1205, 0.0
        %v1268 = vmax.f32 %v1225, 0.0
        %v1269 = vmax.f32 %v1245, 0.0
        %v1270 = vmax.f32 %v1265, 0.0
        %v1271 = vld [vmem:[#allocation12] sm:$0xff]
        %v1272 = vld [vmem:[#allocation12 + $0x8] sm:$0xff]
        %v1273 = vld [vmem:[#allocation12 + $0x10] sm:$0xff]
        %v1274 = vld [vmem:[#allocation12 + $0x18] sm:$0xff]
        %v1275 = vld [vmem:[#allocation12 + $0x20] sm:$0xff]
        %v1276 = vld [vmem:[#allocation12 + $0x28] sm:$0xff]
        %v1277 = vld [vmem:[#allocation12 + $0x30] sm:$0xff]
        %v1278 = vld [vmem:[#allocation12 + $0x38] sm:$0xff]
        %v1279 = vld [vmem:[#allocation12 + $0x40] sm:$0xff]
        %v1280 = vld [vmem:[#allocation12 + $0x48] sm:$0xff]
        %v1281 = vld [vmem:[#allocation12 + $0x50] sm:$0xff]
        %v1282 = vld [vmem:[#allocation12 + $0x58] sm:$0xff]
        %v1283 = vld [vmem:[#allocation12 + $0x60] sm:$0xff]
        %v1284 = vld [vmem:[#allocation12 + $0x68] sm:$0xff]
        %v1285 = vld [vmem:[#allocation12 + $0x70] sm:$0xff]
        %v1286 = vld [vmem:[#allocation12 + $0x78] sm:$0xff]
        %v1287 = vld [vmem:[#allocation12 + $0x80] sm:$0xff]
        %v1288 = vld [vmem:[#allocation12 + $0x88] sm:$0xff]
        %v1289 = vld [vmem:[#allocation12 + $0x90] sm:$0xff]
        %v1290 = vld [vmem:[#allocation12 + $0x98] sm:$0xff]
        %v1291 = vld [vmem:[#allocation12 + $0xa0] sm:$0xff]
        %v1292 = vld [vmem:[#allocation12 + $0xa8] sm:$0xff]
        %v1293 = vld [vmem:[#allocation12 + $0xb0] sm:$0xff]
        %v1294 = vld [vmem:[#allocation12 + $0xb8] sm:$0xff]
        %v1295 = vld [vmem:[#allocation12 + $0xc0] sm:$0xff]
        %v1296 = vld [vmem:[#allocation12 + $0xc8] sm:$0xff]
        %v1297 = vld [vmem:[#allocation12 + $0xd0] sm:$0xff]
        %v1298 = vld [vmem:[#allocation12 + $0xd8] sm:$0xff]
        %v1299 = vld [vmem:[#allocation12 + $0xe0] sm:$0xff]
        %v1300 = vld [vmem:[#allocation12 + $0xe8] sm:$0xff]
        %v1301 = vld [vmem:[#allocation12 + $0xf0] sm:$0xff]
        %v1302 = vld [vmem:[#allocation12 + $0xf8] sm:$0xff]
        %v1303 = vld [vmem:[#allocation12 + $0x100] sm:$0xff]
        %v1304 = vld [vmem:[#allocation12 + $0x108] sm:$0xff]
        %v1305 = vld [vmem:[#allocation12 + $0x110] sm:$0xff]
        %v1306 = vld [vmem:[#allocation12 + $0x118] sm:$0xff]
        %v1307 = vld [vmem:[#allocation12 + $0x120] sm:$0xff]
        %v1308 = vld [vmem:[#allocation12 + $0x128] sm:$0xff]
        %v1309 = vld [vmem:[#allocation12 + $0x130] sm:$0xff]
        %v1310 = vld [vmem:[#allocation12 + $0x138] sm:$0xff]
        %v1311 = vld [vmem:[#allocation12 + $0x140] sm:$0xff]
        %v1312 = vld [vmem:[#allocation12 + $0x148] sm:$0xff]
        %v1313 = vld [vmem:[#allocation12 + $0x150] sm:$0xff]
        %v1314 = vld [vmem:[#allocation12 + $0x158] sm:$0xff]
        %v1315 = vld [vmem:[#allocation12 + $0x160] sm:$0xff]
        %v1316 = vld [vmem:[#allocation12 + $0x168] sm:$0xff]
        %v1317 = vld [vmem:[#allocation12 + $0x170] sm:$0xff]
        %v1318 = vld [vmem:[#allocation12 + $0x178] sm:$0xff]
        %v1319 = vld [vmem:[#allocation12 + $0x180] sm:$0xff]
        %v1320 = vld [vmem:[#allocation12 + $0x188] sm:$0xff]
        %v1321 = vld [vmem:[#allocation12 + $0x190] sm:$0xff]
        %v1322 = vld [vmem:[#allocation12 + $0x198] sm:$0xff]
        %v1323 = vld [vmem:[#allocation12 + $0x1a0] sm:$0xff]
        %v1324 = vld [vmem:[#allocation12 + $0x1a8] sm:$0xff]
        %v1325 = vld [vmem:[#allocation12 + $0x1b0] sm:$0xff]
        %v1326 = vld [vmem:[#allocation12 + $0x1b8] sm:$0xff]
        %v1327 = vld [vmem:[#allocation12 + $0x1c0] sm:$0xff]
        %v1328 = vld [vmem:[#allocation12 + $0x1c8] sm:$0xff]
        %v1329 = vld [vmem:[#allocation12 + $0x1d0] sm:$0xff]
        %v1330 = vld [vmem:[#allocation12 + $0x1d8] sm:$0xff]
        %v1331 = vld [vmem:[#allocation12 + $0x1e0] sm:$0xff]
        %v1332 = vld [vmem:[#allocation12 + $0x1e8] sm:$0xff]
        %v1333 = vld [vmem:[#allocation12 + $0x1f0] sm:$0xff]
        %v1334 = vld [vmem:[#allocation12 + $0x1f8] sm:$0xff]
        %v1335 = vld [vmem:[#allocation13] sm:$0x1]
        %v1337 = vperm.slane %v1335, 0
        %1339 = vmatpush.msra.mxu0 %v1286
        %1340 = vmatpush.msra.mxu0 %v1285
        %1341 = vmatpush.msra.mxu0 %v1284
        %1342 = vmatpush.msra.mxu0 %v1283
        %1343 = vmatpush.msra.mxu0 %v1282
        %1344 = vmatpush.msra.mxu0 %v1281
        %1345 = vmatpush.msra.mxu0 %v1280
        %1346 = vmatpush.msra.mxu0 %v1279
        %1347 = vmatpush.msra.mxu0 %v1278
        %1348 = vmatpush.msra.mxu0 %v1277
        %1349 = vmatpush.msra.mxu0 %v1276
        %1350 = vmatpush.msra.mxu0 %v1275
        %1351 = vmatpush.msra.mxu0 %v1274
        %1352 = vmatpush.msra.mxu0 %v1273
        %1353 = vmatpush.msra.mxu0 %v1272
        %1354 = vmatpush.msra.mxu0 %v1271
        %1355 = vmatmul.f32.gmra.mxu0 %v1267
        %v1356 = vpop.f32.mrf.mxu0
        %v1357 = vadd.f32 %v1337, %v1356
        %1358 = vdwg.mxu0
        %1359 = vmatpush.msra.mxu0 %v1302
        %1360 = vmatpush.msra.mxu0 %v1301
        %1361 = vmatpush.msra.mxu0 %v1300
        %1362 = vmatpush.msra.mxu0 %v1299
        %1363 = vmatpush.msra.mxu0 %v1298
        %1364 = vmatpush.msra.mxu0 %v1297
        %1365 = vmatpush.msra.mxu0 %v1296
        %1366 = vmatpush.msra.mxu0 %v1295
        %1367 = vmatpush.msra.mxu0 %v1294
        %1368 = vmatpush.msra.mxu0 %v1293
        %1369 = vmatpush.msra.mxu0 %v1292
        %1370 = vmatpush.msra.mxu0 %v1291
        %1371 = vmatpush.msra.mxu0 %v1290
        %1372 = vmatpush.msra.mxu0 %v1289
        %1373 = vmatpush.msra.mxu0 %v1288
        %1374 = vmatpush.msra.mxu0 %v1287
        %1375 = vmatmul.f32.gmra.mxu0 %v1268
        %v1376 = vpop.f32.mrf.mxu0
        %v1377 = vadd.f32 %v1357, %v1376
        %1378 = vdwg.mxu0
        %1379 = vmatpush.msra.mxu0 %v1318
        %1380 = vmatpush.msra.mxu0 %v1317
        %1381 = vmatpush.msra.mxu0 %v1316
        %1382 = vmatpush.msra.mxu0 %v1315
        %1383 = vmatpush.msra.mxu0 %v1314
        %1384 = vmatpush.msra.mxu0 %v1313
        %1385 = vmatpush.msra.mxu0 %v1312
        %1386 = vmatpush.msra.mxu0 %v1311
        %1387 = vmatpush.msra.mxu0 %v1310
        %1388 = vmatpush.msra.mxu0 %v1309
        %1389 = vmatpush.msra.mxu0 %v1308
        %1390 = vmatpush.msra.mxu0 %v1307
        %1391 = vmatpush.msra.mxu0 %v1306
        %1392 = vmatpush.msra.mxu0 %v1305
        %1393 = vmatpush.msra.mxu0 %v1304
        %1394 = vmatpush.msra.mxu0 %v1303
        %1395 = vmatmul.f32.gmra.mxu0 %v1269
        %v1396 = vpop.f32.mrf.mxu0
        %v1397 = vadd.f32 %v1377, %v1396
        %1398 = vdwg.mxu0
        %1399 = vmatpush.msra.mxu0 %v1334
        %1400 = vmatpush.msra.mxu0 %v1333
        %1401 = vmatpush.msra.mxu0 %v1332
        %1402 = vmatpush.msra.mxu0 %v1331
        %1403 = vmatpush.msra.mxu0 %v1330
        %1404 = vmatpush.msra.mxu0 %v1329
        %1405 = vmatpush.msra.mxu0 %v1328
        %1406 = vmatpush.msra.mxu0 %v1327
        %1407 = vmatpush.msra.mxu0 %v1326
        %1408 = vmatpush.msra.mxu0 %v1325
        %1409 = vmatpush.msra.mxu0 %v1324
        %1410 = vmatpush.msra.mxu0 %v1323
        %1411 = vmatpush.msra.mxu0 %v1322
        %1412 = vmatpush.msra.mxu0 %v1321
        %1413 = vmatpush.msra.mxu0 %v1320
        %1414 = vmatpush.msra.mxu0 %v1319
        %1415 = vmatmul.f32.gmra.mxu0 %v1270
        %v1416 = vpop.f32.mrf.mxu0
        %v1417 = vadd.f32 %v1397, %v1416
        %1418 = vdwg.mxu0
        %v1419 = vadd.f32 %v1112, %v1417
        %v1420 = vld [vmem:[#allocation15] sm:$0x1]
        %v1421 = vld [vmem:[#allocation16] sm:$0x1]
        %1422 = vadd.xlane.f32.xlu0 %v1419
        %v1423 = vpop.xlane.xlu0 %1422
        %v1424 = vmul.f32 %v1423, %v1086
        %v1425 = vsub.f32 %v1419, %v1424
        %v1426 = vmul.f32 %v1425, %v1425
        %1427 = vadd.xlane.f32.xlu0 %v1426
        %v1428 = vpop.xlane.xlu0 %1427
        %v1429 = vmul.f32 %v1428, %v1086
        %v1430 = vadd.f32 %v1429, 1e-05
        %v1431 = vrsqrt.pop %v1430
        %v1432 = vmul.f32 %v1431, %v1430
        %v1433 = vmul.f32 %v1432, %v1431
        %v1434 = vmul.f32 0.5, %v1433
        %v1435 = vsub.f32 1.5, %v1434
        %v1436 = vmul.f32 %v1431, %v1435
        %vm1437 = vweird.f32 %v1430
        %vm1438 = vweird.f32 %v1431
        %vm1439 = vmor %vm1437, %vm1438
        %v1440 = vsel %vm1439, %v1431, %v1436
        %v1441 = vmul.f32 %v1425, %v1440
        %v1443 = vperm.slane %v1420, 0
        %v1445 = vmul.f32 %v1441, %v1443
        %v1447 = vperm.slane %v1421, 0
        %v1449 = vadd.f32 %v1445, %v1447
        %1450 = vst [vmem:[%s630] sm:$0xff] %v1449
        %p1451 = scmp.lt.s32.totalorder %s31, 1
        %s1452 = scalar_select %p1451, %s31, 1
        %s1453 = smul.addr %s1452, 8
        %s1454 = scalar_lea.vmem %s14, %s1453
        // Predicated region
        $region117: #{desa_forward.10} parent=75 // pred_check
          %p1455 = pneg %p353
        $region118: #{desa_forward.10} parent=75 // pred_check_branch
          %1457 = sbr.rel (%p1455) target = $region120
        $region119: #{desa_forward.10} parent=75 // pred_region
          _
        $region120: #{desa_forward.10} parent=75 // pred_fallthru
          _
      $region76: #{desa_forward.10} parent=5 // pred_fallthru
        _
      %p1458 = scmp.le.s32.totalorder 2, %s26
      // Predicated region
      $region121: #{desa_forward.10} parent=5 // pred_check
        %p1459 = pneg %p1458
      $region122: #{desa_forward.10} parent=5 // pred_check_branch
        %1461 = sbr.rel (%p1459) target = $region124
      $region123: #{desa_forward.10} parent=5 // pred_region
        %s1462 = ssub.s32 %s26, 2
        // Predicated region
        $region125: #{desa_forward.10} parent=123 // pred_check
          %p1463 = pneg %p359
        $region126: #{desa_forward.10} parent=123 // pred_check_branch
          %1465 = sbr.rel (%p1463) target = $region128
        $region127: #{desa_forward.10} parent=123 // pred_region
          %p1466 = scmp.lt.s32.totalorder %s32, 1
          %s1467 = scalar_select %p1466, %s32, 1
          %s1468 = smul.addr %s1467, 8
          %s1469 = scalar_lea.vmem %s14, %s1468
        $region128: #{desa_forward.10} parent=123 // pred_fallthru
          _
      $region124: #{desa_forward.10} parent=5 // pred_fallthru
        _
    $region6: #{desa_forward.10} parent=1 // loop_footer
      %s30 = sadd.s32 1, %s26
    $region7: #{desa_forward.10} parent=1 // loop_footer_branch
      %25 = sbr.rel target = $region3
    $region8: #{desa_forward.10} parent=1 // loop_exit
      _
    %1470 = vsyncpa [#allocation3], 1
    %s1471 = scalar_lea.sflag [#allocation3], 1
    %1472 = vsyncpa %s1471, 1
    %1473 = vsyncpa [#allocation5], 1
    %1474 = vsyncpa [#allocation8], 1
    %1475 = vsyncpa [#allocation11], 1
    %1476 = vsyncpa [#allocation14], 1
    %1477 = vsyncpa [#allocation17], 1

</llo_original>
